<compile_context>
chip_gen: v5e
topology: v5e:2x2
jax: 0.10.0
libtpu: 0.0.40
codegen_flags: <defaults>
</compile_context>

<pallas_src>
import math
import functools

import jax
import jax.numpy as jnp
from jax.experimental import pallas as pl
from jax.experimental.pallas import tpu as pltpu

LN_EPS = 1e-5
MXU_DTYPE = jnp.bfloat16   # set to jnp.float32 for a bit-exact correctness path

VMEM_SPEC = pl.BlockSpec(memory_space=pltpu.MemorySpace.VMEM)
SMEM_SPEC = pl.BlockSpec(memory_space=pltpu.MemorySpace.SMEM)


# ------------------------------ fused kernel --------------------------------

def _fused_forward_kernel(
        ids_ref,                                     # (B*S,) int32, SMEM
        pe_ref, emb_ref,                             # (S, E), (V, E) f32
        w_in_ref, b_in_ref, w_out_ref, b_out_ref,    # per-layer stacks
        ln1_g_ref, ln1_b_ref,
        w_ff1_ref, b_ff1_ref, w_ff2_ref, b_ff2_ref,
        ln2_g_ref, ln2_b_ref,
        w0_ref, b0_ref, w12_ref, b12_ref,            # classifier
        out1_ref, out2_ref,                          # (B, 2) each
        *, batch, seq, d_model, nhead, num_layers, emb_scale):
    n_tok = batch * seq
    dh = d_model // nhead
    sm_scale = 1.0 / math.sqrt(dh)

    # --- embedding gather + scale + positional encoding (batch-major rows) ---
    rows = []
    for i in range(n_tok):                       # static unroll (n_tok is small)
        tok = ids_ref[i]                         # scalar int32 from SMEM
        emb_row = emb_ref[pl.ds(tok, 1), :]      # (1, E) dynamic row gather
        pe_row = pe_ref[pl.ds(i % seq, 1), :]    # (1, E) static row
        rows.append(emb_row * emb_scale + pe_row)
    x = jnp.concatenate(rows, axis=0)            # (B*S, E) f32

    def mm(a, w):
        # MXU matmul: bf16 operands (weights arrive pre-cast), f32 accumulate.
        return jnp.dot(a.astype(w.dtype), w, preferred_element_type=jnp.float32)

    def add_ln(a, res, g, beta):
        z = a + res
        mu = jnp.mean(z, axis=-1, keepdims=True)
        zc = z - mu
        var = jnp.mean(zc * zc, axis=-1, keepdims=True)
        return zc * jax.lax.rsqrt(var + LN_EPS) * g + beta

    # ------------------- post-LN transformer encoder layers ------------------
    for li in range(num_layers):
        qkv = mm(x, w_in_ref[li]) + b_in_ref[li]             # (N, 3E) f32
        q = qkv[:, 0 * d_model:1 * d_model]
        k = qkv[:, 1 * d_model:2 * d_model]
        v = qkv[:, 2 * d_model:3 * d_model]

        attn_chunks = []
        for b in range(batch):                               # rows are batch-major
            r0 = b * seq
            head_outs = []
            for h in range(nhead):                           # in-kernel head split
                c0 = h * dh
                qh = q[r0:r0 + seq, c0:c0 + dh].astype(MXU_DTYPE)
                kh = k[r0:r0 + seq, c0:c0 + dh].astype(MXU_DTYPE)
                vh = v[r0:r0 + seq, c0:c0 + dh].astype(MXU_DTYPE)
                sc = jax.lax.dot_general(                    # q @ k^T, no transpose
                    qh, kh, (((1,), (1,)), ((), ())),
                    preferred_element_type=jnp.float32) * sm_scale   # (S, S) f32
                m = jnp.max(sc, axis=-1, keepdims=True)
                p = jnp.exp(sc - m)
                p = p * pl.reciprocal(jnp.sum(p, axis=-1, keepdims=True),
                                      approx=True)
                head_outs.append(
                    jnp.dot(p.astype(MXU_DTYPE), vh,
                            preferred_element_type=jnp.float32))     # (S, dh)
            attn_chunks.append(jnp.concatenate(head_outs, axis=-1))  # (S, E)
        attn = jnp.concatenate(attn_chunks, axis=0)                  # (N, E)

        attn = mm(attn, w_out_ref[li]) + b_out_ref[li]
        x = add_ln(x, attn, ln1_g_ref[li], ln1_b_ref[li])
        hid = jnp.maximum(mm(x, w_ff1_ref[li]) + b_ff1_ref[li], 0.0)
        ff = mm(hid, w_ff2_ref[li]) + b_ff2_ref[li]
        x = add_ln(x, ff, ln2_g_ref[li], ln2_b_ref[li])

    # --------- mean pool over sequence, classify_0 -> [classify_1|2] ---------
    pooled = jnp.concatenate(
        [jnp.mean(x[b * seq:(b + 1) * seq], axis=0, keepdims=True)
         for b in range(batch)], axis=0)                     # (B, E) f32
    h0 = mm(pooled, w0_ref[...]) + b0_ref[...]               # (B, 128)
    logits = mm(h0, w12_ref[...]) + b12_ref[...]             # (B, 4) = [head1|head2]
    out1_ref[...] = logits[:, 0:2]
    out2_ref[...] = logits[:, 2:4]


# ------------------------------ model wrapper --------------------------------

def classify_transformer_forward(params, src, *, d_model, nhead):
    # src: (batch, seq) int32 token ids
    batch, seq = src.shape
    assert d_model % nhead == 0
    num_layers = params['w_in'].shape[0]

    ids = src.reshape(-1).astype(jnp.int32)      # batch-major flat token ids
    pe = params['pe'][:seq]                      # (S, E)

    kernel = functools.partial(
        _fused_forward_kernel,
        batch=batch, seq=seq, d_model=d_model, nhead=nhead,
        num_layers=num_layers, emb_scale=math.sqrt(d_model))

    args = (
        ids, pe, params['emb'],
        params['w_in'], params['b_in'],
        params['w_out'], params['b_out'],
        params['ln1_g'], params['ln1_b'],
        params['w_ff1'], params['b_ff1'],
        params['w_ff2'], params['b_ff2'],
        params['ln2_g'], params['ln2_b'],
        params['w0'], params['b0'],
        params['w12'], params['b12'],
    )
    out1, out2 = pl.pallas_call(
        kernel,
        out_shape=(jax.ShapeDtypeStruct((batch, 2), jnp.float32),
                   jax.ShapeDtypeStruct((batch, 2), jnp.float32)),
        in_specs=[SMEM_SPEC] + [VMEM_SPEC] * (len(args) - 1),
        out_specs=(VMEM_SPEC, VMEM_SPEC),
    )(*args)
    return out1, out2


# ------------------------------ initialization --------------------------------

def sinusoidal_pe(max_len, d_model):
    position = jnp.arange(max_len, dtype=jnp.float32)[:, None]
    div_term = jnp.exp(jnp.arange(0, d_model, 2, dtype=jnp.float32)
                       * (-math.log(10000.0) / d_model))
    pe = jnp.zeros((max_len, d_model), jnp.float32)
    pe = pe.at[:, 0::2].set(jnp.sin(position * div_term))
    pe = pe.at[:, 1::2].set(jnp.cos(position * div_term))
    return pe


def init_params(key, vocab_size, d_model, nhead, num_layers, dim_ff,
                max_seq_length):
    def uni(k, shape, fan_in):
        bound = 1.0 / math.sqrt(fan_in)
        return jax.random.uniform(k, shape, jnp.float32, -bound, bound)

    keys = jax.random.split(key, 16)
    L, E, F = num_layers, d_model, dim_ff
    mxu = MXU_DTYPE    # matmul weights stored pre-cast (one-time, halves DMA bytes)
    params = {
        'emb':   jax.random.normal(keys[0], (vocab_size, E), jnp.float32),
        'pe':    sinusoidal_pe(max_seq_length, E),
        # encoder-layer stacks (indexed [layer] inside the kernel)
        'w_in':  uni(keys[1], (L, E, 3 * E), E).astype(mxu),
        'b_in':  uni(keys[2], (L, 1, 3 * E), E),
        'w_out': uni(keys[3], (L, E, E), E).astype(mxu),
        'b_out': uni(keys[4], (L, 1, E), E),
        'ln1_g': jnp.ones((L, 1, E), jnp.float32),
        'ln1_b': jnp.zeros((L, 1, E), jnp.float32),
        'w_ff1': uni(keys[5], (L, E, F), E).astype(mxu),
        'b_ff1': uni(keys[6], (L, 1, F), E),
        'w_ff2': uni(keys[7], (L, F, E), F).astype(mxu),
        'b_ff2': uni(keys[8], (L, 1, E), F),
        'ln2_g': jnp.ones((L, 1, E), jnp.float32),
        'ln2_b': jnp.zeros((L, 1, E), jnp.float32),
        # classifier: classify_0, then classify_1 | classify_2 packed column-wise
        'w0':    uni(keys[9], (E, 128), E).astype(mxu),
        'b0':    uni(keys[10], (1, 128), E),
        'w12':   uni(keys[11], (128, 4), 128).astype(mxu),
        'b12':   uni(keys[12], (1, 4), 128),
    }
    return params


# ----------------------------------- main ------------------------------------

if __name__ == "__main__":
    vocab_size = 32
    d_model = 32
    nhead = 4
    num_encoder_layers = 2
    dim_feedforward = 64
    max_seq_length = 100
    pos_dropout = 0.1        # eval mode -> identity

    batch, seq = 2, 8

    key = jax.random.PRNGKey(0)
    pkey, dkey = jax.random.split(key)
    params = init_params(pkey, vocab_size, d_model, nhead,
                         num_encoder_layers, dim_feedforward, max_seq_length)
    src = jax.random.randint(dkey, (batch, seq), 0, vocab_size, dtype=jnp.int32)

    out1, out2 = classify_transformer_forward(params, src,
                                              d_model=d_model, nhead=nhead)
    jax.block_until_ready((out1, out2))

    assert out1.shape == (batch, 2) and out1.dtype == jnp.float32
    assert out2.shape == (batch, 2) and out2.dtype == jnp.float32
    assert bool(jnp.all(jnp.isfinite(out1))) and bool(jnp.all(jnp.isfinite(out2)))
    print("KERNEL_OK")
</pallas_src>

<mosaic_0001>
module attributes {stable_mosaic.version = 11 : i64} {
  func.func @_fused_forward_kernel(%arg0: memref<16xi32, #tpu.memory_space<smem>>, %arg1: memref<8x32xf32, #tpu.memory_space<vmem>>, %arg2: memref<32x32xf32, #tpu.memory_space<vmem>>, %arg3: memref<2x32x96xbf16, #tpu.memory_space<vmem>>, %arg4: memref<2x1x96xf32, #tpu.memory_space<vmem>>, %arg5: memref<2x32x32xbf16, #tpu.memory_space<vmem>>, %arg6: memref<2x1x32xf32, #tpu.memory_space<vmem>>, %arg7: memref<2x1x32xf32, #tpu.memory_space<vmem>>, %arg8: memref<2x1x32xf32, #tpu.memory_space<vmem>>, %arg9: memref<2x32x64xbf16, #tpu.memory_space<vmem>>, %arg10: memref<2x1x64xf32, #tpu.memory_space<vmem>>, %arg11: memref<2x64x32xbf16, #tpu.memory_space<vmem>>, %arg12: memref<2x1x32xf32, #tpu.memory_space<vmem>>, %arg13: memref<2x1x32xf32, #tpu.memory_space<vmem>>, %arg14: memref<2x1x32xf32, #tpu.memory_space<vmem>>, %arg15: memref<32x128xbf16, #tpu.memory_space<vmem>>, %arg16: memref<1x128xf32, #tpu.memory_space<vmem>>, %arg17: memref<128x4xbf16, #tpu.memory_space<vmem>>, %arg18: memref<1x4xf32, #tpu.memory_space<vmem>>, %arg19: memref<2x2xf32, #tpu.memory_space<vmem>>, %arg20: memref<2x2xf32, #tpu.memory_space<vmem>>) attributes {dimension_semantics = [], scalar_prefetch = 0 : i64, scratch_operands = 0 : i64, tpu.core_type = #tpu.core_type<tc>} {
    %c0 = arith.constant 0 : index
    %0 = memref.load %arg0[%c0] : memref<16xi32, #tpu.memory_space<smem>>
    %1 = arith.index_cast %0 : i32 to index
    %c0_0 = arith.constant 0 : index
    %2 = vector.load %arg2[%1, %c0_0] : memref<32x32xf32, #tpu.memory_space<vmem>>, vector<1x32xf32>
    %c0_1 = arith.constant 0 : index
    %c0_2 = arith.constant 0 : index
    %3 = vector.load %arg1[%c0_1, %c0_2] : memref<8x32xf32, #tpu.memory_space<vmem>>, vector<1x32xf32>
    %cst = arith.constant 5.65685415 : f32
    %4 = vector.broadcast %cst : f32 to vector<1x32xf32>
    %5 = arith.mulf %2, %4 : vector<1x32xf32>
    %6 = arith.addf %5, %3 : vector<1x32xf32>
    %c1 = arith.constant 1 : index
    %7 = memref.load %arg0[%c1] : memref<16xi32, #tpu.memory_space<smem>>
    %8 = arith.index_cast %7 : i32 to index
    %c0_3 = arith.constant 0 : index
    %9 = vector.load %arg2[%8, %c0_3] : memref<32x32xf32, #tpu.memory_space<vmem>>, vector<1x32xf32>
    %c1_4 = arith.constant 1 : index
    %c0_5 = arith.constant 0 : index
    %10 = vector.load %arg1[%c1_4, %c0_5] : memref<8x32xf32, #tpu.memory_space<vmem>>, vector<1x32xf32>
    %cst_6 = arith.constant 5.65685415 : f32
    %11 = vector.broadcast %cst_6 : f32 to vector<1x32xf32>
    %12 = arith.mulf %9, %11 : vector<1x32xf32>
    %13 = arith.addf %12, %10 : vector<1x32xf32>
    %c2 = arith.constant 2 : index
    %14 = memref.load %arg0[%c2] : memref<16xi32, #tpu.memory_space<smem>>
    %15 = arith.index_cast %14 : i32 to index
    %c0_7 = arith.constant 0 : index
    %16 = vector.load %arg2[%15, %c0_7] : memref<32x32xf32, #tpu.memory_space<vmem>>, vector<1x32xf32>
    %c2_8 = arith.constant 2 : index
    %c0_9 = arith.constant 0 : index
    %17 = vector.load %arg1[%c2_8, %c0_9] : memref<8x32xf32, #tpu.memory_space<vmem>>, vector<1x32xf32>
    %cst_10 = arith.constant 5.65685415 : f32
    %18 = vector.broadcast %cst_10 : f32 to vector<1x32xf32>
    %19 = arith.mulf %16, %18 : vector<1x32xf32>
    %20 = arith.addf %19, %17 : vector<1x32xf32>
    %c3 = arith.constant 3 : index
    %21 = memref.load %arg0[%c3] : memref<16xi32, #tpu.memory_space<smem>>
    %22 = arith.index_cast %21 : i32 to index
    %c0_11 = arith.constant 0 : index
    %23 = vector.load %arg2[%22, %c0_11] : memref<32x32xf32, #tpu.memory_space<vmem>>, vector<1x32xf32>
    %c3_12 = arith.constant 3 : index
    %c0_13 = arith.constant 0 : index
    %24 = vector.load %arg1[%c3_12, %c0_13] : memref<8x32xf32, #tpu.memory_space<vmem>>, vector<1x32xf32>
    %cst_14 = arith.constant 5.65685415 : f32
    %25 = vector.broadcast %cst_14 : f32 to vector<1x32xf32>
    %26 = arith.mulf %23, %25 : vector<1x32xf32>
    %27 = arith.addf %26, %24 : vector<1x32xf32>
    %c4 = arith.constant 4 : index
    %28 = memref.load %arg0[%c4] : memref<16xi32, #tpu.memory_space<smem>>
    %29 = arith.index_cast %28 : i32 to index
    %c0_15 = arith.constant 0 : index
    %30 = vector.load %arg2[%29, %c0_15] : memref<32x32xf32, #tpu.memory_space<vmem>>, vector<1x32xf32>
    %c4_16 = arith.constant 4 : index
    %c0_17 = arith.constant 0 : index
    %31 = vector.load %arg1[%c4_16, %c0_17] : memref<8x32xf32, #tpu.memory_space<vmem>>, vector<1x32xf32>
    %cst_18 = arith.constant 5.65685415 : f32
    %32 = vector.broadcast %cst_18 : f32 to vector<1x32xf32>
    %33 = arith.mulf %30, %32 : vector<1x32xf32>
    %34 = arith.addf %33, %31 : vector<1x32xf32>
    %c5 = arith.constant 5 : index
    %35 = memref.load %arg0[%c5] : memref<16xi32, #tpu.memory_space<smem>>
    %36 = arith.index_cast %35 : i32 to index
    %c0_19 = arith.constant 0 : index
    %37 = vector.load %arg2[%36, %c0_19] : memref<32x32xf32, #tpu.memory_space<vmem>>, vector<1x32xf32>
    %c5_20 = arith.constant 5 : index
    %c0_21 = arith.constant 0 : index
    %38 = vector.load %arg1[%c5_20, %c0_21] : memref<8x32xf32, #tpu.memory_space<vmem>>, vector<1x32xf32>
    %cst_22 = arith.constant 5.65685415 : f32
    %39 = vector.broadcast %cst_22 : f32 to vector<1x32xf32>
    %40 = arith.mulf %37, %39 : vector<1x32xf32>
    %41 = arith.addf %40, %38 : vector<1x32xf32>
    %c6 = arith.constant 6 : index
    %42 = memref.load %arg0[%c6] : memref<16xi32, #tpu.memory_space<smem>>
    %43 = arith.index_cast %42 : i32 to index
    %c0_23 = arith.constant 0 : index
    %44 = vector.load %arg2[%43, %c0_23] : memref<32x32xf32, #tpu.memory_space<vmem>>, vector<1x32xf32>
    %c6_24 = arith.constant 6 : index
    %c0_25 = arith.constant 0 : index
    %45 = vector.load %arg1[%c6_24, %c0_25] : memref<8x32xf32, #tpu.memory_space<vmem>>, vector<1x32xf32>
    %cst_26 = arith.constant 5.65685415 : f32
    %46 = vector.broadcast %cst_26 : f32 to vector<1x32xf32>
    %47 = arith.mulf %44, %46 : vector<1x32xf32>
    %48 = arith.addf %47, %45 : vector<1x32xf32>
    %c7 = arith.constant 7 : index
    %49 = memref.load %arg0[%c7] : memref<16xi32, #tpu.memory_space<smem>>
    %50 = arith.index_cast %49 : i32 to index
    %c0_27 = arith.constant 0 : index
    %51 = vector.load %arg2[%50, %c0_27] : memref<32x32xf32, #tpu.memory_space<vmem>>, vector<1x32xf32>
    %c7_28 = arith.constant 7 : index
    %c0_29 = arith.constant 0 : index
    %52 = vector.load %arg1[%c7_28, %c0_29] : memref<8x32xf32, #tpu.memory_space<vmem>>, vector<1x32xf32>
    %cst_30 = arith.constant 5.65685415 : f32
    %53 = vector.broadcast %cst_30 : f32 to vector<1x32xf32>
    %54 = arith.mulf %51, %53 : vector<1x32xf32>
    %55 = arith.addf %54, %52 : vector<1x32xf32>
    %c8 = arith.constant 8 : index
    %56 = memref.load %arg0[%c8] : memref<16xi32, #tpu.memory_space<smem>>
    %57 = arith.index_cast %56 : i32 to index
    %c0_31 = arith.constant 0 : index
    %58 = vector.load %arg2[%57, %c0_31] : memref<32x32xf32, #tpu.memory_space<vmem>>, vector<1x32xf32>
    %c0_32 = arith.constant 0 : index
    %c0_33 = arith.constant 0 : index
    %59 = vector.load %arg1[%c0_32, %c0_33] : memref<8x32xf32, #tpu.memory_space<vmem>>, vector<1x32xf32>
    %cst_34 = arith.constant 5.65685415 : f32
    %60 = vector.broadcast %cst_34 : f32 to vector<1x32xf32>
    %61 = arith.mulf %58, %60 : vector<1x32xf32>
    %62 = arith.addf %61, %59 : vector<1x32xf32>
    %c9 = arith.constant 9 : index
    %63 = memref.load %arg0[%c9] : memref<16xi32, #tpu.memory_space<smem>>
    %64 = arith.index_cast %63 : i32 to index
    %c0_35 = arith.constant 0 : index
    %65 = vector.load %arg2[%64, %c0_35] : memref<32x32xf32, #tpu.memory_space<vmem>>, vector<1x32xf32>
    %c1_36 = arith.constant 1 : index
    %c0_37 = arith.constant 0 : index
    %66 = vector.load %arg1[%c1_36, %c0_37] : memref<8x32xf32, #tpu.memory_space<vmem>>, vector<1x32xf32>
    %cst_38 = arith.constant 5.65685415 : f32
    %67 = vector.broadcast %cst_38 : f32 to vector<1x32xf32>
    %68 = arith.mulf %65, %67 : vector<1x32xf32>
    %69 = arith.addf %68, %66 : vector<1x32xf32>
    %c10 = arith.constant 10 : index
    %70 = memref.load %arg0[%c10] : memref<16xi32, #tpu.memory_space<smem>>
    %71 = arith.index_cast %70 : i32 to index
    %c0_39 = arith.constant 0 : index
    %72 = vector.load %arg2[%71, %c0_39] : memref<32x32xf32, #tpu.memory_space<vmem>>, vector<1x32xf32>
    %c2_40 = arith.constant 2 : index
    %c0_41 = arith.constant 0 : index
    %73 = vector.load %arg1[%c2_40, %c0_41] : memref<8x32xf32, #tpu.memory_space<vmem>>, vector<1x32xf32>
    %cst_42 = arith.constant 5.65685415 : f32
    %74 = vector.broadcast %cst_42 : f32 to vector<1x32xf32>
    %75 = arith.mulf %72, %74 : vector<1x32xf32>
    %76 = arith.addf %75, %73 : vector<1x32xf32>
    %c11 = arith.constant 11 : index
    %77 = memref.load %arg0[%c11] : memref<16xi32, #tpu.memory_space<smem>>
    %78 = arith.index_cast %77 : i32 to index
    %c0_43 = arith.constant 0 : index
    %79 = vector.load %arg2[%78, %c0_43] : memref<32x32xf32, #tpu.memory_space<vmem>>, vector<1x32xf32>
    %c3_44 = arith.constant 3 : index
    %c0_45 = arith.constant 0 : index
    %80 = vector.load %arg1[%c3_44, %c0_45] : memref<8x32xf32, #tpu.memory_space<vmem>>, vector<1x32xf32>
    %cst_46 = arith.constant 5.65685415 : f32
    %81 = vector.broadcast %cst_46 : f32 to vector<1x32xf32>
    %82 = arith.mulf %79, %81 : vector<1x32xf32>
    %83 = arith.addf %82, %80 : vector<1x32xf32>
    %c12 = arith.constant 12 : index
    %84 = memref.load %arg0[%c12] : memref<16xi32, #tpu.memory_space<smem>>
    %85 = arith.index_cast %84 : i32 to index
    %c0_47 = arith.constant 0 : index
    %86 = vector.load %arg2[%85, %c0_47] : memref<32x32xf32, #tpu.memory_space<vmem>>, vector<1x32xf32>
    %c4_48 = arith.constant 4 : index
    %c0_49 = arith.constant 0 : index
    %87 = vector.load %arg1[%c4_48, %c0_49] : memref<8x32xf32, #tpu.memory_space<vmem>>, vector<1x32xf32>
    %cst_50 = arith.constant 5.65685415 : f32
    %88 = vector.broadcast %cst_50 : f32 to vector<1x32xf32>
    %89 = arith.mulf %86, %88 : vector<1x32xf32>
    %90 = arith.addf %89, %87 : vector<1x32xf32>
    %c13 = arith.constant 13 : index
    %91 = memref.load %arg0[%c13] : memref<16xi32, #tpu.memory_space<smem>>
    %92 = arith.index_cast %91 : i32 to index
    %c0_51 = arith.constant 0 : index
    %93 = vector.load %arg2[%92, %c0_51] : memref<32x32xf32, #tpu.memory_space<vmem>>, vector<1x32xf32>
    %c5_52 = arith.constant 5 : index
    %c0_53 = arith.constant 0 : index
    %94 = vector.load %arg1[%c5_52, %c0_53] : memref<8x32xf32, #tpu.memory_space<vmem>>, vector<1x32xf32>
    %cst_54 = arith.constant 5.65685415 : f32
    %95 = vector.broadcast %cst_54 : f32 to vector<1x32xf32>
    %96 = arith.mulf %93, %95 : vector<1x32xf32>
    %97 = arith.addf %96, %94 : vector<1x32xf32>
    %c14 = arith.constant 14 : index
    %98 = memref.load %arg0[%c14] : memref<16xi32, #tpu.memory_space<smem>>
    %99 = arith.index_cast %98 : i32 to index
    %c0_55 = arith.constant 0 : index
    %100 = vector.load %arg2[%99, %c0_55] : memref<32x32xf32, #tpu.memory_space<vmem>>, vector<1x32xf32>
    %c6_56 = arith.constant 6 : index
    %c0_57 = arith.constant 0 : index
    %101 = vector.load %arg1[%c6_56, %c0_57] : memref<8x32xf32, #tpu.memory_space<vmem>>, vector<1x32xf32>
    %cst_58 = arith.constant 5.65685415 : f32
    %102 = vector.broadcast %cst_58 : f32 to vector<1x32xf32>
    %103 = arith.mulf %100, %102 : vector<1x32xf32>
    %104 = arith.addf %103, %101 : vector<1x32xf32>
    %c15 = arith.constant 15 : index
    %105 = memref.load %arg0[%c15] : memref<16xi32, #tpu.memory_space<smem>>
    %106 = arith.index_cast %105 : i32 to index
    %c0_59 = arith.constant 0 : index
    %107 = vector.load %arg2[%106, %c0_59] : memref<32x32xf32, #tpu.memory_space<vmem>>, vector<1x32xf32>
    %c7_60 = arith.constant 7 : index
    %c0_61 = arith.constant 0 : index
    %108 = vector.load %arg1[%c7_60, %c0_61] : memref<8x32xf32, #tpu.memory_space<vmem>>, vector<1x32xf32>
    %cst_62 = arith.constant 5.65685415 : f32
    %109 = vector.broadcast %cst_62 : f32 to vector<1x32xf32>
    %110 = arith.mulf %107, %109 : vector<1x32xf32>
    %111 = arith.addf %110, %108 : vector<1x32xf32>
    %112 = tpu.concatenate %6, %13, %20, %27, %34, %41, %48, %55, %62, %69, %76, %83, %90, %97, %104, %111 in 0 : vector<1x32xf32>, vector<1x32xf32>, vector<1x32xf32>, vector<1x32xf32>, vector<1x32xf32>, vector<1x32xf32>, vector<1x32xf32>, vector<1x32xf32>, vector<1x32xf32>, vector<1x32xf32>, vector<1x32xf32>, vector<1x32xf32>, vector<1x32xf32>, vector<1x32xf32>, vector<1x32xf32>, vector<1x32xf32> -> vector<16x32xf32>
    %c0_63 = arith.constant 0 : index
    %c0_64 = arith.constant 0 : index
    %c0_65 = arith.constant 0 : index
    %113 = vector.load %arg3[%c0_63, %c0_64, %c0_65] : memref<2x32x96xbf16, #tpu.memory_space<vmem>>, vector<1x32x96xbf16>
    %114 = vector.shape_cast %113 : vector<1x32x96xbf16> to vector<32x96xbf16>
    %115 = arith.truncf %112 : vector<16x32xf32> to vector<16x32xbf16>
    %cst_66 = arith.constant dense<0.000000e+00> : vector<16x96xf32>
    %116 = tpu.matmul %115, %114, %cst_66 {dimension_numbers = #tpu.dot_dimension_numbers<[1], [0], [0], [1], [0, 0, 1, 1], [], []>} : vector<16x32xbf16>, vector<32x96xbf16>, vector<16x96xf32> -> vector<16x96xf32>
    %c0_67 = arith.constant 0 : index
    %c0_68 = arith.constant 0 : index
    %c0_69 = arith.constant 0 : index
    %117 = vector.load %arg4[%c0_67, %c0_68, %c0_69] : memref<2x1x96xf32, #tpu.memory_space<vmem>>, vector<1x1x96xf32>
    %118 = vector.shape_cast %117 : vector<1x1x96xf32> to vector<1x96xf32>
    %119 = vector.broadcast %118 : vector<1x96xf32> to vector<16x96xf32>
    %120 = arith.addf %116, %119 : vector<16x96xf32>
    %121 = vector.extract_strided_slice %120 {offsets = [0, 0], sizes = [16, 32], strides = [1, 1]} : vector<16x96xf32> to vector<16x32xf32>
    %122 = vector.extract_strided_slice %120 {offsets = [0, 32], sizes = [16, 32], strides = [1, 1]} : vector<16x96xf32> to vector<16x32xf32>
    %123 = vector.extract_strided_slice %120 {offsets = [0, 64], sizes = [16, 32], strides = [1, 1]} : vector<16x96xf32> to vector<16x32xf32>
    %124 = vector.extract_strided_slice %121 {offsets = [0, 0], sizes = [8, 8], strides = [1, 1]} : vector<16x32xf32> to vector<8x8xf32>
    %125 = arith.truncf %124 : vector<8x8xf32> to vector<8x8xbf16>
    %126 = vector.extract_strided_slice %122 {offsets = [0, 0], sizes = [8, 8], strides = [1, 1]} : vector<16x32xf32> to vector<8x8xf32>
    %127 = arith.truncf %126 : vector<8x8xf32> to vector<8x8xbf16>
    %128 = vector.extract_strided_slice %123 {offsets = [0, 0], sizes = [8, 8], strides = [1, 1]} : vector<16x32xf32> to vector<8x8xf32>
    %129 = arith.truncf %128 : vector<8x8xf32> to vector<8x8xbf16>
    %cst_70 = arith.constant dense<0.000000e+00> : vector<8x8xf32>
    %130 = tpu.matmul %125, %127, %cst_70 {dimension_numbers = #tpu.dot_dimension_numbers<[1], [1], [0], [0], [0, 0, 1, 0], [], []>} : vector<8x8xbf16>, vector<8x8xbf16>, vector<8x8xf32> -> vector<8x8xf32>
    %cst_71 = arith.constant 0.353553385 : f32
    %131 = vector.broadcast %cst_71 : f32 to vector<8x8xf32>
    %132 = arith.mulf %130, %131 : vector<8x8xf32>
    %cst_72 = arith.constant dense<0xFF800000> : vector<8xf32>
    %133 = vector.multi_reduction <maximumf>, %132, %cst_72 [1] : vector<8x8xf32> to vector<8xf32>
    %134 = vector.shape_cast %133 : vector<8xf32> to vector<8x1xf32>
    %135 = vector.broadcast %134 : vector<8x1xf32> to vector<8x8xf32>
    %136 = arith.subf %132, %135 : vector<8x8xf32>
    %137 = math.exp %136 : vector<8x8xf32>
    %cst_73 = arith.constant dense<0.000000e+00> : vector<8xf32>
    %138 = vector.multi_reduction <add>, %137, %cst_73 [1] : vector<8x8xf32> to vector<8xf32>
    %139 = vector.shape_cast %138 : vector<8xf32> to vector<8x1xf32>
    %140 = tpu.reciprocal %139 {approx = true} : vector<8x1xf32> -> vector<8x1xf32>
    %141 = vector.broadcast %140 : vector<8x1xf32> to vector<8x8xf32>
    %142 = arith.mulf %137, %141 : vector<8x8xf32>
    %143 = arith.truncf %142 : vector<8x8xf32> to vector<8x8xbf16>
    %cst_74 = arith.constant dense<0.000000e+00> : vector<8x8xf32>
    %144 = tpu.matmul %143, %129, %cst_74 {dimension_numbers = #tpu.dot_dimension_numbers<[1], [0], [0], [1], [0, 0, 1, 1], [], []>} : vector<8x8xbf16>, vector<8x8xbf16>, vector<8x8xf32> -> vector<8x8xf32>
    %145 = vector.extract_strided_slice %121 {offsets = [0, 8], sizes = [8, 8], strides = [1, 1]} : vector<16x32xf32> to vector<8x8xf32>
    %146 = arith.truncf %145 : vector<8x8xf32> to vector<8x8xbf16>
    %147 = vector.extract_strided_slice %122 {offsets = [0, 8], sizes = [8, 8], strides = [1, 1]} : vector<16x32xf32> to vector<8x8xf32>
    %148 = arith.truncf %147 : vector<8x8xf32> to vector<8x8xbf16>
    %149 = vector.extract_strided_slice %123 {offsets = [0, 8], sizes = [8, 8], strides = [1, 1]} : vector<16x32xf32> to vector<8x8xf32>
    %150 = arith.truncf %149 : vector<8x8xf32> to vector<8x8xbf16>
    %cst_75 = arith.constant dense<0.000000e+00> : vector<8x8xf32>
    %151 = tpu.matmul %146, %148, %cst_75 {dimension_numbers = #tpu.dot_dimension_numbers<[1], [1], [0], [0], [0, 0, 1, 0], [], []>} : vector<8x8xbf16>, vector<8x8xbf16>, vector<8x8xf32> -> vector<8x8xf32>
    %cst_76 = arith.constant 0.353553385 : f32
    %152 = vector.broadcast %cst_76 : f32 to vector<8x8xf32>
    %153 = arith.mulf %151, %152 : vector<8x8xf32>
    %cst_77 = arith.constant dense<0xFF800000> : vector<8xf32>
    %154 = vector.multi_reduction <maximumf>, %153, %cst_77 [1] : vector<8x8xf32> to vector<8xf32>
    %155 = vector.shape_cast %154 : vector<8xf32> to vector<8x1xf32>
    %156 = vector.broadcast %155 : vector<8x1xf32> to vector<8x8xf32>
    %157 = arith.subf %153, %156 : vector<8x8xf32>
    %158 = math.exp %157 : vector<8x8xf32>
    %cst_78 = arith.constant dense<0.000000e+00> : vector<8xf32>
    %159 = vector.multi_reduction <add>, %158, %cst_78 [1] : vector<8x8xf32> to vector<8xf32>
    %160 = vector.shape_cast %159 : vector<8xf32> to vector<8x1xf32>
    %161 = tpu.reciprocal %160 {approx = true} : vector<8x1xf32> -> vector<8x1xf32>
    %162 = vector.broadcast %161 : vector<8x1xf32> to vector<8x8xf32>
    %163 = arith.mulf %158, %162 : vector<8x8xf32>
    %164 = arith.truncf %163 : vector<8x8xf32> to vector<8x8xbf16>
    %cst_79 = arith.constant dense<0.000000e+00> : vector<8x8xf32>
    %165 = tpu.matmul %164, %150, %cst_79 {dimension_numbers = #tpu.dot_dimension_numbers<[1], [0], [0], [1], [0, 0, 1, 1], [], []>} : vector<8x8xbf16>, vector<8x8xbf16>, vector<8x8xf32> -> vector<8x8xf32>
    %166 = vector.extract_strided_slice %121 {offsets = [0, 16], sizes = [8, 8], strides = [1, 1]} : vector<16x32xf32> to vector<8x8xf32>
    %167 = arith.truncf %166 : vector<8x8xf32> to vector<8x8xbf16>
    %168 = vector.extract_strided_slice %122 {offsets = [0, 16], sizes = [8, 8], strides = [1, 1]} : vector<16x32xf32> to vector<8x8xf32>
    %169 = arith.truncf %168 : vector<8x8xf32> to vector<8x8xbf16>
    %170 = vector.extract_strided_slice %123 {offsets = [0, 16], sizes = [8, 8], strides = [1, 1]} : vector<16x32xf32> to vector<8x8xf32>
    %171 = arith.truncf %170 : vector<8x8xf32> to vector<8x8xbf16>
    %cst_80 = arith.constant dense<0.000000e+00> : vector<8x8xf32>
    %172 = tpu.matmul %167, %169, %cst_80 {dimension_numbers = #tpu.dot_dimension_numbers<[1], [1], [0], [0], [0, 0, 1, 0], [], []>} : vector<8x8xbf16>, vector<8x8xbf16>, vector<8x8xf32> -> vector<8x8xf32>
    %cst_81 = arith.constant 0.353553385 : f32
    %173 = vector.broadcast %cst_81 : f32 to vector<8x8xf32>
    %174 = arith.mulf %172, %173 : vector<8x8xf32>
    %cst_82 = arith.constant dense<0xFF800000> : vector<8xf32>
    %175 = vector.multi_reduction <maximumf>, %174, %cst_82 [1] : vector<8x8xf32> to vector<8xf32>
    %176 = vector.shape_cast %175 : vector<8xf32> to vector<8x1xf32>
    %177 = vector.broadcast %176 : vector<8x1xf32> to vector<8x8xf32>
    %178 = arith.subf %174, %177 : vector<8x8xf32>
    %179 = math.exp %178 : vector<8x8xf32>
    %cst_83 = arith.constant dense<0.000000e+00> : vector<8xf32>
    %180 = vector.multi_reduction <add>, %179, %cst_83 [1] : vector<8x8xf32> to vector<8xf32>
    %181 = vector.shape_cast %180 : vector<8xf32> to vector<8x1xf32>
    %182 = tpu.reciprocal %181 {approx = true} : vector<8x1xf32> -> vector<8x1xf32>
    %183 = vector.broadcast %182 : vector<8x1xf32> to vector<8x8xf32>
    %184 = arith.mulf %179, %183 : vector<8x8xf32>
    %185 = arith.truncf %184 : vector<8x8xf32> to vector<8x8xbf16>
    %cst_84 = arith.constant dense<0.000000e+00> : vector<8x8xf32>
    %186 = tpu.matmul %185, %171, %cst_84 {dimension_numbers = #tpu.dot_dimension_numbers<[1], [0], [0], [1], [0, 0, 1, 1], [], []>} : vector<8x8xbf16>, vector<8x8xbf16>, vector<8x8xf32> -> vector<8x8xf32>
    %187 = vector.extract_strided_slice %121 {offsets = [0, 24], sizes = [8, 8], strides = [1, 1]} : vector<16x32xf32> to vector<8x8xf32>
    %188 = arith.truncf %187 : vector<8x8xf32> to vector<8x8xbf16>
    %189 = vector.extract_strided_slice %122 {offsets = [0, 24], sizes = [8, 8], strides = [1, 1]} : vector<16x32xf32> to vector<8x8xf32>
    %190 = arith.truncf %189 : vector<8x8xf32> to vector<8x8xbf16>
    %191 = vector.extract_strided_slice %123 {offsets = [0, 24], sizes = [8, 8], strides = [1, 1]} : vector<16x32xf32> to vector<8x8xf32>
    %192 = arith.truncf %191 : vector<8x8xf32> to vector<8x8xbf16>
    %cst_85 = arith.constant dense<0.000000e+00> : vector<8x8xf32>
    %193 = tpu.matmul %188, %190, %cst_85 {dimension_numbers = #tpu.dot_dimension_numbers<[1], [1], [0], [0], [0, 0, 1, 0], [], []>} : vector<8x8xbf16>, vector<8x8xbf16>, vector<8x8xf32> -> vector<8x8xf32>
    %cst_86 = arith.constant 0.353553385 : f32
    %194 = vector.broadcast %cst_86 : f32 to vector<8x8xf32>
    %195 = arith.mulf %193, %194 : vector<8x8xf32>
    %cst_87 = arith.constant dense<0xFF800000> : vector<8xf32>
    %196 = vector.multi_reduction <maximumf>, %195, %cst_87 [1] : vector<8x8xf32> to vector<8xf32>
    %197 = vector.shape_cast %196 : vector<8xf32> to vector<8x1xf32>
    %198 = vector.broadcast %197 : vector<8x1xf32> to vector<8x8xf32>
    %199 = arith.subf %195, %198 : vector<8x8xf32>
    %200 = math.exp %199 : vector<8x8xf32>
    %cst_88 = arith.constant dense<0.000000e+00> : vector<8xf32>
    %201 = vector.multi_reduction <add>, %200, %cst_88 [1] : vector<8x8xf32> to vector<8xf32>
    %202 = vector.shape_cast %201 : vector<8xf32> to vector<8x1xf32>
    %203 = tpu.reciprocal %202 {approx = true} : vector<8x1xf32> -> vector<8x1xf32>
    %204 = vector.broadcast %203 : vector<8x1xf32> to vector<8x8xf32>
    %205 = arith.mulf %200, %204 : vector<8x8xf32>
    %206 = arith.truncf %205 : vector<8x8xf32> to vector<8x8xbf16>
    %cst_89 = arith.constant dense<0.000000e+00> : vector<8x8xf32>
    %207 = tpu.matmul %206, %192, %cst_89 {dimension_numbers = #tpu.dot_dimension_numbers<[1], [0], [0], [1], [0, 0, 1, 1], [], []>} : vector<8x8xbf16>, vector<8x8xbf16>, vector<8x8xf32> -> vector<8x8xf32>
    %208 = tpu.concatenate %144, %165, %186, %207 in 1 : vector<8x8xf32>, vector<8x8xf32>, vector<8x8xf32>, vector<8x8xf32> -> vector<8x32xf32>
    %209 = vector.extract_strided_slice %121 {offsets = [8, 0], sizes = [8, 8], strides = [1, 1]} : vector<16x32xf32> to vector<8x8xf32>
    %210 = arith.truncf %209 : vector<8x8xf32> to vector<8x8xbf16>
    %211 = vector.extract_strided_slice %122 {offsets = [8, 0], sizes = [8, 8], strides = [1, 1]} : vector<16x32xf32> to vector<8x8xf32>
    %212 = arith.truncf %211 : vector<8x8xf32> to vector<8x8xbf16>
    %213 = vector.extract_strided_slice %123 {offsets = [8, 0], sizes = [8, 8], strides = [1, 1]} : vector<16x32xf32> to vector<8x8xf32>
    %214 = arith.truncf %213 : vector<8x8xf32> to vector<8x8xbf16>
    %cst_90 = arith.constant dense<0.000000e+00> : vector<8x8xf32>
    %215 = tpu.matmul %210, %212, %cst_90 {dimension_numbers = #tpu.dot_dimension_numbers<[1], [1], [0], [0], [0, 0, 1, 0], [], []>} : vector<8x8xbf16>, vector<8x8xbf16>, vector<8x8xf32> -> vector<8x8xf32>
    %cst_91 = arith.constant 0.353553385 : f32
    %216 = vector.broadcast %cst_91 : f32 to vector<8x8xf32>
    %217 = arith.mulf %215, %216 : vector<8x8xf32>
    %cst_92 = arith.constant dense<0xFF800000> : vector<8xf32>
    %218 = vector.multi_reduction <maximumf>, %217, %cst_92 [1] : vector<8x8xf32> to vector<8xf32>
    %219 = vector.shape_cast %218 : vector<8xf32> to vector<8x1xf32>
    %220 = vector.broadcast %219 : vector<8x1xf32> to vector<8x8xf32>
    %221 = arith.subf %217, %220 : vector<8x8xf32>
    %222 = math.exp %221 : vector<8x8xf32>
    %cst_93 = arith.constant dense<0.000000e+00> : vector<8xf32>
    %223 = vector.multi_reduction <add>, %222, %cst_93 [1] : vector<8x8xf32> to vector<8xf32>
    %224 = vector.shape_cast %223 : vector<8xf32> to vector<8x1xf32>
    %225 = tpu.reciprocal %224 {approx = true} : vector<8x1xf32> -> vector<8x1xf32>
    %226 = vector.broadcast %225 : vector<8x1xf32> to vector<8x8xf32>
    %227 = arith.mulf %222, %226 : vector<8x8xf32>
    %228 = arith.truncf %227 : vector<8x8xf32> to vector<8x8xbf16>
    %cst_94 = arith.constant dense<0.000000e+00> : vector<8x8xf32>
    %229 = tpu.matmul %228, %214, %cst_94 {dimension_numbers = #tpu.dot_dimension_numbers<[1], [0], [0], [1], [0, 0, 1, 1], [], []>} : vector<8x8xbf16>, vector<8x8xbf16>, vector<8x8xf32> -> vector<8x8xf32>
    %230 = vector.extract_strided_slice %121 {offsets = [8, 8], sizes = [8, 8], strides = [1, 1]} : vector<16x32xf32> to vector<8x8xf32>
    %231 = arith.truncf %230 : vector<8x8xf32> to vector<8x8xbf16>
    %232 = vector.extract_strided_slice %122 {offsets = [8, 8], sizes = [8, 8], strides = [1, 1]} : vector<16x32xf32> to vector<8x8xf32>
    %233 = arith.truncf %232 : vector<8x8xf32> to vector<8x8xbf16>
    %234 = vector.extract_strided_slice %123 {offsets = [8, 8], sizes = [8, 8], strides = [1, 1]} : vector<16x32xf32> to vector<8x8xf32>
    %235 = arith.truncf %234 : vector<8x8xf32> to vector<8x8xbf16>
    %cst_95 = arith.constant dense<0.000000e+00> : vector<8x8xf32>
    %236 = tpu.matmul %231, %233, %cst_95 {dimension_numbers = #tpu.dot_dimension_numbers<[1], [1], [0], [0], [0, 0, 1, 0], [], []>} : vector<8x8xbf16>, vector<8x8xbf16>, vector<8x8xf32> -> vector<8x8xf32>
    %cst_96 = arith.constant 0.353553385 : f32
    %237 = vector.broadcast %cst_96 : f32 to vector<8x8xf32>
    %238 = arith.mulf %236, %237 : vector<8x8xf32>
    %cst_97 = arith.constant dense<0xFF800000> : vector<8xf32>
    %239 = vector.multi_reduction <maximumf>, %238, %cst_97 [1] : vector<8x8xf32> to vector<8xf32>
    %240 = vector.shape_cast %239 : vector<8xf32> to vector<8x1xf32>
    %241 = vector.broadcast %240 : vector<8x1xf32> to vector<8x8xf32>
    %242 = arith.subf %238, %241 : vector<8x8xf32>
    %243 = math.exp %242 : vector<8x8xf32>
    %cst_98 = arith.constant dense<0.000000e+00> : vector<8xf32>
    %244 = vector.multi_reduction <add>, %243, %cst_98 [1] : vector<8x8xf32> to vector<8xf32>
    %245 = vector.shape_cast %244 : vector<8xf32> to vector<8x1xf32>
    %246 = tpu.reciprocal %245 {approx = true} : vector<8x1xf32> -> vector<8x1xf32>
    %247 = vector.broadcast %246 : vector<8x1xf32> to vector<8x8xf32>
    %248 = arith.mulf %243, %247 : vector<8x8xf32>
    %249 = arith.truncf %248 : vector<8x8xf32> to vector<8x8xbf16>
    %cst_99 = arith.constant dense<0.000000e+00> : vector<8x8xf32>
    %250 = tpu.matmul %249, %235, %cst_99 {dimension_numbers = #tpu.dot_dimension_numbers<[1], [0], [0], [1], [0, 0, 1, 1], [], []>} : vector<8x8xbf16>, vector<8x8xbf16>, vector<8x8xf32> -> vector<8x8xf32>
    %251 = vector.extract_strided_slice %121 {offsets = [8, 16], sizes = [8, 8], strides = [1, 1]} : vector<16x32xf32> to vector<8x8xf32>
    %252 = arith.truncf %251 : vector<8x8xf32> to vector<8x8xbf16>
    %253 = vector.extract_strided_slice %122 {offsets = [8, 16], sizes = [8, 8], strides = [1, 1]} : vector<16x32xf32> to vector<8x8xf32>
    %254 = arith.truncf %253 : vector<8x8xf32> to vector<8x8xbf16>
    %255 = vector.extract_strided_slice %123 {offsets = [8, 16], sizes = [8, 8], strides = [1, 1]} : vector<16x32xf32> to vector<8x8xf32>
    %256 = arith.truncf %255 : vector<8x8xf32> to vector<8x8xbf16>
    %cst_100 = arith.constant dense<0.000000e+00> : vector<8x8xf32>
    %257 = tpu.matmul %252, %254, %cst_100 {dimension_numbers = #tpu.dot_dimension_numbers<[1], [1], [0], [0], [0, 0, 1, 0], [], []>} : vector<8x8xbf16>, vector<8x8xbf16>, vector<8x8xf32> -> vector<8x8xf32>
    %cst_101 = arith.constant 0.353553385 : f32
    %258 = vector.broadcast %cst_101 : f32 to vector<8x8xf32>
    %259 = arith.mulf %257, %258 : vector<8x8xf32>
    %cst_102 = arith.constant dense<0xFF800000> : vector<8xf32>
    %260 = vector.multi_reduction <maximumf>, %259, %cst_102 [1] : vector<8x8xf32> to vector<8xf32>
    %261 = vector.shape_cast %260 : vector<8xf32> to vector<8x1xf32>
    %262 = vector.broadcast %261 : vector<8x1xf32> to vector<8x8xf32>
    %263 = arith.subf %259, %262 : vector<8x8xf32>
    %264 = math.exp %263 : vector<8x8xf32>
    %cst_103 = arith.constant dense<0.000000e+00> : vector<8xf32>
    %265 = vector.multi_reduction <add>, %264, %cst_103 [1] : vector<8x8xf32> to vector<8xf32>
    %266 = vector.shape_cast %265 : vector<8xf32> to vector<8x1xf32>
    %267 = tpu.reciprocal %266 {approx = true} : vector<8x1xf32> -> vector<8x1xf32>
    %268 = vector.broadcast %267 : vector<8x1xf32> to vector<8x8xf32>
    %269 = arith.mulf %264, %268 : vector<8x8xf32>
    %270 = arith.truncf %269 : vector<8x8xf32> to vector<8x8xbf16>
    %cst_104 = arith.constant dense<0.000000e+00> : vector<8x8xf32>
    %271 = tpu.matmul %270, %256, %cst_104 {dimension_numbers = #tpu.dot_dimension_numbers<[1], [0], [0], [1], [0, 0, 1, 1], [], []>} : vector<8x8xbf16>, vector<8x8xbf16>, vector<8x8xf32> -> vector<8x8xf32>
    %272 = vector.extract_strided_slice %121 {offsets = [8, 24], sizes = [8, 8], strides = [1, 1]} : vector<16x32xf32> to vector<8x8xf32>
    %273 = arith.truncf %272 : vector<8x8xf32> to vector<8x8xbf16>
    %274 = vector.extract_strided_slice %122 {offsets = [8, 24], sizes = [8, 8], strides = [1, 1]} : vector<16x32xf32> to vector<8x8xf32>
    %275 = arith.truncf %274 : vector<8x8xf32> to vector<8x8xbf16>
    %276 = vector.extract_strided_slice %123 {offsets = [8, 24], sizes = [8, 8], strides = [1, 1]} : vector<16x32xf32> to vector<8x8xf32>
    %277 = arith.truncf %276 : vector<8x8xf32> to vector<8x8xbf16>
    %cst_105 = arith.constant dense<0.000000e+00> : vector<8x8xf32>
    %278 = tpu.matmul %273, %275, %cst_105 {dimension_numbers = #tpu.dot_dimension_numbers<[1], [1], [0], [0], [0, 0, 1, 0], [], []>} : vector<8x8xbf16>, vector<8x8xbf16>, vector<8x8xf32> -> vector<8x8xf32>
    %cst_106 = arith.constant 0.353553385 : f32
    %279 = vector.broadcast %cst_106 : f32 to vector<8x8xf32>
    %280 = arith.mulf %278, %279 : vector<8x8xf32>
    %cst_107 = arith.constant dense<0xFF800000> : vector<8xf32>
    %281 = vector.multi_reduction <maximumf>, %280, %cst_107 [1] : vector<8x8xf32> to vector<8xf32>
    %282 = vector.shape_cast %281 : vector<8xf32> to vector<8x1xf32>
    %283 = vector.broadcast %282 : vector<8x1xf32> to vector<8x8xf32>
    %284 = arith.subf %280, %283 : vector<8x8xf32>
    %285 = math.exp %284 : vector<8x8xf32>
    %cst_108 = arith.constant dense<0.000000e+00> : vector<8xf32>
    %286 = vector.multi_reduction <add>, %285, %cst_108 [1] : vector<8x8xf32> to vector<8xf32>
    %287 = vector.shape_cast %286 : vector<8xf32> to vector<8x1xf32>
    %288 = tpu.reciprocal %287 {approx = true} : vector<8x1xf32> -> vector<8x1xf32>
    %289 = vector.broadcast %288 : vector<8x1xf32> to vector<8x8xf32>
    %290 = arith.mulf %285, %289 : vector<8x8xf32>
    %291 = arith.truncf %290 : vector<8x8xf32> to vector<8x8xbf16>
    %cst_109 = arith.constant dense<0.000000e+00> : vector<8x8xf32>
    %292 = tpu.matmul %291, %277, %cst_109 {dimension_numbers = #tpu.dot_dimension_numbers<[1], [0], [0], [1], [0, 0, 1, 1], [], []>} : vector<8x8xbf16>, vector<8x8xbf16>, vector<8x8xf32> -> vector<8x8xf32>
    %293 = tpu.concatenate %229, %250, %271, %292 in 1 : vector<8x8xf32>, vector<8x8xf32>, vector<8x8xf32>, vector<8x8xf32> -> vector<8x32xf32>
    %294 = tpu.concatenate %208, %293 in 0 : vector<8x32xf32>, vector<8x32xf32> -> vector<16x32xf32>
    %c0_110 = arith.constant 0 : index
    %c0_111 = arith.constant 0 : index
    %c0_112 = arith.constant 0 : index
    %295 = vector.load %arg5[%c0_110, %c0_111, %c0_112] : memref<2x32x32xbf16, #tpu.memory_space<vmem>>, vector<1x32x32xbf16>
    %296 = vector.shape_cast %295 : vector<1x32x32xbf16> to vector<32x32xbf16>
    %297 = arith.truncf %294 : vector<16x32xf32> to vector<16x32xbf16>
    %cst_113 = arith.constant dense<0.000000e+00> : vector<16x32xf32>
    %298 = tpu.matmul %297, %296, %cst_113 {dimension_numbers = #tpu.dot_dimension_numbers<[1], [0], [0], [1], [0, 0, 1, 1], [], []>} : vector<16x32xbf16>, vector<32x32xbf16>, vector<16x32xf32> -> vector<16x32xf32>
    %c0_114 = arith.constant 0 : index
    %c0_115 = arith.constant 0 : index
    %c0_116 = arith.constant 0 : index
    %299 = vector.load %arg6[%c0_114, %c0_115, %c0_116] : memref<2x1x32xf32, #tpu.memory_space<vmem>>, vector<1x1x32xf32>
    %300 = vector.shape_cast %299 : vector<1x1x32xf32> to vector<1x32xf32>
    %301 = vector.broadcast %300 : vector<1x32xf32> to vector<16x32xf32>
    %302 = arith.addf %298, %301 : vector<16x32xf32>
    %c0_117 = arith.constant 0 : index
    %c0_118 = arith.constant 0 : index
    %c0_119 = arith.constant 0 : index
    %303 = vector.load %arg7[%c0_117, %c0_118, %c0_119] : memref<2x1x32xf32, #tpu.memory_space<vmem>>, vector<1x1x32xf32>
    %304 = vector.shape_cast %303 : vector<1x1x32xf32> to vector<1x32xf32>
    %c0_120 = arith.constant 0 : index
    %c0_121 = arith.constant 0 : index
    %c0_122 = arith.constant 0 : index
    %305 = vector.load %arg8[%c0_120, %c0_121, %c0_122] : memref<2x1x32xf32, #tpu.memory_space<vmem>>, vector<1x1x32xf32>
    %306 = vector.shape_cast %305 : vector<1x1x32xf32> to vector<1x32xf32>
    %307 = arith.addf %112, %302 : vector<16x32xf32>
    %cst_123 = arith.constant dense<0.000000e+00> : vector<16xf32>
    %308 = vector.multi_reduction <add>, %307, %cst_123 [1] : vector<16x32xf32> to vector<16xf32>
    %309 = vector.shape_cast %308 : vector<16xf32> to vector<16x1xf32>
    %cst_124 = arith.constant 3.200000e+01 : f32
    %310 = vector.broadcast %cst_124 : f32 to vector<16x1xf32>
    %311 = arith.divf %309, %310 : vector<16x1xf32>
    %312 = vector.broadcast %311 : vector<16x1xf32> to vector<16x32xf32>
    %313 = arith.subf %307, %312 : vector<16x32xf32>
    %314 = arith.mulf %313, %313 : vector<16x32xf32>
    %cst_125 = arith.constant dense<0.000000e+00> : vector<16xf32>
    %315 = vector.multi_reduction <add>, %314, %cst_125 [1] : vector<16x32xf32> to vector<16xf32>
    %316 = vector.shape_cast %315 : vector<16xf32> to vector<16x1xf32>
    %cst_126 = arith.constant 3.200000e+01 : f32
    %317 = vector.broadcast %cst_126 : f32 to vector<16x1xf32>
    %318 = arith.divf %316, %317 : vector<16x1xf32>
    %cst_127 = arith.constant 9.99999974E-6 : f32
    %319 = vector.broadcast %cst_127 : f32 to vector<16x1xf32>
    %320 = arith.addf %318, %319 : vector<16x1xf32>
    %321 = math.rsqrt %320 : vector<16x1xf32>
    %322 = vector.broadcast %321 : vector<16x1xf32> to vector<16x32xf32>
    %323 = arith.mulf %313, %322 : vector<16x32xf32>
    %324 = vector.broadcast %304 : vector<1x32xf32> to vector<16x32xf32>
    %325 = arith.mulf %323, %324 : vector<16x32xf32>
    %326 = vector.broadcast %306 : vector<1x32xf32> to vector<16x32xf32>
    %327 = arith.addf %325, %326 : vector<16x32xf32>
    %c0_128 = arith.constant 0 : index
    %c0_129 = arith.constant 0 : index
    %c0_130 = arith.constant 0 : index
    %328 = vector.load %arg9[%c0_128, %c0_129, %c0_130] : memref<2x32x64xbf16, #tpu.memory_space<vmem>>, vector<1x32x64xbf16>
    %329 = vector.shape_cast %328 : vector<1x32x64xbf16> to vector<32x64xbf16>
    %330 = arith.truncf %327 : vector<16x32xf32> to vector<16x32xbf16>
    %cst_131 = arith.constant dense<0.000000e+00> : vector<16x64xf32>
    %331 = tpu.matmul %330, %329, %cst_131 {dimension_numbers = #tpu.dot_dimension_numbers<[1], [0], [0], [1], [0, 0, 1, 1], [], []>} : vector<16x32xbf16>, vector<32x64xbf16>, vector<16x64xf32> -> vector<16x64xf32>
    %c0_132 = arith.constant 0 : index
    %c0_133 = arith.constant 0 : index
    %c0_134 = arith.constant 0 : index
    %332 = vector.load %arg10[%c0_132, %c0_133, %c0_134] : memref<2x1x64xf32, #tpu.memory_space<vmem>>, vector<1x1x64xf32>
    %333 = vector.shape_cast %332 : vector<1x1x64xf32> to vector<1x64xf32>
    %334 = vector.broadcast %333 : vector<1x64xf32> to vector<16x64xf32>
    %335 = arith.addf %331, %334 : vector<16x64xf32>
    %cst_135 = arith.constant 0.000000e+00 : f32
    %336 = vector.broadcast %cst_135 : f32 to vector<16x64xf32>
    %337 = arith.maximumf %335, %336 : vector<16x64xf32>
    %c0_136 = arith.constant 0 : index
    %c0_137 = arith.constant 0 : index
    %c0_138 = arith.constant 0 : index
    %338 = vector.load %arg11[%c0_136, %c0_137, %c0_138] : memref<2x64x32xbf16, #tpu.memory_space<vmem>>, vector<1x64x32xbf16>
    %339 = vector.shape_cast %338 : vector<1x64x32xbf16> to vector<64x32xbf16>
    %340 = arith.truncf %337 : vector<16x64xf32> to vector<16x64xbf16>
    %cst_139 = arith.constant dense<0.000000e+00> : vector<16x32xf32>
    %341 = tpu.matmul %340, %339, %cst_139 {dimension_numbers = #tpu.dot_dimension_numbers<[1], [0], [0], [1], [0, 0, 1, 1], [], []>} : vector<16x64xbf16>, vector<64x32xbf16>, vector<16x32xf32> -> vector<16x32xf32>
    %c0_140 = arith.constant 0 : index
    %c0_141 = arith.constant 0 : index
    %c0_142 = arith.constant 0 : index
    %342 = vector.load %arg12[%c0_140, %c0_141, %c0_142] : memref<2x1x32xf32, #tpu.memory_space<vmem>>, vector<1x1x32xf32>
    %343 = vector.shape_cast %342 : vector<1x1x32xf32> to vector<1x32xf32>
    %344 = vector.broadcast %343 : vector<1x32xf32> to vector<16x32xf32>
    %345 = arith.addf %341, %344 : vector<16x32xf32>
    %c0_143 = arith.constant 0 : index
    %c0_144 = arith.constant 0 : index
    %c0_145 = arith.constant 0 : index
    %346 = vector.load %arg13[%c0_143, %c0_144, %c0_145] : memref<2x1x32xf32, #tpu.memory_space<vmem>>, vector<1x1x32xf32>
    %347 = vector.shape_cast %346 : vector<1x1x32xf32> to vector<1x32xf32>
    %c0_146 = arith.constant 0 : index
    %c0_147 = arith.constant 0 : index
    %c0_148 = arith.constant 0 : index
    %348 = vector.load %arg14[%c0_146, %c0_147, %c0_148] : memref<2x1x32xf32, #tpu.memory_space<vmem>>, vector<1x1x32xf32>
    %349 = vector.shape_cast %348 : vector<1x1x32xf32> to vector<1x32xf32>
    %350 = arith.addf %327, %345 : vector<16x32xf32>
    %cst_149 = arith.constant dense<0.000000e+00> : vector<16xf32>
    %351 = vector.multi_reduction <add>, %350, %cst_149 [1] : vector<16x32xf32> to vector<16xf32>
    %352 = vector.shape_cast %351 : vector<16xf32> to vector<16x1xf32>
    %cst_150 = arith.constant 3.200000e+01 : f32
    %353 = vector.broadcast %cst_150 : f32 to vector<16x1xf32>
    %354 = arith.divf %352, %353 : vector<16x1xf32>
    %355 = vector.broadcast %354 : vector<16x1xf32> to vector<16x32xf32>
    %356 = arith.subf %350, %355 : vector<16x32xf32>
    %357 = arith.mulf %356, %356 : vector<16x32xf32>
    %cst_151 = arith.constant dense<0.000000e+00> : vector<16xf32>
    %358 = vector.multi_reduction <add>, %357, %cst_151 [1] : vector<16x32xf32> to vector<16xf32>
    %359 = vector.shape_cast %358 : vector<16xf32> to vector<16x1xf32>
    %cst_152 = arith.constant 3.200000e+01 : f32
    %360 = vector.broadcast %cst_152 : f32 to vector<16x1xf32>
    %361 = arith.divf %359, %360 : vector<16x1xf32>
    %cst_153 = arith.constant 9.99999974E-6 : f32
    %362 = vector.broadcast %cst_153 : f32 to vector<16x1xf32>
    %363 = arith.addf %361, %362 : vector<16x1xf32>
    %364 = math.rsqrt %363 : vector<16x1xf32>
    %365 = vector.broadcast %364 : vector<16x1xf32> to vector<16x32xf32>
    %366 = arith.mulf %356, %365 : vector<16x32xf32>
    %367 = vector.broadcast %347 : vector<1x32xf32> to vector<16x32xf32>
    %368 = arith.mulf %366, %367 : vector<16x32xf32>
    %369 = vector.broadcast %349 : vector<1x32xf32> to vector<16x32xf32>
    %370 = arith.addf %368, %369 : vector<16x32xf32>
    %c1_154 = arith.constant 1 : index
    %c0_155 = arith.constant 0 : index
    %c0_156 = arith.constant 0 : index
    %371 = vector.load %arg3[%c1_154, %c0_155, %c0_156] : memref<2x32x96xbf16, #tpu.memory_space<vmem>>, vector<1x32x96xbf16>
    %372 = vector.shape_cast %371 : vector<1x32x96xbf16> to vector<32x96xbf16>
    %373 = arith.truncf %370 : vector<16x32xf32> to vector<16x32xbf16>
    %cst_157 = arith.constant dense<0.000000e+00> : vector<16x96xf32>
    %374 = tpu.matmul %373, %372, %cst_157 {dimension_numbers = #tpu.dot_dimension_numbers<[1], [0], [0], [1], [0, 0, 1, 1], [], []>} : vector<16x32xbf16>, vector<32x96xbf16>, vector<16x96xf32> -> vector<16x96xf32>
    %c1_158 = arith.constant 1 : index
    %c0_159 = arith.constant 0 : index
    %c0_160 = arith.constant 0 : index
    %375 = vector.load %arg4[%c1_158, %c0_159, %c0_160] : memref<2x1x96xf32, #tpu.memory_space<vmem>>, vector<1x1x96xf32>
    %376 = vector.shape_cast %375 : vector<1x1x96xf32> to vector<1x96xf32>
    %377 = vector.broadcast %376 : vector<1x96xf32> to vector<16x96xf32>
    %378 = arith.addf %374, %377 : vector<16x96xf32>
    %379 = vector.extract_strided_slice %378 {offsets = [0, 0], sizes = [16, 32], strides = [1, 1]} : vector<16x96xf32> to vector<16x32xf32>
    %380 = vector.extract_strided_slice %378 {offsets = [0, 32], sizes = [16, 32], strides = [1, 1]} : vector<16x96xf32> to vector<16x32xf32>
    %381 = vector.extract_strided_slice %378 {offsets = [0, 64], sizes = [16, 32], strides = [1, 1]} : vector<16x96xf32> to vector<16x32xf32>
    %382 = vector.extract_strided_slice %379 {offsets = [0, 0], sizes = [8, 8], strides = [1, 1]} : vector<16x32xf32> to vector<8x8xf32>
    %383 = arith.truncf %382 : vector<8x8xf32> to vector<8x8xbf16>
    %384 = vector.extract_strided_slice %380 {offsets = [0, 0], sizes = [8, 8], strides = [1, 1]} : vector<16x32xf32> to vector<8x8xf32>
    %385 = arith.truncf %384 : vector<8x8xf32> to vector<8x8xbf16>
    %386 = vector.extract_strided_slice %381 {offsets = [0, 0], sizes = [8, 8], strides = [1, 1]} : vector<16x32xf32> to vector<8x8xf32>
    %387 = arith.truncf %386 : vector<8x8xf32> to vector<8x8xbf16>
    %cst_161 = arith.constant dense<0.000000e+00> : vector<8x8xf32>
    %388 = tpu.matmul %383, %385, %cst_161 {dimension_numbers = #tpu.dot_dimension_numbers<[1], [1], [0], [0], [0, 0, 1, 0], [], []>} : vector<8x8xbf16>, vector<8x8xbf16>, vector<8x8xf32> -> vector<8x8xf32>
    %cst_162 = arith.constant 0.353553385 : f32
    %389 = vector.broadcast %cst_162 : f32 to vector<8x8xf32>
    %390 = arith.mulf %388, %389 : vector<8x8xf32>
    %cst_163 = arith.constant dense<0xFF800000> : vector<8xf32>
    %391 = vector.multi_reduction <maximumf>, %390, %cst_163 [1] : vector<8x8xf32> to vector<8xf32>
    %392 = vector.shape_cast %391 : vector<8xf32> to vector<8x1xf32>
    %393 = vector.broadcast %392 : vector<8x1xf32> to vector<8x8xf32>
    %394 = arith.subf %390, %393 : vector<8x8xf32>
    %395 = math.exp %394 : vector<8x8xf32>
    %cst_164 = arith.constant dense<0.000000e+00> : vector<8xf32>
    %396 = vector.multi_reduction <add>, %395, %cst_164 [1] : vector<8x8xf32> to vector<8xf32>
    %397 = vector.shape_cast %396 : vector<8xf32> to vector<8x1xf32>
    %398 = tpu.reciprocal %397 {approx = true} : vector<8x1xf32> -> vector<8x1xf32>
    %399 = vector.broadcast %398 : vector<8x1xf32> to vector<8x8xf32>
    %400 = arith.mulf %395, %399 : vector<8x8xf32>
    %401 = arith.truncf %400 : vector<8x8xf32> to vector<8x8xbf16>
    %cst_165 = arith.constant dense<0.000000e+00> : vector<8x8xf32>
    %402 = tpu.matmul %401, %387, %cst_165 {dimension_numbers = #tpu.dot_dimension_numbers<[1], [0], [0], [1], [0, 0, 1, 1], [], []>} : vector<8x8xbf16>, vector<8x8xbf16>, vector<8x8xf32> -> vector<8x8xf32>
    %403 = vector.extract_strided_slice %379 {offsets = [0, 8], sizes = [8, 8], strides = [1, 1]} : vector<16x32xf32> to vector<8x8xf32>
    %404 = arith.truncf %403 : vector<8x8xf32> to vector<8x8xbf16>
    %405 = vector.extract_strided_slice %380 {offsets = [0, 8], sizes = [8, 8], strides = [1, 1]} : vector<16x32xf32> to vector<8x8xf32>
    %406 = arith.truncf %405 : vector<8x8xf32> to vector<8x8xbf16>
    %407 = vector.extract_strided_slice %381 {offsets = [0, 8], sizes = [8, 8], strides = [1, 1]} : vector<16x32xf32> to vector<8x8xf32>
    %408 = arith.truncf %407 : vector<8x8xf32> to vector<8x8xbf16>
    %cst_166 = arith.constant dense<0.000000e+00> : vector<8x8xf32>
    %409 = tpu.matmul %404, %406, %cst_166 {dimension_numbers = #tpu.dot_dimension_numbers<[1], [1], [0], [0], [0, 0, 1, 0], [], []>} : vector<8x8xbf16>, vector<8x8xbf16>, vector<8x8xf32> -> vector<8x8xf32>
    %cst_167 = arith.constant 0.353553385 : f32
    %410 = vector.broadcast %cst_167 : f32 to vector<8x8xf32>
    %411 = arith.mulf %409, %410 : vector<8x8xf32>
    %cst_168 = arith.constant dense<0xFF800000> : vector<8xf32>
    %412 = vector.multi_reduction <maximumf>, %411, %cst_168 [1] : vector<8x8xf32> to vector<8xf32>
    %413 = vector.shape_cast %412 : vector<8xf32> to vector<8x1xf32>
    %414 = vector.broadcast %413 : vector<8x1xf32> to vector<8x8xf32>
    %415 = arith.subf %411, %414 : vector<8x8xf32>
    %416 = math.exp %415 : vector<8x8xf32>
    %cst_169 = arith.constant dense<0.000000e+00> : vector<8xf32>
    %417 = vector.multi_reduction <add>, %416, %cst_169 [1] : vector<8x8xf32> to vector<8xf32>
    %418 = vector.shape_cast %417 : vector<8xf32> to vector<8x1xf32>
    %419 = tpu.reciprocal %418 {approx = true} : vector<8x1xf32> -> vector<8x1xf32>
    %420 = vector.broadcast %419 : vector<8x1xf32> to vector<8x8xf32>
    %421 = arith.mulf %416, %420 : vector<8x8xf32>
    %422 = arith.truncf %421 : vector<8x8xf32> to vector<8x8xbf16>
    %cst_170 = arith.constant dense<0.000000e+00> : vector<8x8xf32>
    %423 = tpu.matmul %422, %408, %cst_170 {dimension_numbers = #tpu.dot_dimension_numbers<[1], [0], [0], [1], [0, 0, 1, 1], [], []>} : vector<8x8xbf16>, vector<8x8xbf16>, vector<8x8xf32> -> vector<8x8xf32>
    %424 = vector.extract_strided_slice %379 {offsets = [0, 16], sizes = [8, 8], strides = [1, 1]} : vector<16x32xf32> to vector<8x8xf32>
    %425 = arith.truncf %424 : vector<8x8xf32> to vector<8x8xbf16>
    %426 = vector.extract_strided_slice %380 {offsets = [0, 16], sizes = [8, 8], strides = [1, 1]} : vector<16x32xf32> to vector<8x8xf32>
    %427 = arith.truncf %426 : vector<8x8xf32> to vector<8x8xbf16>
    %428 = vector.extract_strided_slice %381 {offsets = [0, 16], sizes = [8, 8], strides = [1, 1]} : vector<16x32xf32> to vector<8x8xf32>
    %429 = arith.truncf %428 : vector<8x8xf32> to vector<8x8xbf16>
    %cst_171 = arith.constant dense<0.000000e+00> : vector<8x8xf32>
    %430 = tpu.matmul %425, %427, %cst_171 {dimension_numbers = #tpu.dot_dimension_numbers<[1], [1], [0], [0], [0, 0, 1, 0], [], []>} : vector<8x8xbf16>, vector<8x8xbf16>, vector<8x8xf32> -> vector<8x8xf32>
    %cst_172 = arith.constant 0.353553385 : f32
    %431 = vector.broadcast %cst_172 : f32 to vector<8x8xf32>
    %432 = arith.mulf %430, %431 : vector<8x8xf32>
    %cst_173 = arith.constant dense<0xFF800000> : vector<8xf32>
    %433 = vector.multi_reduction <maximumf>, %432, %cst_173 [1] : vector<8x8xf32> to vector<8xf32>
    %434 = vector.shape_cast %433 : vector<8xf32> to vector<8x1xf32>
    %435 = vector.broadcast %434 : vector<8x1xf32> to vector<8x8xf32>
    %436 = arith.subf %432, %435 : vector<8x8xf32>
    %437 = math.exp %436 : vector<8x8xf32>
    %cst_174 = arith.constant dense<0.000000e+00> : vector<8xf32>
    %438 = vector.multi_reduction <add>, %437, %cst_174 [1] : vector<8x8xf32> to vector<8xf32>
    %439 = vector.shape_cast %438 : vector<8xf32> to vector<8x1xf32>
    %440 = tpu.reciprocal %439 {approx = true} : vector<8x1xf32> -> vector<8x1xf32>
    %441 = vector.broadcast %440 : vector<8x1xf32> to vector<8x8xf32>
    %442 = arith.mulf %437, %441 : vector<8x8xf32>
    %443 = arith.truncf %442 : vector<8x8xf32> to vector<8x8xbf16>
    %cst_175 = arith.constant dense<0.000000e+00> : vector<8x8xf32>
    %444 = tpu.matmul %443, %429, %cst_175 {dimension_numbers = #tpu.dot_dimension_numbers<[1], [0], [0], [1], [0, 0, 1, 1], [], []>} : vector<8x8xbf16>, vector<8x8xbf16>, vector<8x8xf32> -> vector<8x8xf32>
    %445 = vector.extract_strided_slice %379 {offsets = [0, 24], sizes = [8, 8], strides = [1, 1]} : vector<16x32xf32> to vector<8x8xf32>
    %446 = arith.truncf %445 : vector<8x8xf32> to vector<8x8xbf16>
    %447 = vector.extract_strided_slice %380 {offsets = [0, 24], sizes = [8, 8], strides = [1, 1]} : vector<16x32xf32> to vector<8x8xf32>
    %448 = arith.truncf %447 : vector<8x8xf32> to vector<8x8xbf16>
    %449 = vector.extract_strided_slice %381 {offsets = [0, 24], sizes = [8, 8], strides = [1, 1]} : vector<16x32xf32> to vector<8x8xf32>
    %450 = arith.truncf %449 : vector<8x8xf32> to vector<8x8xbf16>
    %cst_176 = arith.constant dense<0.000000e+00> : vector<8x8xf32>
    %451 = tpu.matmul %446, %448, %cst_176 {dimension_numbers = #tpu.dot_dimension_numbers<[1], [1], [0], [0], [0, 0, 1, 0], [], []>} : vector<8x8xbf16>, vector<8x8xbf16>, vector<8x8xf32> -> vector<8x8xf32>
    %cst_177 = arith.constant 0.353553385 : f32
    %452 = vector.broadcast %cst_177 : f32 to vector<8x8xf32>
    %453 = arith.mulf %451, %452 : vector<8x8xf32>
    %cst_178 = arith.constant dense<0xFF800000> : vector<8xf32>
    %454 = vector.multi_reduction <maximumf>, %453, %cst_178 [1] : vector<8x8xf32> to vector<8xf32>
    %455 = vector.shape_cast %454 : vector<8xf32> to vector<8x1xf32>
    %456 = vector.broadcast %455 : vector<8x1xf32> to vector<8x8xf32>
    %457 = arith.subf %453, %456 : vector<8x8xf32>
    %458 = math.exp %457 : vector<8x8xf32>
    %cst_179 = arith.constant dense<0.000000e+00> : vector<8xf32>
    %459 = vector.multi_reduction <add>, %458, %cst_179 [1] : vector<8x8xf32> to vector<8xf32>
    %460 = vector.shape_cast %459 : vector<8xf32> to vector<8x1xf32>
    %461 = tpu.reciprocal %460 {approx = true} : vector<8x1xf32> -> vector<8x1xf32>
    %462 = vector.broadcast %461 : vector<8x1xf32> to vector<8x8xf32>
    %463 = arith.mulf %458, %462 : vector<8x8xf32>
    %464 = arith.truncf %463 : vector<8x8xf32> to vector<8x8xbf16>
    %cst_180 = arith.constant dense<0.000000e+00> : vector<8x8xf32>
    %465 = tpu.matmul %464, %450, %cst_180 {dimension_numbers = #tpu.dot_dimension_numbers<[1], [0], [0], [1], [0, 0, 1, 1], [], []>} : vector<8x8xbf16>, vector<8x8xbf16>, vector<8x8xf32> -> vector<8x8xf32>
    %466 = tpu.concatenate %402, %423, %444, %465 in 1 : vector<8x8xf32>, vector<8x8xf32>, vector<8x8xf32>, vector<8x8xf32> -> vector<8x32xf32>
    %467 = vector.extract_strided_slice %379 {offsets = [8, 0], sizes = [8, 8], strides = [1, 1]} : vector<16x32xf32> to vector<8x8xf32>
    %468 = arith.truncf %467 : vector<8x8xf32> to vector<8x8xbf16>
    %469 = vector.extract_strided_slice %380 {offsets = [8, 0], sizes = [8, 8], strides = [1, 1]} : vector<16x32xf32> to vector<8x8xf32>
    %470 = arith.truncf %469 : vector<8x8xf32> to vector<8x8xbf16>
    %471 = vector.extract_strided_slice %381 {offsets = [8, 0], sizes = [8, 8], strides = [1, 1]} : vector<16x32xf32> to vector<8x8xf32>
    %472 = arith.truncf %471 : vector<8x8xf32> to vector<8x8xbf16>
    %cst_181 = arith.constant dense<0.000000e+00> : vector<8x8xf32>
    %473 = tpu.matmul %468, %470, %cst_181 {dimension_numbers = #tpu.dot_dimension_numbers<[1], [1], [0], [0], [0, 0, 1, 0], [], []>} : vector<8x8xbf16>, vector<8x8xbf16>, vector<8x8xf32> -> vector<8x8xf32>
    %cst_182 = arith.constant 0.353553385 : f32
    %474 = vector.broadcast %cst_182 : f32 to vector<8x8xf32>
    %475 = arith.mulf %473, %474 : vector<8x8xf32>
    %cst_183 = arith.constant dense<0xFF800000> : vector<8xf32>
    %476 = vector.multi_reduction <maximumf>, %475, %cst_183 [1] : vector<8x8xf32> to vector<8xf32>
    %477 = vector.shape_cast %476 : vector<8xf32> to vector<8x1xf32>
    %478 = vector.broadcast %477 : vector<8x1xf32> to vector<8x8xf32>
    %479 = arith.subf %475, %478 : vector<8x8xf32>
    %480 = math.exp %479 : vector<8x8xf32>
    %cst_184 = arith.constant dense<0.000000e+00> : vector<8xf32>
    %481 = vector.multi_reduction <add>, %480, %cst_184 [1] : vector<8x8xf32> to vector<8xf32>
    %482 = vector.shape_cast %481 : vector<8xf32> to vector<8x1xf32>
    %483 = tpu.reciprocal %482 {approx = true} : vector<8x1xf32> -> vector<8x1xf32>
    %484 = vector.broadcast %483 : vector<8x1xf32> to vector<8x8xf32>
    %485 = arith.mulf %480, %484 : vector<8x8xf32>
    %486 = arith.truncf %485 : vector<8x8xf32> to vector<8x8xbf16>
    %cst_185 = arith.constant dense<0.000000e+00> : vector<8x8xf32>
    %487 = tpu.matmul %486, %472, %cst_185 {dimension_numbers = #tpu.dot_dimension_numbers<[1], [0], [0], [1], [0, 0, 1, 1], [], []>} : vector<8x8xbf16>, vector<8x8xbf16>, vector<8x8xf32> -> vector<8x8xf32>
    %488 = vector.extract_strided_slice %379 {offsets = [8, 8], sizes = [8, 8], strides = [1, 1]} : vector<16x32xf32> to vector<8x8xf32>
    %489 = arith.truncf %488 : vector<8x8xf32> to vector<8x8xbf16>
    %490 = vector.extract_strided_slice %380 {offsets = [8, 8], sizes = [8, 8], strides = [1, 1]} : vector<16x32xf32> to vector<8x8xf32>
    %491 = arith.truncf %490 : vector<8x8xf32> to vector<8x8xbf16>
    %492 = vector.extract_strided_slice %381 {offsets = [8, 8], sizes = [8, 8], strides = [1, 1]} : vector<16x32xf32> to vector<8x8xf32>
    %493 = arith.truncf %492 : vector<8x8xf32> to vector<8x8xbf16>
    %cst_186 = arith.constant dense<0.000000e+00> : vector<8x8xf32>
    %494 = tpu.matmul %489, %491, %cst_186 {dimension_numbers = #tpu.dot_dimension_numbers<[1], [1], [0], [0], [0, 0, 1, 0], [], []>} : vector<8x8xbf16>, vector<8x8xbf16>, vector<8x8xf32> -> vector<8x8xf32>
    %cst_187 = arith.constant 0.353553385 : f32
    %495 = vector.broadcast %cst_187 : f32 to vector<8x8xf32>
    %496 = arith.mulf %494, %495 : vector<8x8xf32>
    %cst_188 = arith.constant dense<0xFF800000> : vector<8xf32>
    %497 = vector.multi_reduction <maximumf>, %496, %cst_188 [1] : vector<8x8xf32> to vector<8xf32>
    %498 = vector.shape_cast %497 : vector<8xf32> to vector<8x1xf32>
    %499 = vector.broadcast %498 : vector<8x1xf32> to vector<8x8xf32>
    %500 = arith.subf %496, %499 : vector<8x8xf32>
    %501 = math.exp %500 : vector<8x8xf32>
    %cst_189 = arith.constant dense<0.000000e+00> : vector<8xf32>
    %502 = vector.multi_reduction <add>, %501, %cst_189 [1] : vector<8x8xf32> to vector<8xf32>
    %503 = vector.shape_cast %502 : vector<8xf32> to vector<8x1xf32>
    %504 = tpu.reciprocal %503 {approx = true} : vector<8x1xf32> -> vector<8x1xf32>
    %505 = vector.broadcast %504 : vector<8x1xf32> to vector<8x8xf32>
    %506 = arith.mulf %501, %505 : vector<8x8xf32>
    %507 = arith.truncf %506 : vector<8x8xf32> to vector<8x8xbf16>
    %cst_190 = arith.constant dense<0.000000e+00> : vector<8x8xf32>
    %508 = tpu.matmul %507, %493, %cst_190 {dimension_numbers = #tpu.dot_dimension_numbers<[1], [0], [0], [1], [0, 0, 1, 1], [], []>} : vector<8x8xbf16>, vector<8x8xbf16>, vector<8x8xf32> -> vector<8x8xf32>
    %509 = vector.extract_strided_slice %379 {offsets = [8, 16], sizes = [8, 8], strides = [1, 1]} : vector<16x32xf32> to vector<8x8xf32>
    %510 = arith.truncf %509 : vector<8x8xf32> to vector<8x8xbf16>
    %511 = vector.extract_strided_slice %380 {offsets = [8, 16], sizes = [8, 8], strides = [1, 1]} : vector<16x32xf32> to vector<8x8xf32>
    %512 = arith.truncf %511 : vector<8x8xf32> to vector<8x8xbf16>
    %513 = vector.extract_strided_slice %381 {offsets = [8, 16], sizes = [8, 8], strides = [1, 1]} : vector<16x32xf32> to vector<8x8xf32>
    %514 = arith.truncf %513 : vector<8x8xf32> to vector<8x8xbf16>
    %cst_191 = arith.constant dense<0.000000e+00> : vector<8x8xf32>
    %515 = tpu.matmul %510, %512, %cst_191 {dimension_numbers = #tpu.dot_dimension_numbers<[1], [1], [0], [0], [0, 0, 1, 0], [], []>} : vector<8x8xbf16>, vector<8x8xbf16>, vector<8x8xf32> -> vector<8x8xf32>
    %cst_192 = arith.constant 0.353553385 : f32
    %516 = vector.broadcast %cst_192 : f32 to vector<8x8xf32>
    %517 = arith.mulf %515, %516 : vector<8x8xf32>
    %cst_193 = arith.constant dense<0xFF800000> : vector<8xf32>
    %518 = vector.multi_reduction <maximumf>, %517, %cst_193 [1] : vector<8x8xf32> to vector<8xf32>
    %519 = vector.shape_cast %518 : vector<8xf32> to vector<8x1xf32>
    %520 = vector.broadcast %519 : vector<8x1xf32> to vector<8x8xf32>
    %521 = arith.subf %517, %520 : vector<8x8xf32>
    %522 = math.exp %521 : vector<8x8xf32>
    %cst_194 = arith.constant dense<0.000000e+00> : vector<8xf32>
    %523 = vector.multi_reduction <add>, %522, %cst_194 [1] : vector<8x8xf32> to vector<8xf32>
    %524 = vector.shape_cast %523 : vector<8xf32> to vector<8x1xf32>
    %525 = tpu.reciprocal %524 {approx = true} : vector<8x1xf32> -> vector<8x1xf32>
    %526 = vector.broadcast %525 : vector<8x1xf32> to vector<8x8xf32>
    %527 = arith.mulf %522, %526 : vector<8x8xf32>
    %528 = arith.truncf %527 : vector<8x8xf32> to vector<8x8xbf16>
    %cst_195 = arith.constant dense<0.000000e+00> : vector<8x8xf32>
    %529 = tpu.matmul %528, %514, %cst_195 {dimension_numbers = #tpu.dot_dimension_numbers<[1], [0], [0], [1], [0, 0, 1, 1], [], []>} : vector<8x8xbf16>, vector<8x8xbf16>, vector<8x8xf32> -> vector<8x8xf32>
    %530 = vector.extract_strided_slice %379 {offsets = [8, 24], sizes = [8, 8], strides = [1, 1]} : vector<16x32xf32> to vector<8x8xf32>
    %531 = arith.truncf %530 : vector<8x8xf32> to vector<8x8xbf16>
    %532 = vector.extract_strided_slice %380 {offsets = [8, 24], sizes = [8, 8], strides = [1, 1]} : vector<16x32xf32> to vector<8x8xf32>
    %533 = arith.truncf %532 : vector<8x8xf32> to vector<8x8xbf16>
    %534 = vector.extract_strided_slice %381 {offsets = [8, 24], sizes = [8, 8], strides = [1, 1]} : vector<16x32xf32> to vector<8x8xf32>
    %535 = arith.truncf %534 : vector<8x8xf32> to vector<8x8xbf16>
    %cst_196 = arith.constant dense<0.000000e+00> : vector<8x8xf32>
    %536 = tpu.matmul %531, %533, %cst_196 {dimension_numbers = #tpu.dot_dimension_numbers<[1], [1], [0], [0], [0, 0, 1, 0], [], []>} : vector<8x8xbf16>, vector<8x8xbf16>, vector<8x8xf32> -> vector<8x8xf32>
    %cst_197 = arith.constant 0.353553385 : f32
    %537 = vector.broadcast %cst_197 : f32 to vector<8x8xf32>
    %538 = arith.mulf %536, %537 : vector<8x8xf32>
    %cst_198 = arith.constant dense<0xFF800000> : vector<8xf32>
    %539 = vector.multi_reduction <maximumf>, %538, %cst_198 [1] : vector<8x8xf32> to vector<8xf32>
    %540 = vector.shape_cast %539 : vector<8xf32> to vector<8x1xf32>
    %541 = vector.broadcast %540 : vector<8x1xf32> to vector<8x8xf32>
    %542 = arith.subf %538, %541 : vector<8x8xf32>
    %543 = math.exp %542 : vector<8x8xf32>
    %cst_199 = arith.constant dense<0.000000e+00> : vector<8xf32>
    %544 = vector.multi_reduction <add>, %543, %cst_199 [1] : vector<8x8xf32> to vector<8xf32>
    %545 = vector.shape_cast %544 : vector<8xf32> to vector<8x1xf32>
    %546 = tpu.reciprocal %545 {approx = true} : vector<8x1xf32> -> vector<8x1xf32>
    %547 = vector.broadcast %546 : vector<8x1xf32> to vector<8x8xf32>
    %548 = arith.mulf %543, %547 : vector<8x8xf32>
    %549 = arith.truncf %548 : vector<8x8xf32> to vector<8x8xbf16>
    %cst_200 = arith.constant dense<0.000000e+00> : vector<8x8xf32>
    %550 = tpu.matmul %549, %535, %cst_200 {dimension_numbers = #tpu.dot_dimension_numbers<[1], [0], [0], [1], [0, 0, 1, 1], [], []>} : vector<8x8xbf16>, vector<8x8xbf16>, vector<8x8xf32> -> vector<8x8xf32>
    %551 = tpu.concatenate %487, %508, %529, %550 in 1 : vector<8x8xf32>, vector<8x8xf32>, vector<8x8xf32>, vector<8x8xf32> -> vector<8x32xf32>
    %552 = tpu.concatenate %466, %551 in 0 : vector<8x32xf32>, vector<8x32xf32> -> vector<16x32xf32>
    %c1_201 = arith.constant 1 : index
    %c0_202 = arith.constant 0 : index
    %c0_203 = arith.constant 0 : index
    %553 = vector.load %arg5[%c1_201, %c0_202, %c0_203] : memref<2x32x32xbf16, #tpu.memory_space<vmem>>, vector<1x32x32xbf16>
    %554 = vector.shape_cast %553 : vector<1x32x32xbf16> to vector<32x32xbf16>
    %555 = arith.truncf %552 : vector<16x32xf32> to vector<16x32xbf16>
    %cst_204 = arith.constant dense<0.000000e+00> : vector<16x32xf32>
    %556 = tpu.matmul %555, %554, %cst_204 {dimension_numbers = #tpu.dot_dimension_numbers<[1], [0], [0], [1], [0, 0, 1, 1], [], []>} : vector<16x32xbf16>, vector<32x32xbf16>, vector<16x32xf32> -> vector<16x32xf32>
    %c1_205 = arith.constant 1 : index
    %c0_206 = arith.constant 0 : index
    %c0_207 = arith.constant 0 : index
    %557 = vector.load %arg6[%c1_205, %c0_206, %c0_207] : memref<2x1x32xf32, #tpu.memory_space<vmem>>, vector<1x1x32xf32>
    %558 = vector.shape_cast %557 : vector<1x1x32xf32> to vector<1x32xf32>
    %559 = vector.broadcast %558 : vector<1x32xf32> to vector<16x32xf32>
    %560 = arith.addf %556, %559 : vector<16x32xf32>
    %c1_208 = arith.constant 1 : index
    %c0_209 = arith.constant 0 : index
    %c0_210 = arith.constant 0 : index
    %561 = vector.load %arg7[%c1_208, %c0_209, %c0_210] : memref<2x1x32xf32, #tpu.memory_space<vmem>>, vector<1x1x32xf32>
    %562 = vector.shape_cast %561 : vector<1x1x32xf32> to vector<1x32xf32>
    %c1_211 = arith.constant 1 : index
    %c0_212 = arith.constant 0 : index
    %c0_213 = arith.constant 0 : index
    %563 = vector.load %arg8[%c1_211, %c0_212, %c0_213] : memref<2x1x32xf32, #tpu.memory_space<vmem>>, vector<1x1x32xf32>
    %564 = vector.shape_cast %563 : vector<1x1x32xf32> to vector<1x32xf32>
    %565 = arith.addf %370, %560 : vector<16x32xf32>
    %cst_214 = arith.constant dense<0.000000e+00> : vector<16xf32>
    %566 = vector.multi_reduction <add>, %565, %cst_214 [1] : vector<16x32xf32> to vector<16xf32>
    %567 = vector.shape_cast %566 : vector<16xf32> to vector<16x1xf32>
    %cst_215 = arith.constant 3.200000e+01 : f32
    %568 = vector.broadcast %cst_215 : f32 to vector<16x1xf32>
    %569 = arith.divf %567, %568 : vector<16x1xf32>
    %570 = vector.broadcast %569 : vector<16x1xf32> to vector<16x32xf32>
    %571 = arith.subf %565, %570 : vector<16x32xf32>
    %572 = arith.mulf %571, %571 : vector<16x32xf32>
    %cst_216 = arith.constant dense<0.000000e+00> : vector<16xf32>
    %573 = vector.multi_reduction <add>, %572, %cst_216 [1] : vector<16x32xf32> to vector<16xf32>
    %574 = vector.shape_cast %573 : vector<16xf32> to vector<16x1xf32>
    %cst_217 = arith.constant 3.200000e+01 : f32
    %575 = vector.broadcast %cst_217 : f32 to vector<16x1xf32>
    %576 = arith.divf %574, %575 : vector<16x1xf32>
    %cst_218 = arith.constant 9.99999974E-6 : f32
    %577 = vector.broadcast %cst_218 : f32 to vector<16x1xf32>
    %578 = arith.addf %576, %577 : vector<16x1xf32>
    %579 = math.rsqrt %578 : vector<16x1xf32>
    %580 = vector.broadcast %579 : vector<16x1xf32> to vector<16x32xf32>
    %581 = arith.mulf %571, %580 : vector<16x32xf32>
    %582 = vector.broadcast %562 : vector<1x32xf32> to vector<16x32xf32>
    %583 = arith.mulf %581, %582 : vector<16x32xf32>
    %584 = vector.broadcast %564 : vector<1x32xf32> to vector<16x32xf32>
    %585 = arith.addf %583, %584 : vector<16x32xf32>
    %c1_219 = arith.constant 1 : index
    %c0_220 = arith.constant 0 : index
    %c0_221 = arith.constant 0 : index
    %586 = vector.load %arg9[%c1_219, %c0_220, %c0_221] : memref<2x32x64xbf16, #tpu.memory_space<vmem>>, vector<1x32x64xbf16>
    %587 = vector.shape_cast %586 : vector<1x32x64xbf16> to vector<32x64xbf16>
    %588 = arith.truncf %585 : vector<16x32xf32> to vector<16x32xbf16>
    %cst_222 = arith.constant dense<0.000000e+00> : vector<16x64xf32>
    %589 = tpu.matmul %588, %587, %cst_222 {dimension_numbers = #tpu.dot_dimension_numbers<[1], [0], [0], [1], [0, 0, 1, 1], [], []>} : vector<16x32xbf16>, vector<32x64xbf16>, vector<16x64xf32> -> vector<16x64xf32>
    %c1_223 = arith.constant 1 : index
    %c0_224 = arith.constant 0 : index
    %c0_225 = arith.constant 0 : index
    %590 = vector.load %arg10[%c1_223, %c0_224, %c0_225] : memref<2x1x64xf32, #tpu.memory_space<vmem>>, vector<1x1x64xf32>
    %591 = vector.shape_cast %590 : vector<1x1x64xf32> to vector<1x64xf32>
    %592 = vector.broadcast %591 : vector<1x64xf32> to vector<16x64xf32>
    %593 = arith.addf %589, %592 : vector<16x64xf32>
    %cst_226 = arith.constant 0.000000e+00 : f32
    %594 = vector.broadcast %cst_226 : f32 to vector<16x64xf32>
    %595 = arith.maximumf %593, %594 : vector<16x64xf32>
    %c1_227 = arith.constant 1 : index
    %c0_228 = arith.constant 0 : index
    %c0_229 = arith.constant 0 : index
    %596 = vector.load %arg11[%c1_227, %c0_228, %c0_229] : memref<2x64x32xbf16, #tpu.memory_space<vmem>>, vector<1x64x32xbf16>
    %597 = vector.shape_cast %596 : vector<1x64x32xbf16> to vector<64x32xbf16>
    %598 = arith.truncf %595 : vector<16x64xf32> to vector<16x64xbf16>
    %cst_230 = arith.constant dense<0.000000e+00> : vector<16x32xf32>
    %599 = tpu.matmul %598, %597, %cst_230 {dimension_numbers = #tpu.dot_dimension_numbers<[1], [0], [0], [1], [0, 0, 1, 1], [], []>} : vector<16x64xbf16>, vector<64x32xbf16>, vector<16x32xf32> -> vector<16x32xf32>
    %c1_231 = arith.constant 1 : index
    %c0_232 = arith.constant 0 : index
    %c0_233 = arith.constant 0 : index
    %600 = vector.load %arg12[%c1_231, %c0_232, %c0_233] : memref<2x1x32xf32, #tpu.memory_space<vmem>>, vector<1x1x32xf32>
    %601 = vector.shape_cast %600 : vector<1x1x32xf32> to vector<1x32xf32>
    %602 = vector.broadcast %601 : vector<1x32xf32> to vector<16x32xf32>
    %603 = arith.addf %599, %602 : vector<16x32xf32>
    %c1_234 = arith.constant 1 : index
    %c0_235 = arith.constant 0 : index
    %c0_236 = arith.constant 0 : index
    %604 = vector.load %arg13[%c1_234, %c0_235, %c0_236] : memref<2x1x32xf32, #tpu.memory_space<vmem>>, vector<1x1x32xf32>
    %605 = vector.shape_cast %604 : vector<1x1x32xf32> to vector<1x32xf32>
    %c1_237 = arith.constant 1 : index
    %c0_238 = arith.constant 0 : index
    %c0_239 = arith.constant 0 : index
    %606 = vector.load %arg14[%c1_237, %c0_238, %c0_239] : memref<2x1x32xf32, #tpu.memory_space<vmem>>, vector<1x1x32xf32>
    %607 = vector.shape_cast %606 : vector<1x1x32xf32> to vector<1x32xf32>
    %608 = arith.addf %585, %603 : vector<16x32xf32>
    %cst_240 = arith.constant dense<0.000000e+00> : vector<16xf32>
    %609 = vector.multi_reduction <add>, %608, %cst_240 [1] : vector<16x32xf32> to vector<16xf32>
    %610 = vector.shape_cast %609 : vector<16xf32> to vector<16x1xf32>
    %cst_241 = arith.constant 3.200000e+01 : f32
    %611 = vector.broadcast %cst_241 : f32 to vector<16x1xf32>
    %612 = arith.divf %610, %611 : vector<16x1xf32>
    %613 = vector.broadcast %612 : vector<16x1xf32> to vector<16x32xf32>
    %614 = arith.subf %608, %613 : vector<16x32xf32>
    %615 = arith.mulf %614, %614 : vector<16x32xf32>
    %cst_242 = arith.constant dense<0.000000e+00> : vector<16xf32>
    %616 = vector.multi_reduction <add>, %615, %cst_242 [1] : vector<16x32xf32> to vector<16xf32>
    %617 = vector.shape_cast %616 : vector<16xf32> to vector<16x1xf32>
    %cst_243 = arith.constant 3.200000e+01 : f32
    %618 = vector.broadcast %cst_243 : f32 to vector<16x1xf32>
    %619 = arith.divf %617, %618 : vector<16x1xf32>
    %cst_244 = arith.constant 9.99999974E-6 : f32
    %620 = vector.broadcast %cst_244 : f32 to vector<16x1xf32>
    %621 = arith.addf %619, %620 : vector<16x1xf32>
    %622 = math.rsqrt %621 : vector<16x1xf32>
    %623 = vector.broadcast %622 : vector<16x1xf32> to vector<16x32xf32>
    %624 = arith.mulf %614, %623 : vector<16x32xf32>
    %625 = vector.broadcast %605 : vector<1x32xf32> to vector<16x32xf32>
    %626 = arith.mulf %624, %625 : vector<16x32xf32>
    %627 = vector.broadcast %607 : vector<1x32xf32> to vector<16x32xf32>
    %628 = arith.addf %626, %627 : vector<16x32xf32>
    %629 = vector.extract_strided_slice %628 {offsets = [0, 0], sizes = [8, 32], strides = [1, 1]} : vector<16x32xf32> to vector<8x32xf32>
    %cst_245 = arith.constant dense<0.000000e+00> : vector<32xf32>
    %630 = vector.multi_reduction <add>, %629, %cst_245 [0] : vector<8x32xf32> to vector<32xf32>
    %631 = vector.shape_cast %630 : vector<32xf32> to vector<1x32xf32>
    %cst_246 = arith.constant 8.000000e+00 : f32
    %632 = vector.broadcast %cst_246 : f32 to vector<1x32xf32>
    %633 = arith.divf %631, %632 : vector<1x32xf32>
    %634 = vector.extract_strided_slice %628 {offsets = [8, 0], sizes = [8, 32], strides = [1, 1]} : vector<16x32xf32> to vector<8x32xf32>
    %cst_247 = arith.constant dense<0.000000e+00> : vector<32xf32>
    %635 = vector.multi_reduction <add>, %634, %cst_247 [0] : vector<8x32xf32> to vector<32xf32>
    %636 = vector.shape_cast %635 : vector<32xf32> to vector<1x32xf32>
    %cst_248 = arith.constant 8.000000e+00 : f32
    %637 = vector.broadcast %cst_248 : f32 to vector<1x32xf32>
    %638 = arith.divf %636, %637 : vector<1x32xf32>
    %639 = tpu.concatenate %633, %638 in 0 : vector<1x32xf32>, vector<1x32xf32> -> vector<2x32xf32>
    %c0_249 = arith.constant 0 : index
    %c0_250 = arith.constant 0 : index
    %640 = vector.load %arg15[%c0_249, %c0_250] : memref<32x128xbf16, #tpu.memory_space<vmem>>, vector<32x128xbf16>
    %641 = arith.truncf %639 : vector<2x32xf32> to vector<2x32xbf16>
    %cst_251 = arith.constant dense<0.000000e+00> : vector<2x128xf32>
    %642 = tpu.matmul %641, %640, %cst_251 {dimension_numbers = #tpu.dot_dimension_numbers<[1], [0], [0], [1], [0, 0, 1, 1], [], []>} : vector<2x32xbf16>, vector<32x128xbf16>, vector<2x128xf32> -> vector<2x128xf32>
    %c0_252 = arith.constant 0 : index
    %c0_253 = arith.constant 0 : index
    %643 = vector.load %arg16[%c0_252, %c0_253] : memref<1x128xf32, #tpu.memory_space<vmem>>, vector<1x128xf32>
    %644 = vector.broadcast %643 : vector<1x128xf32> to vector<2x128xf32>
    %645 = arith.addf %642, %644 : vector<2x128xf32>
    %c0_254 = arith.constant 0 : index
    %c0_255 = arith.constant 0 : index
    %646 = vector.load %arg17[%c0_254, %c0_255] : memref<128x4xbf16, #tpu.memory_space<vmem>>, vector<128x4xbf16>
    %647 = arith.truncf %645 : vector<2x128xf32> to vector<2x128xbf16>
    %cst_256 = arith.constant dense<0.000000e+00> : vector<2x4xf32>
    %648 = tpu.matmul %647, %646, %cst_256 {dimension_numbers = #tpu.dot_dimension_numbers<[1], [0], [0], [1], [0, 0, 1, 1], [], []>} : vector<2x128xbf16>, vector<128x4xbf16>, vector<2x4xf32> -> vector<2x4xf32>
    %c0_257 = arith.constant 0 : index
    %c0_258 = arith.constant 0 : index
    %649 = vector.load %arg18[%c0_257, %c0_258] : memref<1x4xf32, #tpu.memory_space<vmem>>, vector<1x4xf32>
    %650 = vector.broadcast %649 : vector<1x4xf32> to vector<2x4xf32>
    %651 = arith.addf %648, %650 : vector<2x4xf32>
    %652 = vector.extract_strided_slice %651 {offsets = [0, 0], sizes = [2, 2], strides = [1, 1]} : vector<2x4xf32> to vector<2x2xf32>
    %c0_259 = arith.constant 0 : index
    %c0_260 = arith.constant 0 : index
    %653 = vector.load %arg19[%c0_259, %c0_260] : memref<2x2xf32, #tpu.memory_space<vmem>>, vector<2x2xf32>
    tpu.vector_store %arg19[%c0_259, %c0_260], %652 {strides = array<i32>} : memref<2x2xf32, #tpu.memory_space<vmem>>, vector<2x2xf32>,
    %654 = vector.extract_strided_slice %651 {offsets = [0, 2], sizes = [2, 2], strides = [1, 1]} : vector<2x4xf32> to vector<2x2xf32>
    %c0_261 = arith.constant 0 : index
    %c0_262 = arith.constant 0 : index
    %655 = vector.load %arg20[%c0_261, %c0_262] : memref<2x2xf32, #tpu.memory_space<vmem>>, vector<2x2xf32>
    tpu.vector_store %arg20[%c0_261, %c0_262], %654 {strides = array<i32>} : memref<2x2xf32, #tpu.memory_space<vmem>>, vector<2x2xf32>,
    return
  }
}

</mosaic_0001>

<llo_original>
// kernel: tpu_custom_call.1
$region0: #{tpu_custom_call.1}
  #allocation0 [shape = 'u32[]', space=smem, size = 0x4, offset = 0x4, fixed_abs, tag = 'smem constant byte address 0x4 - core index']
  #allocation1 [shape = 'u32[72,128]{1,0:T(1,128)}', space=vmem, size = 0x9000, scoped, tag = 'internal scratch']
  %s0 = inlined_call_operand.hbm [shape: s32[16], index: 0, kind: input, shape index: {}]
  %s1 = inlined_call_operand.vmem [shape: f32[8,32], index: 1, kind: input, shape index: {}]
  %s2 = inlined_call_operand.vmem [shape: f32[32,32], index: 2, kind: input, shape index: {}]
  %s3 = inlined_call_operand.vmem [shape: bf16[2,32,96], index: 3, kind: input, shape index: {}]
  %s4 = inlined_call_operand.vmem [shape: f32[2,1,96], index: 4, kind: input, shape index: {}]
  %s5 = inlined_call_operand.vmem [shape: bf16[2,32,32], index: 5, kind: input, shape index: {}]
  %s6 = inlined_call_operand.vmem [shape: f32[2,1,32], index: 6, kind: input, shape index: {}]
  %s7 = inlined_call_operand.vmem [shape: f32[2,1,32], index: 7, kind: input, shape index: {}]
  %s8 = inlined_call_operand.vmem [shape: f32[2,1,32], index: 8, kind: input, shape index: {}]
  %s9 = inlined_call_operand.vmem [shape: bf16[2,32,64], index: 9, kind: input, shape index: {}]
  %s10 = inlined_call_operand.vmem [shape: f32[2,1,64], index: 10, kind: input, shape index: {}]
  %s11 = inlined_call_operand.vmem [shape: bf16[2,64,32], index: 11, kind: input, shape index: {}]
  %s12 = inlined_call_operand.vmem [shape: f32[2,1,32], index: 12, kind: input, shape index: {}]
  %s13 = inlined_call_operand.vmem [shape: f32[2,1,32], index: 13, kind: input, shape index: {}]
  %s14 = inlined_call_operand.vmem [shape: f32[2,1,32], index: 14, kind: input, shape index: {}]
  %s15 = inlined_call_operand.vmem [shape: bf16[32,128], index: 15, kind: input, shape index: {}]
  %s16 = inlined_call_operand.vmem [shape: f32[1,128], index: 16, kind: input, shape index: {}]
  %s17 = inlined_call_operand.vmem [shape: bf16[128,4], index: 17, kind: input, shape index: {}]
  %s18 = inlined_call_operand.vmem [shape: f32[1,4], index: 18, kind: input, shape index: {}]
  %s19 = inlined_call_operand.hbm [shape: f32[2,2], index: 19, kind: output, shape index: {0}]
  %s20 = inlined_call_operand.hbm [shape: f32[2,2], index: 20, kind: output, shape index: {1}]
  %21 = xla_tuple %s19, %s20
  %s22 = sld [smem:[#allocation0]]
  $region98: #{tpu_custom_call.1} parent=0
    _
  %s24 = ssub.s32 1, %s22
  %s25 = scalar_select 0, %s24, %s22
  $region1: #{tpu_custom_call.1} parent=0
    #allocation2 [shape = 'u8[512]{0}', space=smem, size = 0x200, scoped, tag = 'input window, operand 0, single buffered']
    #allocation3 [shape = 's32[1]{0}', space=sflag, size = 0x4, scoped, tag = 'scoped memory for tpu_custom_call.1']
    #allocation4 [shape = 's32[1]{0}', space=sflag, size = 0x4, scoped, tag = 'scoped memory for tpu_custom_call.1']
    #allocation5 [shape = 'u8[1024]{0}', space=vmem, size = 0x400, scoped, tag = 'output window, operand 0, single buffered']
    #allocation6 [shape = 'u8[1024]{0}', space=vmem, size = 0x400, scoped, tag = 'output window, operand 1, single buffered']
    #allocation7 [shape = 's32[1]{0}', space=sflag, size = 0x4, scoped, tag = 'scoped memory for tpu_custom_call.1']
    %26 = vsyncpa [#allocation4], 0
    %27 = vsyncpa [#allocation3], 0
    %28 = vsyncpa [#allocation7], 0
    // Predicated region
    $region2: #{tpu_custom_call.1} parent=1 // pred_check
      _
    $region3: #{tpu_custom_call.1} parent=1 // pred_check_branch
      %30 = sbr.rel (0) target = $region5
    $region4: #{tpu_custom_call.1} parent=1 // pred_region
      %32 = vsyncadd [#allocation4], 0
      %s34 = sshll.u32 %s0, 4
      %s35 = int_to_ptr.hbm [resolvable:$true] %s34
      %37 = dma.hbm_to_smem %s35, 16, [#allocation2], [#allocation4]
    $region5: #{tpu_custom_call.1} parent=1 // pred_fallthru
      _
    // Predicated region
    $region6: #{tpu_custom_call.1} parent=1 // pred_check
      _
    $region7: #{tpu_custom_call.1} parent=1 // pred_check_branch
      %39 = sbr.rel (0) target = $region9
    $region8: #{tpu_custom_call.1} parent=1 // pred_region
      _
    $region9: #{tpu_custom_call.1} parent=1 // pred_fallthru
      _
    // Predicated region
    $region10: #{tpu_custom_call.1} parent=1 // pred_check
      _
    $region11: #{tpu_custom_call.1} parent=1 // pred_check_branch
      %41 = sbr.rel (0) target = $region13
    $region12: #{tpu_custom_call.1} parent=1 // pred_region
      _
    $region13: #{tpu_custom_call.1} parent=1 // pred_fallthru
      _
    // Predicated region
    $region14: #{tpu_custom_call.1} parent=1 // pred_check
      _
    $region15: #{tpu_custom_call.1} parent=1 // pred_check_branch
      %43 = sbr.rel (0) target = $region17
    $region16: #{tpu_custom_call.1} parent=1 // pred_region
      _
    $region17: #{tpu_custom_call.1} parent=1 // pred_fallthru
      _
    // Predicated region
    $region18: #{tpu_custom_call.1} parent=1 // pred_check
      _
    $region19: #{tpu_custom_call.1} parent=1 // pred_check_branch
      %45 = sbr.rel (0) target = $region21
    $region20: #{tpu_custom_call.1} parent=1 // pred_region
      _
    $region21: #{tpu_custom_call.1} parent=1 // pred_fallthru
      _
    // Predicated region
    $region22: #{tpu_custom_call.1} parent=1 // pred_check
      _
    $region23: #{tpu_custom_call.1} parent=1 // pred_check_branch
      %47 = sbr.rel (0) target = $region25
    $region24: #{tpu_custom_call.1} parent=1 // pred_region
      _
    $region25: #{tpu_custom_call.1} parent=1 // pred_fallthru
      _
    // Predicated region
    $region26: #{tpu_custom_call.1} parent=1 // pred_check
      _
    $region27: #{tpu_custom_call.1} parent=1 // pred_check_branch
      %49 = sbr.rel (0) target = $region29
    $region28: #{tpu_custom_call.1} parent=1 // pred_region
      _
    $region29: #{tpu_custom_call.1} parent=1 // pred_fallthru
      _
    // Predicated region
    $region30: #{tpu_custom_call.1} parent=1 // pred_check
      _
    $region31: #{tpu_custom_call.1} parent=1 // pred_check_branch
      %51 = sbr.rel (0) target = $region33
    $region32: #{tpu_custom_call.1} parent=1 // pred_region
      _
    $region33: #{tpu_custom_call.1} parent=1 // pred_fallthru
      _
    // Predicated region
    $region34: #{tpu_custom_call.1} parent=1 // pred_check
      _
    $region35: #{tpu_custom_call.1} parent=1 // pred_check_branch
      %53 = sbr.rel (0) target = $region37
    $region36: #{tpu_custom_call.1} parent=1 // pred_region
      _
    $region37: #{tpu_custom_call.1} parent=1 // pred_fallthru
      _
    // Predicated region
    $region38: #{tpu_custom_call.1} parent=1 // pred_check
      _
    $region39: #{tpu_custom_call.1} parent=1 // pred_check_branch
      %55 = sbr.rel (0) target = $region41
    $region40: #{tpu_custom_call.1} parent=1 // pred_region
      _
    $region41: #{tpu_custom_call.1} parent=1 // pred_fallthru
      _
    // Predicated region
    $region42: #{tpu_custom_call.1} parent=1 // pred_check
      _
    $region43: #{tpu_custom_call.1} parent=1 // pred_check_branch
      %57 = sbr.rel (0) target = $region45
    $region44: #{tpu_custom_call.1} parent=1 // pred_region
      _
    $region45: #{tpu_custom_call.1} parent=1 // pred_fallthru
      _
    // Predicated region
    $region46: #{tpu_custom_call.1} parent=1 // pred_check
      _
    $region47: #{tpu_custom_call.1} parent=1 // pred_check_branch
      %59 = sbr.rel (0) target = $region49
    $region48: #{tpu_custom_call.1} parent=1 // pred_region
      _
    $region49: #{tpu_custom_call.1} parent=1 // pred_fallthru
      _
    // Predicated region
    $region50: #{tpu_custom_call.1} parent=1 // pred_check
      _
    $region51: #{tpu_custom_call.1} parent=1 // pred_check_branch
      %61 = sbr.rel (0) target = $region53
    $region52: #{tpu_custom_call.1} parent=1 // pred_region
      _
    $region53: #{tpu_custom_call.1} parent=1 // pred_fallthru
      _
    // Predicated region
    $region54: #{tpu_custom_call.1} parent=1 // pred_check
      _
    $region55: #{tpu_custom_call.1} parent=1 // pred_check_branch
      %63 = sbr.rel (0) target = $region57
    $region56: #{tpu_custom_call.1} parent=1 // pred_region
      _
    $region57: #{tpu_custom_call.1} parent=1 // pred_fallthru
      _
    // Predicated region
    $region58: #{tpu_custom_call.1} parent=1 // pred_check
      _
    $region59: #{tpu_custom_call.1} parent=1 // pred_check_branch
      %65 = sbr.rel (0) target = $region61
    $region60: #{tpu_custom_call.1} parent=1 // pred_region
      _
    $region61: #{tpu_custom_call.1} parent=1 // pred_fallthru
      _
    // Predicated region
    $region62: #{tpu_custom_call.1} parent=1 // pred_check
      _
    $region63: #{tpu_custom_call.1} parent=1 // pred_check_branch
      %67 = sbr.rel (0) target = $region65
    $region64: #{tpu_custom_call.1} parent=1 // pred_region
      _
    $region65: #{tpu_custom_call.1} parent=1 // pred_fallthru
      _
    // Predicated region
    $region66: #{tpu_custom_call.1} parent=1 // pred_check
      _
    $region67: #{tpu_custom_call.1} parent=1 // pred_check_branch
      %69 = sbr.rel (0) target = $region69
    $region68: #{tpu_custom_call.1} parent=1 // pred_region
      _
    $region69: #{tpu_custom_call.1} parent=1 // pred_fallthru
      _
    // Predicated region
    $region70: #{tpu_custom_call.1} parent=1 // pred_check
      _
    $region71: #{tpu_custom_call.1} parent=1 // pred_check_branch
      %71 = sbr.rel (0) target = $region73
    $region72: #{tpu_custom_call.1} parent=1 // pred_region
      _
    $region73: #{tpu_custom_call.1} parent=1 // pred_fallthru
      _
    // Predicated region
    $region74: #{tpu_custom_call.1} parent=1 // pred_check
      _
    $region75: #{tpu_custom_call.1} parent=1 // pred_check_branch
      %73 = sbr.rel (0) target = $region77
    $region76: #{tpu_custom_call.1} parent=1 // pred_region
      _
    $region77: #{tpu_custom_call.1} parent=1 // pred_fallthru
      _
    // Predicated region
    $region78: #{tpu_custom_call.1} parent=1 // pred_check
      _
    $region79: #{tpu_custom_call.1} parent=1 // pred_check_branch
      %75 = sbr.rel (0) target = $region81
    $region80: #{tpu_custom_call.1} parent=1 // pred_region
      %77 = dma.done [#allocation4], 16
    $region81: #{tpu_custom_call.1} parent=1 // pred_fallthru
      _
    %78 = sfence
    %s80 = sld [smem:[#allocation2]]
    %s81 = scalar_lea.vmem %s2, %s80
    %v82 = vld [vmem:[%s81] sm:$0x1]
    %v83 = vld [vmem:[%s1] sm:$0x1]
    %v84 = vmul.f32 %v82, 5.656854
    %v85 = vadd.f32 %v84, %v83
    %s86 = sld [smem:[#allocation2 + $0x1]]
    %s87 = scalar_lea.vmem %s2, %s86
    %v88 = vld [vmem:[%s87] sm:$0x1]
    %v89 = vld [vmem:[%s1 + $0x1] sm:$0x1]
    %v90 = vmul.f32 %v88, 5.656854
    %v91 = vadd.f32 %v90, %v89
    %s92 = sld [smem:[#allocation2 + $0x2]]
    %s93 = scalar_lea.vmem %s2, %s92
    %v94 = vld [vmem:[%s93] sm:$0x1]
    %v95 = vld [vmem:[%s1 + $0x2] sm:$0x1]
    %v96 = vmul.f32 %v94, 5.656854
    %v97 = vadd.f32 %v96, %v95
    %s98 = sld [smem:[#allocation2 + $0x3]]
    %s99 = scalar_lea.vmem %s2, %s98
    %v100 = vld [vmem:[%s99] sm:$0x1]
    %v101 = vld [vmem:[%s1 + $0x3] sm:$0x1]
    %v102 = vmul.f32 %v100, 5.656854
    %v103 = vadd.f32 %v102, %v101
    %s104 = sld [smem:[#allocation2 + $0x4]]
    %s105 = scalar_lea.vmem %s2, %s104
    %v106 = vld [vmem:[%s105] sm:$0x1]
    %v107 = vld [vmem:[%s1 + $0x4] sm:$0x1]
    %v108 = vmul.f32 %v106, 5.656854
    %v109 = vadd.f32 %v108, %v107
    %s110 = sld [smem:[#allocation2 + $0x5]]
    %s111 = scalar_lea.vmem %s2, %s110
    %v112 = vld [vmem:[%s111] sm:$0x1]
    %v113 = vld [vmem:[%s1 + $0x5] sm:$0x1]
    %v114 = vmul.f32 %v112, 5.656854
    %v115 = vadd.f32 %v114, %v113
    %s116 = sld [smem:[#allocation2 + $0x6]]
    %s117 = scalar_lea.vmem %s2, %s116
    %v118 = vld [vmem:[%s117] sm:$0x1]
    %v119 = vld [vmem:[%s1 + $0x6] sm:$0x1]
    %v120 = vmul.f32 %v118, 5.656854
    %v121 = vadd.f32 %v120, %v119
    %s122 = sld [smem:[#allocation2 + $0x7]]
    %s123 = scalar_lea.vmem %s2, %s122
    %v124 = vld [vmem:[%s123] sm:$0x1]
    %v125 = vld [vmem:[%s1 + $0x7] sm:$0x1]
    %v126 = vmul.f32 %v124, 5.656854
    %v127 = vadd.f32 %v126, %v125
    %s128 = sld [smem:[#allocation2 + $0x8]]
    %s129 = scalar_lea.vmem %s2, %s128
    %v130 = vld [vmem:[%s129] sm:$0x1]
    %v131 = vmul.f32 %v130, 5.656854
    %v132 = vadd.f32 %v131, %v83
    %s133 = sld [smem:[#allocation2 + $0x9]]
    %s134 = scalar_lea.vmem %s2, %s133
    %v135 = vld [vmem:[%s134] sm:$0x1]
    %v136 = vmul.f32 %v135, 5.656854
    %v137 = vadd.f32 %v136, %v89
    %s138 = sld [smem:[#allocation2 + $0xa]]
    %s139 = scalar_lea.vmem %s2, %s138
    %v140 = vld [vmem:[%s139] sm:$0x1]
    %v141 = vmul.f32 %v140, 5.656854
    %v142 = vadd.f32 %v141, %v95
    %s143 = sld [smem:[#allocation2 + $0xb]]
    %s144 = scalar_lea.vmem %s2, %s143
    %v145 = vld [vmem:[%s144] sm:$0x1]
    %v146 = vmul.f32 %v145, 5.656854
    %v147 = vadd.f32 %v146, %v101
    %s148 = sld [smem:[#allocation2 + $0xc]]
    %s149 = scalar_lea.vmem %s2, %s148
    %v150 = vld [vmem:[%s149] sm:$0x1]
    %v151 = vmul.f32 %v150, 5.656854
    %v152 = vadd.f32 %v151, %v107
    %s153 = sld [smem:[#allocation2 + $0xd]]
    %s154 = scalar_lea.vmem %s2, %s153
    %v155 = vld [vmem:[%s154] sm:$0x1]
    %v156 = vmul.f32 %v155, 5.656854
    %v157 = vadd.f32 %v156, %v113
    %s158 = sld [smem:[#allocation2 + $0xe]]
    %s159 = scalar_lea.vmem %s2, %s158
    %v160 = vld [vmem:[%s159] sm:$0x1]
    %v161 = vmul.f32 %v160, 5.656854
    %v162 = vadd.f32 %v161, %v119
    %s163 = sld [smem:[#allocation2 + $0xf]]
    %s164 = scalar_lea.vmem %s2, %s163
    %v165 = vld [vmem:[%s164] sm:$0x1]
    %v166 = vmul.f32 %v165, 5.656854
    %v167 = vadd.f32 %v166, %v125
    %v169 = vrot.slane %v91, 7
    %v172 = vrot.slane %v97, 6
    %v175 = vrot.slane %v103, 5
    %v178 = vrot.slane %v109, 4
    %v181 = vrot.slane %v115, 3
    %v184 = vrot.slane %v121, 2
    %v187 = vrot.slane %v127, 1
    %v190 = vrot.slane %v137, 7
    %v193 = vrot.slane %v142, 6
    %v196 = vrot.slane %v147, 5
    %v199 = vrot.slane %v152, 4
    %v202 = vrot.slane %v157, 3
    %v205 = vrot.slane %v162, 2
    %v208 = vrot.slane %v167, 1
    %vm210 = vcmask 1040384
    %v211 = vsel %vm210, %v85, %v169
    %vm212 = vcmask 1041408
    %v213 = vsel %vm212, %v211, %v172
    %vm214 = vcmask 1042432
    %v215 = vsel %vm214, %v213, %v175
    %vm216 = vcmask 1043456
    %v217 = vsel %vm216, %v215, %v178
    %vm218 = vcmask 1044480
    %v219 = vsel %vm218, %v217, %v181
    %vm220 = vcmask 1045504
    %v221 = vsel %vm220, %v219, %v184
    %vm222 = vcmask 1046528
    %v223 = vsel %vm222, %v221, %v187
    %v224 = vsel %vm210, %v132, %v190
    %v225 = vsel %vm212, %v224, %v193
    %v226 = vsel %vm214, %v225, %v196
    %v227 = vsel %vm216, %v226, %v199
    %v228 = vsel %vm218, %v227, %v202
    %v229 = vsel %vm220, %v228, %v205
    %v230 = vsel %vm222, %v229, %v208
    %v231 = vld [vmem:[%s3] sm:$0xf]
    %v232 = vld [vmem:[%s3 + $0x4] sm:$0xf]
    %v233 = vld [vmem:[%s3 + $0x8] sm:$0xf]
    %v234 = vld [vmem:[%s3 + $0xc] sm:$0xf]
    %v235 = vpack.c.bf16 %v230, %v223
    %v236 = vld [vmem:[%s4] sm:$0x1]
    %v238 = vperm.slane %v236, 0
    %v244 = vunpack.c.l.b16 %v231
    %v245 = vunpack.c.l.b16 %v232
    %v246 = vunpack.c.l.b16 %v233
    %v247 = vunpack.c.l.b16 %v234
    %v248 = vpack.c.b16 %v245, %v244
    %v249 = vpack.c.b16 %v247, %v246
    %vm252 = vcmask 261120
    %v254 = vsel %vm252, %v235, 0
    %256 = vmatpush.bf16.msra.mxu0 0
    %257 = vmatpush.bf16.msra.mxu0 0
    %258 = vmatpush.bf16.msra.mxu0 0
    %259 = vmatpush.bf16.msra.mxu0 0
    %260 = vmatpush.bf16.msra.mxu0 0
    %261 = vmatpush.bf16.msra.mxu0 0
    %262 = vmatpush.bf16.msra.mxu0 %v249
    %263 = vmatpush.bf16.msra.mxu0 %v248
    %264 = vmatmul.bf16.gmra.mxu0 %v254
    %v265 = vpop.f32.mrf.mxu0
    %v266 = vadd.f32 %v238, %v265
    %v267 = vpop.f32.mrf.mxu0
    %v268 = vadd.f32 %v238, %v267
    %269 = vdwg.mxu0
    %v270 = vpack.c.bf16 %v266, %v266
    %272 = vrot.lane.b32.xlu0 %v270, 96
    %v273 = vpop.permute.xlu0 %272
    %vm274 = vcmask 64512
    %v276 = vsel %vm274, %v270, 0
    %v279 = vsel %vm274, %v273, 0
    %281 = vmatpush.bf16.xpose.msra.mxu0 0
    %282 = vmatpush.bf16.xpose.msra.mxu0 0
    %283 = vmatpush.bf16.xpose.msra.mxu0 0
    %284 = vmatpush.bf16.xpose.msra.mxu0 0
    %285 = vmatpush.bf16.xpose.msra.mxu0 0
    %286 = vmatpush.bf16.xpose.msra.mxu0 0
    %287 = vmatpush.bf16.xpose.msra.mxu0 0
    %288 = vmatpush.bf16.xpose.msra.mxu0 %v279
    %289 = vmatmul.bf16.gmra.mxu0 %v276
    %v290 = vpop.f32.mrf.mxu0
    %v291 = vadd.f32 0.0, %v290
    %v292 = vpop.f32.mrf.mxu0
    %293 = vdwg.mxu0
    %v294 = vmul.f32 %v291, 0.35355338
    %v295 = vsel %vm274, %v294, -inf
    %296 = vmax.xlane.f32.xlu0 %v295
    %v297 = vpop.xlane.xlu0 %296
    %v298 = vsub.f32 %v294, %v297
    %v299 = vmul.f32 %v298, 1.442695
    %v300 = vpow.pop %v299
    %v301 = vsel %vm274, %v300, 0.0
    %302 = vadd.xlane.f32.xlu0 %v301
    %v303 = vpop.xlane.xlu0 %302
    %v304 = vrcp.pop %v303
    %v305 = vmul.f32 %v300, %v304
    %v306 = vpack.c.bf16 %v305, %v305
    %307 = vrot.lane.b32.xlu0 %v270, 64
    %v308 = vpop.permute.xlu0 %307
    %v310 = vsel %vm274, %v306, 0
    %v313 = vsel %vm216, %v308, 0
    %315 = vmatpush.bf16.msra.mxu0 0
    %316 = vmatpush.bf16.msra.mxu0 0
    %317 = vmatpush.bf16.msra.mxu0 0
    %318 = vmatpush.bf16.msra.mxu0 0
    %319 = vmatpush.bf16.msra.mxu0 0
    %320 = vmatpush.bf16.msra.mxu0 0
    %321 = vmatpush.bf16.msra.mxu0 0
    %322 = vmatpush.bf16.msra.mxu0 %v313
    %323 = vmatmul.bf16.gmra.mxu0 %v310
    %v324 = vpop.f32.mrf.mxu0
    %v325 = vadd.f32 0.0, %v324
    %v326 = vpop.f32.mrf.mxu0
    %327 = vdwg.mxu0
    %328 = vrot.lane.b32.xlu0 %v270, 120
    %v329 = vpop.permute.xlu0 %328
    %330 = vrot.lane.b32.xlu0 %v270, 88
    %v331 = vpop.permute.xlu0 %330
    %v333 = vsel %vm274, %v329, 0
    %v336 = vsel %vm274, %v331, 0
    %338 = vmatpush.bf16.xpose.msra.mxu0 0
    %339 = vmatpush.bf16.xpose.msra.mxu0 0
    %340 = vmatpush.bf16.xpose.msra.mxu0 0
    %341 = vmatpush.bf16.xpose.msra.mxu0 0
    %342 = vmatpush.bf16.xpose.msra.mxu0 0
    %343 = vmatpush.bf16.xpose.msra.mxu0 0
    %344 = vmatpush.bf16.xpose.msra.mxu0 0
    %345 = vmatpush.bf16.xpose.msra.mxu0 %v336
    %346 = vmatmul.bf16.gmra.mxu0 %v333
    %v347 = vpop.f32.mrf.mxu0
    %v348 = vadd.f32 0.0, %v347
    %v349 = vpop.f32.mrf.mxu0
    %350 = vdwg.mxu0
    %v351 = vmul.f32 %v348, 0.35355338
    %v352 = vsel %vm274, %v351, -inf
    %353 = vmax.xlane.f32.xlu0 %v352
    %v354 = vpop.xlane.xlu0 %353
    %v355 = vsub.f32 %v351, %v354
    %v356 = vmul.f32 %v355, 1.442695
    %v357 = vpow.pop %v356
    %v358 = vsel %vm274, %v357, 0.0
    %359 = vadd.xlane.f32.xlu0 %v358
    %v360 = vpop.xlane.xlu0 %359
    %v361 = vrcp.pop %v360
    %v362 = vmul.f32 %v357, %v361
    %v363 = vpack.c.bf16 %v362, %v362
    %364 = vrot.lane.b32.xlu0 %v270, 56
    %v365 = vpop.permute.xlu0 %364
    %v367 = vsel %vm274, %v363, 0
    %v370 = vsel %vm216, %v365, 0
    %372 = vmatpush.bf16.msra.mxu0 0
    %373 = vmatpush.bf16.msra.mxu0 0
    %374 = vmatpush.bf16.msra.mxu0 0
    %375 = vmatpush.bf16.msra.mxu0 0
    %376 = vmatpush.bf16.msra.mxu0 0
    %377 = vmatpush.bf16.msra.mxu0 0
    %378 = vmatpush.bf16.msra.mxu0 0
    %379 = vmatpush.bf16.msra.mxu0 %v370
    %380 = vmatmul.bf16.gmra.mxu0 %v367
    %v381 = vpop.f32.mrf.mxu0
    %v382 = vadd.f32 0.0, %v381
    %v383 = vpop.f32.mrf.mxu0
    %384 = vdwg.mxu0
    %385 = vrot.lane.b32.xlu0 %v270, 112
    %v386 = vpop.permute.xlu0 %385
    %387 = vrot.lane.b32.xlu0 %v270, 80
    %v388 = vpop.permute.xlu0 %387
    %v390 = vsel %vm274, %v386, 0
    %v393 = vsel %vm274, %v388, 0
    %395 = vmatpush.bf16.xpose.msra.mxu0 0
    %396 = vmatpush.bf16.xpose.msra.mxu0 0
    %397 = vmatpush.bf16.xpose.msra.mxu0 0
    %398 = vmatpush.bf16.xpose.msra.mxu0 0
    %399 = vmatpush.bf16.xpose.msra.mxu0 0
    %400 = vmatpush.bf16.xpose.msra.mxu0 0
    %401 = vmatpush.bf16.xpose.msra.mxu0 0
    %402 = vmatpush.bf16.xpose.msra.mxu0 %v393
    %403 = vmatmul.bf16.gmra.mxu0 %v390
    %v404 = vpop.f32.mrf.mxu0
    %v405 = vadd.f32 0.0, %v404
    %v406 = vpop.f32.mrf.mxu0
    %407 = vdwg.mxu0
    %v408 = vmul.f32 %v405, 0.35355338
    %v409 = vsel %vm274, %v408, -inf
    %410 = vmax.xlane.f32.xlu0 %v409
    %v411 = vpop.xlane.xlu0 %410
    %v412 = vsub.f32 %v408, %v411
    %v413 = vmul.f32 %v412, 1.442695
    %v414 = vpow.pop %v413
    %v415 = vsel %vm274, %v414, 0.0
    %416 = vadd.xlane.f32.xlu0 %v415
    %v417 = vpop.xlane.xlu0 %416
    %v418 = vrcp.pop %v417
    %v419 = vmul.f32 %v414, %v418
    %v420 = vpack.c.bf16 %v419, %v419
    %421 = vrot.lane.b32.xlu0 %v270, 48
    %v422 = vpop.permute.xlu0 %421
    %v424 = vsel %vm274, %v420, 0
    %v427 = vsel %vm216, %v422, 0
    %429 = vmatpush.bf16.msra.mxu0 0
    %430 = vmatpush.bf16.msra.mxu0 0
    %431 = vmatpush.bf16.msra.mxu0 0
    %432 = vmatpush.bf16.msra.mxu0 0
    %433 = vmatpush.bf16.msra.mxu0 0
    %434 = vmatpush.bf16.msra.mxu0 0
    %435 = vmatpush.bf16.msra.mxu0 0
    %436 = vmatpush.bf16.msra.mxu0 %v427
    %437 = vmatmul.bf16.gmra.mxu0 %v424
    %v438 = vpop.f32.mrf.mxu0
    %v439 = vadd.f32 0.0, %v438
    %v440 = vpop.f32.mrf.mxu0
    %441 = vdwg.mxu0
    %442 = vrot.lane.b32.xlu0 %v270, 104
    %v443 = vpop.permute.xlu0 %442
    %444 = vrot.lane.b32.xlu0 %v270, 72
    %v445 = vpop.permute.xlu0 %444
    %v447 = vsel %vm274, %v443, 0
    %v450 = vsel %vm274, %v445, 0
    %452 = vmatpush.bf16.xpose.msra.mxu0 0
    %453 = vmatpush.bf16.xpose.msra.mxu0 0
    %454 = vmatpush.bf16.xpose.msra.mxu0 0
    %455 = vmatpush.bf16.xpose.msra.mxu0 0
    %456 = vmatpush.bf16.xpose.msra.mxu0 0
    %457 = vmatpush.bf16.xpose.msra.mxu0 0
    %458 = vmatpush.bf16.xpose.msra.mxu0 0
    %459 = vmatpush.bf16.xpose.msra.mxu0 %v450
    %460 = vmatmul.bf16.gmra.mxu0 %v447
    %v461 = vpop.f32.mrf.mxu0
    %v462 = vadd.f32 0.0, %v461
    %v463 = vpop.f32.mrf.mxu0
    %464 = vdwg.mxu0
    %v465 = vmul.f32 %v462, 0.35355338
    %v466 = vsel %vm274, %v465, -inf
    %467 = vmax.xlane.f32.xlu0 %v466
    %v468 = vpop.xlane.xlu0 %467
    %v469 = vsub.f32 %v465, %v468
    %v470 = vmul.f32 %v469, 1.442695
    %v471 = vpow.pop %v470
    %v472 = vsel %vm274, %v471, 0.0
    %473 = vadd.xlane.f32.xlu0 %v472
    %v474 = vpop.xlane.xlu0 %473
    %v475 = vrcp.pop %v474
    %v476 = vmul.f32 %v471, %v475
    %v477 = vpack.c.bf16 %v476, %v476
    %478 = vrot.lane.b32.xlu0 %v270, 40
    %v479 = vpop.permute.xlu0 %478
    %v481 = vsel %vm274, %v477, 0
    %v484 = vsel %vm216, %v479, 0
    %486 = vmatpush.bf16.msra.mxu0 0
    %487 = vmatpush.bf16.msra.mxu0 0
    %488 = vmatpush.bf16.msra.mxu0 0
    %489 = vmatpush.bf16.msra.mxu0 0
    %490 = vmatpush.bf16.msra.mxu0 0
    %491 = vmatpush.bf16.msra.mxu0 0
    %492 = vmatpush.bf16.msra.mxu0 0
    %493 = vmatpush.bf16.msra.mxu0 %v484
    %494 = vmatmul.bf16.gmra.mxu0 %v481
    %v495 = vpop.f32.mrf.mxu0
    %v496 = vadd.f32 0.0, %v495
    %v497 = vpop.f32.mrf.mxu0
    %498 = vdwg.mxu0
    %500 = vrot.lane.b32.xlu0 %v382, 8
    %v501 = vpop.permute.xlu0 %500
    %504 = vrot.lane.b32.xlu0 %v439, 16
    %v505 = vpop.permute.xlu0 %504
    %508 = vrot.lane.b32.xlu0 %v496, 24
    %v509 = vpop.permute.xlu0 %508
    %v511 = vsel %vm274, %v325, %v501
    %vm512 = vcmask 130048
    %v513 = vsel %vm512, %v511, %v505
    %vm514 = vcmask 195584
    %v515 = vsel %vm514, %v513, %v509
    %v516 = vpack.c.bf16 %v268, %v268
    %518 = vrot.lane.b32.xlu0 %v516, 96
    %v519 = vpop.permute.xlu0 %518
    %v521 = vsel %vm274, %v516, 0
    %v524 = vsel %vm274, %v519, 0
    %526 = vmatpush.bf16.xpose.msra.mxu0 0
    %527 = vmatpush.bf16.xpose.msra.mxu0 0
    %528 = vmatpush.bf16.xpose.msra.mxu0 0
    %529 = vmatpush.bf16.xpose.msra.mxu0 0
    %530 = vmatpush.bf16.xpose.msra.mxu0 0
    %531 = vmatpush.bf16.xpose.msra.mxu0 0
    %532 = vmatpush.bf16.xpose.msra.mxu0 0
    %533 = vmatpush.bf16.xpose.msra.mxu0 %v524
    %534 = vmatmul.bf16.gmra.mxu0 %v521
    %v535 = vpop.f32.mrf.mxu0
    %v536 = vadd.f32 0.0, %v535
    %v537 = vpop.f32.mrf.mxu0
    %538 = vdwg.mxu0
    %v539 = vmul.f32 %v536, 0.35355338
    %v540 = vsel %vm274, %v539, -inf
    %541 = vmax.xlane.f32.xlu0 %v540
    %v542 = vpop.xlane.xlu0 %541
    %v543 = vsub.f32 %v539, %v542
    %v544 = vmul.f32 %v543, 1.442695
    %v545 = vpow.pop %v544
    %v546 = vsel %vm274, %v545, 0.0
    %547 = vadd.xlane.f32.xlu0 %v546
    %v548 = vpop.xlane.xlu0 %547
    %v549 = vrcp.pop %v548
    %v550 = vmul.f32 %v545, %v549
    %v551 = vpack.c.bf16 %v550, %v550
    %552 = vrot.lane.b32.xlu0 %v516, 64
    %v553 = vpop.permute.xlu0 %552
    %v555 = vsel %vm274, %v551, 0
    %v558 = vsel %vm216, %v553, 0
    %560 = vmatpush.bf16.msra.mxu0 0
    %561 = vmatpush.bf16.msra.mxu0 0
    %562 = vmatpush.bf16.msra.mxu0 0
    %563 = vmatpush.bf16.msra.mxu0 0
    %564 = vmatpush.bf16.msra.mxu0 0
    %565 = vmatpush.bf16.msra.mxu0 0
    %566 = vmatpush.bf16.msra.mxu0 0
    %567 = vmatpush.bf16.msra.mxu0 %v558
    %568 = vmatmul.bf16.gmra.mxu0 %v555
    %v569 = vpop.f32.mrf.mxu0
    %v570 = vadd.f32 0.0, %v569
    %v571 = vpop.f32.mrf.mxu0
    %572 = vdwg.mxu0
    %573 = vrot.lane.b32.xlu0 %v516, 120
    %v574 = vpop.permute.xlu0 %573
    %575 = vrot.lane.b32.xlu0 %v516, 88
    %v576 = vpop.permute.xlu0 %575
    %v578 = vsel %vm274, %v574, 0
    %v581 = vsel %vm274, %v576, 0
    %583 = vmatpush.bf16.xpose.msra.mxu0 0
    %584 = vmatpush.bf16.xpose.msra.mxu0 0
    %585 = vmatpush.bf16.xpose.msra.mxu0 0
    %586 = vmatpush.bf16.xpose.msra.mxu0 0
    %587 = vmatpush.bf16.xpose.msra.mxu0 0
    %588 = vmatpush.bf16.xpose.msra.mxu0 0
    %589 = vmatpush.bf16.xpose.msra.mxu0 0
    %590 = vmatpush.bf16.xpose.msra.mxu0 %v581
    %591 = vmatmul.bf16.gmra.mxu0 %v578
    %v592 = vpop.f32.mrf.mxu0
    %v593 = vadd.f32 0.0, %v592
    %v594 = vpop.f32.mrf.mxu0
    %595 = vdwg.mxu0
    %v596 = vmul.f32 %v593, 0.35355338
    %v597 = vsel %vm274, %v596, -inf
    %598 = vmax.xlane.f32.xlu0 %v597
    %v599 = vpop.xlane.xlu0 %598
    %v600 = vsub.f32 %v596, %v599
    %v601 = vmul.f32 %v600, 1.442695
    %v602 = vpow.pop %v601
    %v603 = vsel %vm274, %v602, 0.0
    %604 = vadd.xlane.f32.xlu0 %v603
    %v605 = vpop.xlane.xlu0 %604
    %v606 = vrcp.pop %v605
    %v607 = vmul.f32 %v602, %v606
    %v608 = vpack.c.bf16 %v607, %v607
    %609 = vrot.lane.b32.xlu0 %v516, 56
    %v610 = vpop.permute.xlu0 %609
    %v612 = vsel %vm274, %v608, 0
    %v615 = vsel %vm216, %v610, 0
    %617 = vmatpush.bf16.msra.mxu0 0
    %618 = vmatpush.bf16.msra.mxu0 0
    %619 = vmatpush.bf16.msra.mxu0 0
    %620 = vmatpush.bf16.msra.mxu0 0
    %621 = vmatpush.bf16.msra.mxu0 0
    %622 = vmatpush.bf16.msra.mxu0 0
    %623 = vmatpush.bf16.msra.mxu0 0
    %624 = vmatpush.bf16.msra.mxu0 %v615
    %625 = vmatmul.bf16.gmra.mxu0 %v612
    %v626 = vpop.f32.mrf.mxu0
    %v627 = vadd.f32 0.0, %v626
    %v628 = vpop.f32.mrf.mxu0
    %629 = vdwg.mxu0
    %630 = vrot.lane.b32.xlu0 %v516, 112
    %v631 = vpop.permute.xlu0 %630
    %632 = vrot.lane.b32.xlu0 %v516, 80
    %v633 = vpop.permute.xlu0 %632
    %v635 = vsel %vm274, %v631, 0
    %v638 = vsel %vm274, %v633, 0
    %640 = vmatpush.bf16.xpose.msra.mxu0 0
    %641 = vmatpush.bf16.xpose.msra.mxu0 0
    %642 = vmatpush.bf16.xpose.msra.mxu0 0
    %643 = vmatpush.bf16.xpose.msra.mxu0 0
    %644 = vmatpush.bf16.xpose.msra.mxu0 0
    %645 = vmatpush.bf16.xpose.msra.mxu0 0
    %646 = vmatpush.bf16.xpose.msra.mxu0 0
    %647 = vmatpush.bf16.xpose.msra.mxu0 %v638
    %648 = vmatmul.bf16.gmra.mxu0 %v635
    %v649 = vpop.f32.mrf.mxu0
    %v650 = vadd.f32 0.0, %v649
    %v651 = vpop.f32.mrf.mxu0
    %652 = vdwg.mxu0
    %v653 = vmul.f32 %v650, 0.35355338
    %v654 = vsel %vm274, %v653, -inf
    %655 = vmax.xlane.f32.xlu0 %v654
    %v656 = vpop.xlane.xlu0 %655
    %v657 = vsub.f32 %v653, %v656
    %v658 = vmul.f32 %v657, 1.442695
    %v659 = vpow.pop %v658
    %v660 = vsel %vm274, %v659, 0.0
    %661 = vadd.xlane.f32.xlu0 %v660
    %v662 = vpop.xlane.xlu0 %661
    %v663 = vrcp.pop %v662
    %v664 = vmul.f32 %v659, %v663
    %v665 = vpack.c.bf16 %v664, %v664
    %666 = vrot.lane.b32.xlu0 %v516, 48
    %v667 = vpop.permute.xlu0 %666
    %v669 = vsel %vm274, %v665, 0
    %v672 = vsel %vm216, %v667, 0
    %674 = vmatpush.bf16.msra.mxu0 0
    %675 = vmatpush.bf16.msra.mxu0 0
    %676 = vmatpush.bf16.msra.mxu0 0
    %677 = vmatpush.bf16.msra.mxu0 0
    %678 = vmatpush.bf16.msra.mxu0 0
    %679 = vmatpush.bf16.msra.mxu0 0
    %680 = vmatpush.bf16.msra.mxu0 0
    %681 = vmatpush.bf16.msra.mxu0 %v672
    %682 = vmatmul.bf16.gmra.mxu0 %v669
    %v683 = vpop.f32.mrf.mxu0
    %v684 = vadd.f32 0.0, %v683
    %v685 = vpop.f32.mrf.mxu0
    %686 = vdwg.mxu0
    %687 = vrot.lane.b32.xlu0 %v516, 104
    %v688 = vpop.permute.xlu0 %687
    %689 = vrot.lane.b32.xlu0 %v516, 72
    %v690 = vpop.permute.xlu0 %689
    %v692 = vsel %vm274, %v688, 0
    %v695 = vsel %vm274, %v690, 0
    %697 = vmatpush.bf16.xpose.msra.mxu0 0
    %698 = vmatpush.bf16.xpose.msra.mxu0 0
    %699 = vmatpush.bf16.xpose.msra.mxu0 0
    %700 = vmatpush.bf16.xpose.msra.mxu0 0
    %701 = vmatpush.bf16.xpose.msra.mxu0 0
    %702 = vmatpush.bf16.xpose.msra.mxu0 0
    %703 = vmatpush.bf16.xpose.msra.mxu0 0
    %704 = vmatpush.bf16.xpose.msra.mxu0 %v695
    %705 = vmatmul.bf16.gmra.mxu0 %v692
    %v706 = vpop.f32.mrf.mxu0
    %v707 = vadd.f32 0.0, %v706
    %v708 = vpop.f32.mrf.mxu0
    %709 = vdwg.mxu0
    %v710 = vmul.f32 %v707, 0.35355338
    %v711 = vsel %vm274, %v710, -inf
    %712 = vmax.xlane.f32.xlu0 %v711
    %v713 = vpop.xlane.xlu0 %712
    %v714 = vsub.f32 %v710, %v713
    %v715 = vmul.f32 %v714, 1.442695
    %v716 = vpow.pop %v715
    %v717 = vsel %vm274, %v716, 0.0
    %718 = vadd.xlane.f32.xlu0 %v717
    %v719 = vpop.xlane.xlu0 %718
    %v720 = vrcp.pop %v719
    %v721 = vmul.f32 %v716, %v720
    %v722 = vpack.c.bf16 %v721, %v721
    %723 = vrot.lane.b32.xlu0 %v516, 40
    %v724 = vpop.permute.xlu0 %723
    %v726 = vsel %vm274, %v722, 0
    %v729 = vsel %vm216, %v724, 0
    %731 = vmatpush.bf16.msra.mxu0 0
    %732 = vmatpush.bf16.msra.mxu0 0
    %733 = vmatpush.bf16.msra.mxu0 0
    %734 = vmatpush.bf16.msra.mxu0 0
    %735 = vmatpush.bf16.msra.mxu0 0
    %736 = vmatpush.bf16.msra.mxu0 0
    %737 = vmatpush.bf16.msra.mxu0 0
    %738 = vmatpush.bf16.msra.mxu0 %v729
    %739 = vmatmul.bf16.gmra.mxu0 %v726
    %v740 = vpop.f32.mrf.mxu0
    %v741 = vadd.f32 0.0, %v740
    %v742 = vpop.f32.mrf.mxu0
    %743 = vdwg.mxu0
    %745 = vrot.lane.b32.xlu0 %v627, 8
    %v746 = vpop.permute.xlu0 %745
    %749 = vrot.lane.b32.xlu0 %v684, 16
    %v750 = vpop.permute.xlu0 %749
    %753 = vrot.lane.b32.xlu0 %v741, 24
    %v754 = vpop.permute.xlu0 %753
    %v756 = vsel %vm274, %v570, %v746
    %v757 = vsel %vm512, %v756, %v750
    %v758 = vsel %vm514, %v757, %v754
    %v759 = vld [vmem:[%s5] sm:$0xf]
    %v760 = vld [vmem:[%s5 + $0x4] sm:$0xf]
    %v761 = vld [vmem:[%s5 + $0x8] sm:$0xf]
    %v762 = vld [vmem:[%s5 + $0xc] sm:$0xf]
    %v763 = vpack.c.bf16 %v758, %v515
    %v764 = vld [vmem:[%s6] sm:$0x1]
    %v766 = vperm.slane %v764, 0
    %v772 = vunpack.c.l.b16 %v759
    %v773 = vunpack.c.l.b16 %v760
    %v774 = vunpack.c.l.b16 %v761
    %v775 = vunpack.c.l.b16 %v762
    %v776 = vpack.c.b16 %v773, %v772
    %v777 = vpack.c.b16 %v775, %v774
    %v781 = vsel %vm252, %v763, 0
    %783 = vmatpush.bf16.msra.mxu0 0
    %784 = vmatpush.bf16.msra.mxu0 0
    %785 = vmatpush.bf16.msra.mxu0 0
    %786 = vmatpush.bf16.msra.mxu0 0
    %787 = vmatpush.bf16.msra.mxu0 0
    %788 = vmatpush.bf16.msra.mxu0 0
    %789 = vmatpush.bf16.msra.mxu0 %v777
    %790 = vmatpush.bf16.msra.mxu0 %v776
    %791 = vmatmul.bf16.gmra.mxu0 %v781
    %v792 = vpop.f32.mrf.mxu0
    %v793 = vadd.f32 %v766, %v792
    %v794 = vpop.f32.mrf.mxu0
    %v795 = vadd.f32 %v766, %v794
    %796 = vdwg.mxu0
    %v797 = vld [vmem:[%s7] sm:$0x1]
    %v798 = vld [vmem:[%s8] sm:$0x1]
    %v799 = vadd.f32 %v223, %v793
    %v800 = vadd.f32 %v230, %v795
    %v801 = vsel %vm252, %v799, 0.0
    %802 = vadd.xlane.f32.xlu0 %v801
    %v803 = vpop.xlane.xlu0 %802
    %v804 = vsel %vm252, %v800, 0.0
    %805 = vadd.xlane.f32.xlu0 %v804
    %v806 = vpop.xlane.xlu0 %805
    %v807 = vrcp.pop 32.0
    %v808 = vmul.f32 32.0, %v807
    %v809 = vsub.f32 1.0, %v808
    %v810 = vmul.f32 %v807, %v809
    %v811 = vadd.f32 %v807, %v810
    %vm812 = vweird.f32 %v807
    %v813 = vsel %vm812, %v807, %v811
    %v814 = vmul.f32 %v803, %v813
    %v815 = vmul.f32 %v806, %v813
    %v816 = vsub.f32 %v799, %v814
    %v817 = vsub.f32 %v800, %v815
    %v818 = vmul.f32 %v816, %v816
    %v819 = vmul.f32 %v817, %v817
    %v820 = vsel %vm252, %v818, 0.0
    %821 = vadd.xlane.f32.xlu0 %v820
    %v822 = vpop.xlane.xlu0 %821
    %v823 = vsel %vm252, %v819, 0.0
    %824 = vadd.xlane.f32.xlu0 %v823
    %v825 = vpop.xlane.xlu0 %824
    %v826 = vmul.f32 %v822, %v813
    %v827 = vmul.f32 %v825, %v813
    %v828 = vadd.f32 %v826, 1e-05
    %v829 = vadd.f32 %v827, 1e-05
    %v830 = vrsqrt.pop %v828
    %v831 = vmul.f32 %v830, %v828
    %v832 = vmul.f32 %v831, %v830
    %v833 = vmul.f32 0.5, %v832
    %v834 = vsub.f32 1.5, %v833
    %v835 = vmul.f32 %v830, %v834
    %vm836 = vweird.f32 %v828
    %vm837 = vweird.f32 %v830
    %vm838 = vmor %vm836, %vm837
    %v839 = vsel %vm838, %v830, %v835
    %v840 = vrsqrt.pop %v829
    %v841 = vmul.f32 %v840, %v829
    %v842 = vmul.f32 %v841, %v840
    %v843 = vmul.f32 0.5, %v842
    %v844 = vsub.f32 1.5, %v843
    %v845 = vmul.f32 %v840, %v844
    %vm846 = vweird.f32 %v829
    %vm847 = vweird.f32 %v840
    %vm848 = vmor %vm846, %vm847
    %v849 = vsel %vm848, %v840, %v845
    %v850 = vmul.f32 %v816, %v839
    %v851 = vmul.f32 %v817, %v849
    %v853 = vperm.slane %v797, 0
    %v855 = vmul.f32 %v850, %v853
    %v856 = vmul.f32 %v851, %v853
    %v858 = vperm.slane %v798, 0
    %v860 = vadd.f32 %v855, %v858
    %v861 = vadd.f32 %v856, %v858
    %v862 = vld [vmem:[%s9] sm:$0xf]
    %v863 = vld [vmem:[%s9 + $0x4] sm:$0xf]
    %v864 = vld [vmem:[%s9 + $0x8] sm:$0xf]
    %v865 = vld [vmem:[%s9 + $0xc] sm:$0xf]
    %v866 = vpack.c.bf16 %v861, %v860
    %v867 = vld [vmem:[%s10] sm:$0x1]
    %v869 = vperm.slane %v867, 0
    %v875 = vunpack.c.l.b16 %v862
    %v876 = vunpack.c.l.b16 %v863
    %v877 = vunpack.c.l.b16 %v864
    %v878 = vunpack.c.l.b16 %v865
    %v879 = vpack.c.b16 %v876, %v875
    %v880 = vpack.c.b16 %v878, %v877
    %v884 = vsel %vm252, %v866, 0
    %886 = vmatpush.bf16.msra.mxu0 0
    %887 = vmatpush.bf16.msra.mxu0 0
    %888 = vmatpush.bf16.msra.mxu0 0
    %889 = vmatpush.bf16.msra.mxu0 0
    %890 = vmatpush.bf16.msra.mxu0 0
    %891 = vmatpush.bf16.msra.mxu0 0
    %892 = vmatpush.bf16.msra.mxu0 %v880
    %893 = vmatpush.bf16.msra.mxu0 %v879
    %894 = vmatmul.bf16.gmra.mxu0 %v884
    %v895 = vpop.f32.mrf.mxu0
    %v896 = vadd.f32 %v869, %v895
    %v897 = vpop.f32.mrf.mxu0
    %v898 = vadd.f32 %v869, %v897
    %899 = vdwg.mxu0
    %v900 = vmax.f32 %v896, 0.0
    %v901 = vmax.f32 %v898, 0.0
    %v902 = vld [vmem:[%s11] sm:$0xf]
    %v903 = vld [vmem:[%s11 + $0x4] sm:$0xf]
    %v904 = vld [vmem:[%s11 + $0x8] sm:$0xf]
    %v905 = vld [vmem:[%s11 + $0xc] sm:$0xf]
    %v906 = vld [vmem:[%s11 + $0x10] sm:$0xf]
    %v907 = vld [vmem:[%s11 + $0x14] sm:$0xf]
    %v908 = vld [vmem:[%s11 + $0x18] sm:$0xf]
    %v909 = vld [vmem:[%s11 + $0x1c] sm:$0xf]
    %v910 = vpack.c.bf16 %v901, %v900
    %v911 = vld [vmem:[%s12] sm:$0x1]
    %v913 = vperm.slane %v911, 0
    %v923 = vunpack.c.l.b16 %v902
    %v924 = vunpack.c.l.b16 %v903
    %v925 = vunpack.c.l.b16 %v904
    %v926 = vunpack.c.l.b16 %v905
    %v927 = vunpack.c.l.b16 %v906
    %v928 = vunpack.c.l.b16 %v907
    %v929 = vunpack.c.l.b16 %v908
    %v930 = vunpack.c.l.b16 %v909
    %v931 = vpack.c.b16 %v924, %v923
    %v932 = vpack.c.b16 %v926, %v925
    %v933 = vpack.c.b16 %v928, %v927
    %v934 = vpack.c.b16 %v930, %v929
    %vm939 = vcmask 523264
    %v941 = vsel %vm939, %v910, 0
    %943 = vmatpush.bf16.msra.mxu0 0
    %944 = vmatpush.bf16.msra.mxu0 0
    %945 = vmatpush.bf16.msra.mxu0 0
    %946 = vmatpush.bf16.msra.mxu0 0
    %947 = vmatpush.bf16.msra.mxu0 %v934
    %948 = vmatpush.bf16.msra.mxu0 %v933
    %949 = vmatpush.bf16.msra.mxu0 %v932
    %950 = vmatpush.bf16.msra.mxu0 %v931
    %951 = vmatmul.bf16.gmra.mxu0 %v941
    %v952 = vpop.f32.mrf.mxu0
    %v953 = vadd.f32 %v913, %v952
    %v954 = vpop.f32.mrf.mxu0
    %v955 = vadd.f32 %v913, %v954
    %956 = vdwg.mxu0
    %v957 = vld [vmem:[%s13] sm:$0x1]
    %v958 = vld [vmem:[%s14] sm:$0x1]
    %v959 = vadd.f32 %v860, %v953
    %v960 = vadd.f32 %v861, %v955
    %v961 = vsel %vm252, %v959, 0.0
    %962 = vadd.xlane.f32.xlu0 %v961
    %v963 = vpop.xlane.xlu0 %962
    %v964 = vsel %vm252, %v960, 0.0
    %965 = vadd.xlane.f32.xlu0 %v964
    %v966 = vpop.xlane.xlu0 %965
    %v967 = vmul.f32 %v963, %v813
    %v968 = vmul.f32 %v966, %v813
    %v969 = vsub.f32 %v959, %v967
    %v970 = vsub.f32 %v960, %v968
    %v971 = vmul.f32 %v969, %v969
    %v972 = vmul.f32 %v970, %v970
    %v973 = vsel %vm252, %v971, 0.0
    %974 = vadd.xlane.f32.xlu0 %v973
    %v975 = vpop.xlane.xlu0 %974
    %v976 = vsel %vm252, %v972, 0.0
    %977 = vadd.xlane.f32.xlu0 %v976
    %v978 = vpop.xlane.xlu0 %977
    %v979 = vmul.f32 %v975, %v813
    %v980 = vmul.f32 %v978, %v813
    %v981 = vadd.f32 %v979, 1e-05
    %v982 = vadd.f32 %v980, 1e-05
    %v983 = vrsqrt.pop %v981
    %v984 = vmul.f32 %v983, %v981
    %v985 = vmul.f32 %v984, %v983
    %v986 = vmul.f32 0.5, %v985
    %v987 = vsub.f32 1.5, %v986
    %v988 = vmul.f32 %v983, %v987
    %vm989 = vweird.f32 %v981
    %vm990 = vweird.f32 %v983
    %vm991 = vmor %vm989, %vm990
    %v992 = vsel %vm991, %v983, %v988
    %v993 = vrsqrt.pop %v982
    %v994 = vmul.f32 %v993, %v982
    %v995 = vmul.f32 %v994, %v993
    %v996 = vmul.f32 0.5, %v995
    %v997 = vsub.f32 1.5, %v996
    %v998 = vmul.f32 %v993, %v997
    %vm999 = vweird.f32 %v982
    %vm1000 = vweird.f32 %v993
    %vm1001 = vmor %vm999, %vm1000
    %v1002 = vsel %vm1001, %v993, %v998
    %v1003 = vmul.f32 %v969, %v992
    %v1004 = vmul.f32 %v970, %v1002
    %v1006 = vperm.slane %v957, 0
    %v1008 = vmul.f32 %v1003, %v1006
    %v1009 = vmul.f32 %v1004, %v1006
    %v1011 = vperm.slane %v958, 0
    %v1013 = vadd.f32 %v1008, %v1011
    %v1014 = vadd.f32 %v1009, %v1011
    %s1015 = scalar_lea.vmem %s3, 16
    %v1016 = vld [vmem:[%s1015] sm:$0xf]
    %v1017 = vld [vmem:[%s1015 + $0x4] sm:$0xf]
    %v1018 = vld [vmem:[%s1015 + $0x8] sm:$0xf]
    %v1019 = vld [vmem:[%s1015 + $0xc] sm:$0xf]
    %v1020 = vpack.c.bf16 %v1014, %v1013
    %s1021 = scalar_lea.vmem %s4, 1
    %v1022 = vld [vmem:[%s1021] sm:$0x1]
    %v1024 = vperm.slane %v1022, 0
    %v1030 = vunpack.c.l.b16 %v1016
    %v1031 = vunpack.c.l.b16 %v1017
    %v1032 = vunpack.c.l.b16 %v1018
    %v1033 = vunpack.c.l.b16 %v1019
    %v1034 = vpack.c.b16 %v1031, %v1030
    %v1035 = vpack.c.b16 %v1033, %v1032
    %v1039 = vsel %vm252, %v1020, 0
    %1041 = vmatpush.bf16.msra.mxu0 0
    %1042 = vmatpush.bf16.msra.mxu0 0
    %1043 = vmatpush.bf16.msra.mxu0 0
    %1044 = vmatpush.bf16.msra.mxu0 0
    %1045 = vmatpush.bf16.msra.mxu0 0
    %1046 = vmatpush.bf16.msra.mxu0 0
    %1047 = vmatpush.bf16.msra.mxu0 %v1035
    %1048 = vmatpush.bf16.msra.mxu0 %v1034
    %1049 = vmatmul.bf16.gmra.mxu0 %v1039
    %v1050 = vpop.f32.mrf.mxu0
    %v1051 = vadd.f32 %v1024, %v1050
    %v1052 = vpop.f32.mrf.mxu0
    %v1053 = vadd.f32 %v1024, %v1052
    %1054 = vdwg.mxu0
    %v1055 = vpack.c.bf16 %v1051, %v1051
    %1057 = vrot.lane.b32.xlu0 %v1055, 96
    %v1058 = vpop.permute.xlu0 %1057
    %v1060 = vsel %vm274, %v1055, 0
    %v1063 = vsel %vm274, %v1058, 0
    %1065 = vmatpush.bf16.xpose.msra.mxu0 0
    %1066 = vmatpush.bf16.xpose.msra.mxu0 0
    %1067 = vmatpush.bf16.xpose.msra.mxu0 0
    %1068 = vmatpush.bf16.xpose.msra.mxu0 0
    %1069 = vmatpush.bf16.xpose.msra.mxu0 0
    %1070 = vmatpush.bf16.xpose.msra.mxu0 0
    %1071 = vmatpush.bf16.xpose.msra.mxu0 0
    %1072 = vmatpush.bf16.xpose.msra.mxu0 %v1063
    %1073 = vmatmul.bf16.gmra.mxu0 %v1060
    %v1074 = vpop.f32.mrf.mxu0
    %v1075 = vadd.f32 0.0, %v1074
    %v1076 = vpop.f32.mrf.mxu0
    %1077 = vdwg.mxu0
    %v1078 = vmul.f32 %v1075, 0.35355338
    %v1079 = vsel %vm274, %v1078, -inf
    %1080 = vmax.xlane.f32.xlu0 %v1079
    %v1081 = vpop.xlane.xlu0 %1080
    %v1082 = vsub.f32 %v1078, %v1081
    %v1083 = vmul.f32 %v1082, 1.442695
    %v1084 = vpow.pop %v1083
    %v1085 = vsel %vm274, %v1084, 0.0
    %1086 = vadd.xlane.f32.xlu0 %v1085
    %v1087 = vpop.xlane.xlu0 %1086
    %v1088 = vrcp.pop %v1087
    %v1089 = vmul.f32 %v1084, %v1088
    %v1090 = vpack.c.bf16 %v1089, %v1089
    %1091 = vrot.lane.b32.xlu0 %v1055, 64
    %v1092 = vpop.permute.xlu0 %1091
    %v1094 = vsel %vm274, %v1090, 0
    %v1097 = vsel %vm216, %v1092, 0
    %1099 = vmatpush.bf16.msra.mxu0 0
    %1100 = vmatpush.bf16.msra.mxu0 0
    %1101 = vmatpush.bf16.msra.mxu0 0
    %1102 = vmatpush.bf16.msra.mxu0 0
    %1103 = vmatpush.bf16.msra.mxu0 0
    %1104 = vmatpush.bf16.msra.mxu0 0
    %1105 = vmatpush.bf16.msra.mxu0 0
    %1106 = vmatpush.bf16.msra.mxu0 %v1097
    %1107 = vmatmul.bf16.gmra.mxu0 %v1094
    %v1108 = vpop.f32.mrf.mxu0
    %v1109 = vadd.f32 0.0, %v1108
    %v1110 = vpop.f32.mrf.mxu0
    %1111 = vdwg.mxu0
    %1112 = vrot.lane.b32.xlu0 %v1055, 120
    %v1113 = vpop.permute.xlu0 %1112
    %1114 = vrot.lane.b32.xlu0 %v1055, 88
    %v1115 = vpop.permute.xlu0 %1114
    %v1117 = vsel %vm274, %v1113, 0
    %v1120 = vsel %vm274, %v1115, 0
    %1122 = vmatpush.bf16.xpose.msra.mxu0 0
    %1123 = vmatpush.bf16.xpose.msra.mxu0 0
    %1124 = vmatpush.bf16.xpose.msra.mxu0 0
    %1125 = vmatpush.bf16.xpose.msra.mxu0 0
    %1126 = vmatpush.bf16.xpose.msra.mxu0 0
    %1127 = vmatpush.bf16.xpose.msra.mxu0 0
    %1128 = vmatpush.bf16.xpose.msra.mxu0 0
    %1129 = vmatpush.bf16.xpose.msra.mxu0 %v1120
    %1130 = vmatmul.bf16.gmra.mxu0 %v1117
    %v1131 = vpop.f32.mrf.mxu0
    %v1132 = vadd.f32 0.0, %v1131
    %v1133 = vpop.f32.mrf.mxu0
    %1134 = vdwg.mxu0
    %v1135 = vmul.f32 %v1132, 0.35355338
    %v1136 = vsel %vm274, %v1135, -inf
    %1137 = vmax.xlane.f32.xlu0 %v1136
    %v1138 = vpop.xlane.xlu0 %1137
    %v1139 = vsub.f32 %v1135, %v1138
    %v1140 = vmul.f32 %v1139, 1.442695
    %v1141 = vpow.pop %v1140
    %v1142 = vsel %vm274, %v1141, 0.0
    %1143 = vadd.xlane.f32.xlu0 %v1142
    %v1144 = vpop.xlane.xlu0 %1143
    %v1145 = vrcp.pop %v1144
    %v1146 = vmul.f32 %v1141, %v1145
    %v1147 = vpack.c.bf16 %v1146, %v1146
    %1148 = vrot.lane.b32.xlu0 %v1055, 56
    %v1149 = vpop.permute.xlu0 %1148
    %v1151 = vsel %vm274, %v1147, 0
    %v1154 = vsel %vm216, %v1149, 0
    %1156 = vmatpush.bf16.msra.mxu0 0
    %1157 = vmatpush.bf16.msra.mxu0 0
    %1158 = vmatpush.bf16.msra.mxu0 0
    %1159 = vmatpush.bf16.msra.mxu0 0
    %1160 = vmatpush.bf16.msra.mxu0 0
    %1161 = vmatpush.bf16.msra.mxu0 0
    %1162 = vmatpush.bf16.msra.mxu0 0
    %1163 = vmatpush.bf16.msra.mxu0 %v1154
    %1164 = vmatmul.bf16.gmra.mxu0 %v1151
    %v1165 = vpop.f32.mrf.mxu0
    %v1166 = vadd.f32 0.0, %v1165
    %v1167 = vpop.f32.mrf.mxu0
    %1168 = vdwg.mxu0
    %1169 = vrot.lane.b32.xlu0 %v1055, 112
    %v1170 = vpop.permute.xlu0 %1169
    %1171 = vrot.lane.b32.xlu0 %v1055, 80
    %v1172 = vpop.permute.xlu0 %1171
    %v1174 = vsel %vm274, %v1170, 0
    %v1177 = vsel %vm274, %v1172, 0
    %1179 = vmatpush.bf16.xpose.msra.mxu0 0
    %1180 = vmatpush.bf16.xpose.msra.mxu0 0
    %1181 = vmatpush.bf16.xpose.msra.mxu0 0
    %1182 = vmatpush.bf16.xpose.msra.mxu0 0
    %1183 = vmatpush.bf16.xpose.msra.mxu0 0
    %1184 = vmatpush.bf16.xpose.msra.mxu0 0
    %1185 = vmatpush.bf16.xpose.msra.mxu0 0
    %1186 = vmatpush.bf16.xpose.msra.mxu0 %v1177
    %1187 = vmatmul.bf16.gmra.mxu0 %v1174
    %v1188 = vpop.f32.mrf.mxu0
    %v1189 = vadd.f32 0.0, %v1188
    %v1190 = vpop.f32.mrf.mxu0
    %1191 = vdwg.mxu0
    %v1192 = vmul.f32 %v1189, 0.35355338
    %v1193 = vsel %vm274, %v1192, -inf
    %1194 = vmax.xlane.f32.xlu0 %v1193
    %v1195 = vpop.xlane.xlu0 %1194
    %v1196 = vsub.f32 %v1192, %v1195
    %v1197 = vmul.f32 %v1196, 1.442695
    %v1198 = vpow.pop %v1197
    %v1199 = vsel %vm274, %v1198, 0.0
    %1200 = vadd.xlane.f32.xlu0 %v1199
    %v1201 = vpop.xlane.xlu0 %1200
    %v1202 = vrcp.pop %v1201
    %v1203 = vmul.f32 %v1198, %v1202
    %v1204 = vpack.c.bf16 %v1203, %v1203
    %1205 = vrot.lane.b32.xlu0 %v1055, 48
    %v1206 = vpop.permute.xlu0 %1205
    %v1208 = vsel %vm274, %v1204, 0
    %v1211 = vsel %vm216, %v1206, 0
    %1213 = vmatpush.bf16.msra.mxu0 0
    %1214 = vmatpush.bf16.msra.mxu0 0
    %1215 = vmatpush.bf16.msra.mxu0 0
    %1216 = vmatpush.bf16.msra.mxu0 0
    %1217 = vmatpush.bf16.msra.mxu0 0
    %1218 = vmatpush.bf16.msra.mxu0 0
    %1219 = vmatpush.bf16.msra.mxu0 0
    %1220 = vmatpush.bf16.msra.mxu0 %v1211
    %1221 = vmatmul.bf16.gmra.mxu0 %v1208
    %v1222 = vpop.f32.mrf.mxu0
    %v1223 = vadd.f32 0.0, %v1222
    %v1224 = vpop.f32.mrf.mxu0
    %1225 = vdwg.mxu0
    %1226 = vrot.lane.b32.xlu0 %v1055, 104
    %v1227 = vpop.permute.xlu0 %1226
    %1228 = vrot.lane.b32.xlu0 %v1055, 72
    %v1229 = vpop.permute.xlu0 %1228
    %v1231 = vsel %vm274, %v1227, 0
    %v1234 = vsel %vm274, %v1229, 0
    %1236 = vmatpush.bf16.xpose.msra.mxu0 0
    %1237 = vmatpush.bf16.xpose.msra.mxu0 0
    %1238 = vmatpush.bf16.xpose.msra.mxu0 0
    %1239 = vmatpush.bf16.xpose.msra.mxu0 0
    %1240 = vmatpush.bf16.xpose.msra.mxu0 0
    %1241 = vmatpush.bf16.xpose.msra.mxu0 0
    %1242 = vmatpush.bf16.xpose.msra.mxu0 0
    %1243 = vmatpush.bf16.xpose.msra.mxu0 %v1234
    %1244 = vmatmul.bf16.gmra.mxu0 %v1231
    %v1245 = vpop.f32.mrf.mxu0
    %v1246 = vadd.f32 0.0, %v1245
    %v1247 = vpop.f32.mrf.mxu0
    %1248 = vdwg.mxu0
    %v1249 = vmul.f32 %v1246, 0.35355338
    %v1250 = vsel %vm274, %v1249, -inf
    %1251 = vmax.xlane.f32.xlu0 %v1250
    %v1252 = vpop.xlane.xlu0 %1251
    %v1253 = vsub.f32 %v1249, %v1252
    %v1254 = vmul.f32 %v1253, 1.442695
    %v1255 = vpow.pop %v1254
    %v1256 = vsel %vm274, %v1255, 0.0
    %1257 = vadd.xlane.f32.xlu0 %v1256
    %v1258 = vpop.xlane.xlu0 %1257
    %v1259 = vrcp.pop %v1258
    %v1260 = vmul.f32 %v1255, %v1259
    %v1261 = vpack.c.bf16 %v1260, %v1260
    %1262 = vrot.lane.b32.xlu0 %v1055, 40
    %v1263 = vpop.permute.xlu0 %1262
    %v1265 = vsel %vm274, %v1261, 0
    %v1268 = vsel %vm216, %v1263, 0
    %1270 = vmatpush.bf16.msra.mxu0 0
    %1271 = vmatpush.bf16.msra.mxu0 0
    %1272 = vmatpush.bf16.msra.mxu0 0
    %1273 = vmatpush.bf16.msra.mxu0 0
    %1274 = vmatpush.bf16.msra.mxu0 0
    %1275 = vmatpush.bf16.msra.mxu0 0
    %1276 = vmatpush.bf16.msra.mxu0 0
    %1277 = vmatpush.bf16.msra.mxu0 %v1268
    %1278 = vmatmul.bf16.gmra.mxu0 %v1265
    %v1279 = vpop.f32.mrf.mxu0
    %v1280 = vadd.f32 0.0, %v1279
    %v1281 = vpop.f32.mrf.mxu0
    %1282 = vdwg.mxu0
    %1284 = vrot.lane.b32.xlu0 %v1166, 8
    %v1285 = vpop.permute.xlu0 %1284
    %1288 = vrot.lane.b32.xlu0 %v1223, 16
    %v1289 = vpop.permute.xlu0 %1288
    %1292 = vrot.lane.b32.xlu0 %v1280, 24
    %v1293 = vpop.permute.xlu0 %1292
    %v1295 = vsel %vm274, %v1109, %v1285
    %v1296 = vsel %vm512, %v1295, %v1289
    %v1297 = vsel %vm514, %v1296, %v1293
    %v1298 = vpack.c.bf16 %v1053, %v1053
    %1300 = vrot.lane.b32.xlu0 %v1298, 96
    %v1301 = vpop.permute.xlu0 %1300
    %v1303 = vsel %vm274, %v1298, 0
    %v1306 = vsel %vm274, %v1301, 0
    %1308 = vmatpush.bf16.xpose.msra.mxu0 0
    %1309 = vmatpush.bf16.xpose.msra.mxu0 0
    %1310 = vmatpush.bf16.xpose.msra.mxu0 0
    %1311 = vmatpush.bf16.xpose.msra.mxu0 0
    %1312 = vmatpush.bf16.xpose.msra.mxu0 0
    %1313 = vmatpush.bf16.xpose.msra.mxu0 0
    %1314 = vmatpush.bf16.xpose.msra.mxu0 0
    %1315 = vmatpush.bf16.xpose.msra.mxu0 %v1306
    %1316 = vmatmul.bf16.gmra.mxu0 %v1303
    %v1317 = vpop.f32.mrf.mxu0
    %v1318 = vadd.f32 0.0, %v1317
    %v1319 = vpop.f32.mrf.mxu0
    %1320 = vdwg.mxu0
    %v1321 = vmul.f32 %v1318, 0.35355338
    %v1322 = vsel %vm274, %v1321, -inf
    %1323 = vmax.xlane.f32.xlu0 %v1322
    %v1324 = vpop.xlane.xlu0 %1323
    %v1325 = vsub.f32 %v1321, %v1324
    %v1326 = vmul.f32 %v1325, 1.442695
    %v1327 = vpow.pop %v1326
    %v1328 = vsel %vm274, %v1327, 0.0
    %1329 = vadd.xlane.f32.xlu0 %v1328
    %v1330 = vpop.xlane.xlu0 %1329
    %v1331 = vrcp.pop %v1330
    %v1332 = vmul.f32 %v1327, %v1331
    %v1333 = vpack.c.bf16 %v1332, %v1332
    %1334 = vrot.lane.b32.xlu0 %v1298, 64
    %v1335 = vpop.permute.xlu0 %1334
    %v1337 = vsel %vm274, %v1333, 0
    %v1340 = vsel %vm216, %v1335, 0
    %1342 = vmatpush.bf16.msra.mxu0 0
    %1343 = vmatpush.bf16.msra.mxu0 0
    %1344 = vmatpush.bf16.msra.mxu0 0
    %1345 = vmatpush.bf16.msra.mxu0 0
    %1346 = vmatpush.bf16.msra.mxu0 0
    %1347 = vmatpush.bf16.msra.mxu0 0
    %1348 = vmatpush.bf16.msra.mxu0 0
    %1349 = vmatpush.bf16.msra.mxu0 %v1340
    %1350 = vmatmul.bf16.gmra.mxu0 %v1337
    %v1351 = vpop.f32.mrf.mxu0
    %v1352 = vadd.f32 0.0, %v1351
    %v1353 = vpop.f32.mrf.mxu0
    %1354 = vdwg.mxu0
    %1355 = vrot.lane.b32.xlu0 %v1298, 120
    %v1356 = vpop.permute.xlu0 %1355
    %1357 = vrot.lane.b32.xlu0 %v1298, 88
    %v1358 = vpop.permute.xlu0 %1357
    %v1360 = vsel %vm274, %v1356, 0
    %v1363 = vsel %vm274, %v1358, 0
    %1365 = vmatpush.bf16.xpose.msra.mxu0 0
    %1366 = vmatpush.bf16.xpose.msra.mxu0 0
    %1367 = vmatpush.bf16.xpose.msra.mxu0 0
    %1368 = vmatpush.bf16.xpose.msra.mxu0 0
    %1369 = vmatpush.bf16.xpose.msra.mxu0 0
    %1370 = vmatpush.bf16.xpose.msra.mxu0 0
    %1371 = vmatpush.bf16.xpose.msra.mxu0 0
    %1372 = vmatpush.bf16.xpose.msra.mxu0 %v1363
    %1373 = vmatmul.bf16.gmra.mxu0 %v1360
    %v1374 = vpop.f32.mrf.mxu0
    %v1375 = vadd.f32 0.0, %v1374
    %v1376 = vpop.f32.mrf.mxu0
    %1377 = vdwg.mxu0
    %v1378 = vmul.f32 %v1375, 0.35355338
    %v1379 = vsel %vm274, %v1378, -inf
    %1380 = vmax.xlane.f32.xlu0 %v1379
    %v1381 = vpop.xlane.xlu0 %1380
    %v1382 = vsub.f32 %v1378, %v1381
    %v1383 = vmul.f32 %v1382, 1.442695
    %v1384 = vpow.pop %v1383
    %v1385 = vsel %vm274, %v1384, 0.0
    %1386 = vadd.xlane.f32.xlu0 %v1385
    %v1387 = vpop.xlane.xlu0 %1386
    %v1388 = vrcp.pop %v1387
    %v1389 = vmul.f32 %v1384, %v1388
    %v1390 = vpack.c.bf16 %v1389, %v1389
    %1391 = vrot.lane.b32.xlu0 %v1298, 56
    %v1392 = vpop.permute.xlu0 %1391
    %v1394 = vsel %vm274, %v1390, 0
    %v1397 = vsel %vm216, %v1392, 0
    %1399 = vmatpush.bf16.msra.mxu0 0
    %1400 = vmatpush.bf16.msra.mxu0 0
    %1401 = vmatpush.bf16.msra.mxu0 0
    %1402 = vmatpush.bf16.msra.mxu0 0
    %1403 = vmatpush.bf16.msra.mxu0 0
    %1404 = vmatpush.bf16.msra.mxu0 0
    %1405 = vmatpush.bf16.msra.mxu0 0
    %1406 = vmatpush.bf16.msra.mxu0 %v1397
    %1407 = vmatmul.bf16.gmra.mxu0 %v1394
    %v1408 = vpop.f32.mrf.mxu0
    %v1409 = vadd.f32 0.0, %v1408
    %v1410 = vpop.f32.mrf.mxu0
    %1411 = vdwg.mxu0
    %1412 = vrot.lane.b32.xlu0 %v1298, 112
    %v1413 = vpop.permute.xlu0 %1412
    %1414 = vrot.lane.b32.xlu0 %v1298, 80
    %v1415 = vpop.permute.xlu0 %1414
    %v1417 = vsel %vm274, %v1413, 0
    %v1420 = vsel %vm274, %v1415, 0
    %1422 = vmatpush.bf16.xpose.msra.mxu0 0
    %1423 = vmatpush.bf16.xpose.msra.mxu0 0
    %1424 = vmatpush.bf16.xpose.msra.mxu0 0
    %1425 = vmatpush.bf16.xpose.msra.mxu0 0
    %1426 = vmatpush.bf16.xpose.msra.mxu0 0
    %1427 = vmatpush.bf16.xpose.msra.mxu0 0
    %1428 = vmatpush.bf16.xpose.msra.mxu0 0
    %1429 = vmatpush.bf16.xpose.msra.mxu0 %v1420
    %1430 = vmatmul.bf16.gmra.mxu0 %v1417
    %v1431 = vpop.f32.mrf.mxu0
    %v1432 = vadd.f32 0.0, %v1431
    %v1433 = vpop.f32.mrf.mxu0
    %1434 = vdwg.mxu0
    %v1435 = vmul.f32 %v1432, 0.35355338
    %v1436 = vsel %vm274, %v1435, -inf
    %1437 = vmax.xlane.f32.xlu0 %v1436
    %v1438 = vpop.xlane.xlu0 %1437
    %v1439 = vsub.f32 %v1435, %v1438
    %v1440 = vmul.f32 %v1439, 1.442695
    %v1441 = vpow.pop %v1440
    %v1442 = vsel %vm274, %v1441, 0.0
    %1443 = vadd.xlane.f32.xlu0 %v1442
    %v1444 = vpop.xlane.xlu0 %1443
    %v1445 = vrcp.pop %v1444
    %v1446 = vmul.f32 %v1441, %v1445
    %v1447 = vpack.c.bf16 %v1446, %v1446
    %1448 = vrot.lane.b32.xlu0 %v1298, 48
    %v1449 = vpop.permute.xlu0 %1448
    %v1451 = vsel %vm274, %v1447, 0
    %v1454 = vsel %vm216, %v1449, 0
    %1456 = vmatpush.bf16.msra.mxu0 0
    %1457 = vmatpush.bf16.msra.mxu0 0
    %1458 = vmatpush.bf16.msra.mxu0 0
    %1459 = vmatpush.bf16.msra.mxu0 0
    %1460 = vmatpush.bf16.msra.mxu0 0
    %1461 = vmatpush.bf16.msra.mxu0 0
    %1462 = vmatpush.bf16.msra.mxu0 0
    %1463 = vmatpush.bf16.msra.mxu0 %v1454
    %1464 = vmatmul.bf16.gmra.mxu0 %v1451
    %v1465 = vpop.f32.mrf.mxu0
    %v1466 = vadd.f32 0.0, %v1465
    %v1467 = vpop.f32.mrf.mxu0
    %1468 = vdwg.mxu0
    %1469 = vrot.lane.b32.xlu0 %v1298, 104
    %v1470 = vpop.permute.xlu0 %1469
    %1471 = vrot.lane.b32.xlu0 %v1298, 72
    %v1472 = vpop.permute.xlu0 %1471
    %v1474 = vsel %vm274, %v1470, 0
    %v1477 = vsel %vm274, %v1472, 0
    %1479 = vmatpush.bf16.xpose.msra.mxu0 0
    %1480 = vmatpush.bf16.xpose.msra.mxu0 0
    %1481 = vmatpush.bf16.xpose.msra.mxu0 0
    %1482 = vmatpush.bf16.xpose.msra.mxu0 0
    %1483 = vmatpush.bf16.xpose.msra.mxu0 0
    %1484 = vmatpush.bf16.xpose.msra.mxu0 0
    %1485 = vmatpush.bf16.xpose.msra.mxu0 0
    %1486 = vmatpush.bf16.xpose.msra.mxu0 %v1477
    %1487 = vmatmul.bf16.gmra.mxu0 %v1474
    %v1488 = vpop.f32.mrf.mxu0
    %v1489 = vadd.f32 0.0, %v1488
    %v1490 = vpop.f32.mrf.mxu0
    %1491 = vdwg.mxu0
    %v1492 = vmul.f32 %v1489, 0.35355338
    %v1493 = vsel %vm274, %v1492, -inf
    %1494 = vmax.xlane.f32.xlu0 %v1493
    %v1495 = vpop.xlane.xlu0 %1494
    %v1496 = vsub.f32 %v1492, %v1495
    %v1497 = vmul.f32 %v1496, 1.442695
    %v1498 = vpow.pop %v1497
    %v1499 = vsel %vm274, %v1498, 0.0
    %1500 = vadd.xlane.f32.xlu0 %v1499
    %v1501 = vpop.xlane.xlu0 %1500
    %v1502 = vrcp.pop %v1501
    %v1503 = vmul.f32 %v1498, %v1502
    %v1504 = vpack.c.bf16 %v1503, %v1503
    %1505 = vrot.lane.b32.xlu0 %v1298, 40
    %v1506 = vpop.permute.xlu0 %1505
    %v1508 = vsel %vm274, %v1504, 0
    %v1511 = vsel %vm216, %v1506, 0
    %1513 = vmatpush.bf16.msra.mxu0 0
    %1514 = vmatpush.bf16.msra.mxu0 0
    %1515 = vmatpush.bf16.msra.mxu0 0
    %1516 = vmatpush.bf16.msra.mxu0 0
    %1517 = vmatpush.bf16.msra.mxu0 0
    %1518 = vmatpush.bf16.msra.mxu0 0
    %1519 = vmatpush.bf16.msra.mxu0 0
    %1520 = vmatpush.bf16.msra.mxu0 %v1511
    %1521 = vmatmul.bf16.gmra.mxu0 %v1508
    %v1522 = vpop.f32.mrf.mxu0
    %v1523 = vadd.f32 0.0, %v1522
    %v1524 = vpop.f32.mrf.mxu0
    %1525 = vdwg.mxu0
    %1527 = vrot.lane.b32.xlu0 %v1409, 8
    %v1528 = vpop.permute.xlu0 %1527
    %1531 = vrot.lane.b32.xlu0 %v1466, 16
    %v1532 = vpop.permute.xlu0 %1531
    %1535 = vrot.lane.b32.xlu0 %v1523, 24
    %v1536 = vpop.permute.xlu0 %1535
    %v1538 = vsel %vm274, %v1352, %v1528
    %v1539 = vsel %vm512, %v1538, %v1532
    %v1540 = vsel %vm514, %v1539, %v1536
    %s1541 = scalar_lea.vmem %s5, 16
    %v1542 = vld [vmem:[%s1541] sm:$0xf]
    %v1543 = vld [vmem:[%s1541 + $0x4] sm:$0xf]
    %v1544 = vld [vmem:[%s1541 + $0x8] sm:$0xf]
    %v1545 = vld [vmem:[%s1541 + $0xc] sm:$0xf]
    %v1546 = vpack.c.bf16 %v1540, %v1297
    %s1547 = scalar_lea.vmem %s6, 1
    %v1548 = vld [vmem:[%s1547] sm:$0x1]
    %v1550 = vperm.slane %v1548, 0
    %v1556 = vunpack.c.l.b16 %v1542
    %v1557 = vunpack.c.l.b16 %v1543
    %v1558 = vunpack.c.l.b16 %v1544
    %v1559 = vunpack.c.l.b16 %v1545
    %v1560 = vpack.c.b16 %v1557, %v1556
    %v1561 = vpack.c.b16 %v1559, %v1558
    %v1565 = vsel %vm252, %v1546, 0
    %1567 = vmatpush.bf16.msra.mxu0 0
    %1568 = vmatpush.bf16.msra.mxu0 0
    %1569 = vmatpush.bf16.msra.mxu0 0
    %1570 = vmatpush.bf16.msra.mxu0 0
    %1571 = vmatpush.bf16.msra.mxu0 0
    %1572 = vmatpush.bf16.msra.mxu0 0
    %1573 = vmatpush.bf16.msra.mxu0 %v1561
    %1574 = vmatpush.bf16.msra.mxu0 %v1560
    %1575 = vmatmul.bf16.gmra.mxu0 %v1565
    %v1576 = vpop.f32.mrf.mxu0
    %v1577 = vadd.f32 %v1550, %v1576
    %v1578 = vpop.f32.mrf.mxu0
    %v1579 = vadd.f32 %v1550, %v1578
    %1580 = vdwg.mxu0
    %s1581 = scalar_lea.vmem %s7, 1
    %v1582 = vld [vmem:[%s1581] sm:$0x1]
    %s1583 = scalar_lea.vmem %s8, 1
    %v1584 = vld [vmem:[%s1583] sm:$0x1]
    %v1585 = vadd.f32 %v1013, %v1577
    %v1586 = vadd.f32 %v1014, %v1579
    %v1587 = vsel %vm252, %v1585, 0.0
    %1588 = vadd.xlane.f32.xlu0 %v1587
    %v1589 = vpop.xlane.xlu0 %1588
    %v1590 = vsel %vm252, %v1586, 0.0
    %1591 = vadd.xlane.f32.xlu0 %v1590
    %v1592 = vpop.xlane.xlu0 %1591
    %v1593 = vmul.f32 %v1589, %v813
    %v1594 = vmul.f32 %v1592, %v813
    %v1595 = vsub.f32 %v1585, %v1593
    %v1596 = vsub.f32 %v1586, %v1594
    %v1597 = vmul.f32 %v1595, %v1595
    %v1598 = vmul.f32 %v1596, %v1596
    %v1599 = vsel %vm252, %v1597, 0.0
    %1600 = vadd.xlane.f32.xlu0 %v1599
    %v1601 = vpop.xlane.xlu0 %1600
    %v1602 = vsel %vm252, %v1598, 0.0
    %1603 = vadd.xlane.f32.xlu0 %v1602
    %v1604 = vpop.xlane.xlu0 %1603
    %v1605 = vmul.f32 %v1601, %v813
    %v1606 = vmul.f32 %v1604, %v813
    %v1607 = vadd.f32 %v1605, 1e-05
    %v1608 = vadd.f32 %v1606, 1e-05
    %v1609 = vrsqrt.pop %v1607
    %v1610 = vmul.f32 %v1609, %v1607
    %v1611 = vmul.f32 %v1610, %v1609
    %v1612 = vmul.f32 0.5, %v1611
    %v1613 = vsub.f32 1.5, %v1612
    %v1614 = vmul.f32 %v1609, %v1613
    %vm1615 = vweird.f32 %v1607
    %vm1616 = vweird.f32 %v1609
    %vm1617 = vmor %vm1615, %vm1616
    %v1618 = vsel %vm1617, %v1609, %v1614
    %v1619 = vrsqrt.pop %v1608
    %v1620 = vmul.f32 %v1619, %v1608
    %v1621 = vmul.f32 %v1620, %v1619
    %v1622 = vmul.f32 0.5, %v1621
    %v1623 = vsub.f32 1.5, %v1622
    %v1624 = vmul.f32 %v1619, %v1623
    %vm1625 = vweird.f32 %v1608
    %vm1626 = vweird.f32 %v1619
    %vm1627 = vmor %vm1625, %vm1626
    %v1628 = vsel %vm1627, %v1619, %v1624
    %v1629 = vmul.f32 %v1595, %v1618
    %v1630 = vmul.f32 %v1596, %v1628
    %v1632 = vperm.slane %v1582, 0
    %v1634 = vmul.f32 %v1629, %v1632
    %v1635 = vmul.f32 %v1630, %v1632
    %v1637 = vperm.slane %v1584, 0
    %v1639 = vadd.f32 %v1634, %v1637
    %v1640 = vadd.f32 %v1635, %v1637
    %s1641 = scalar_lea.vmem %s9, 16
    %v1642 = vld [vmem:[%s1641] sm:$0xf]
    %v1643 = vld [vmem:[%s1641 + $0x4] sm:$0xf]
    %v1644 = vld [vmem:[%s1641 + $0x8] sm:$0xf]
    %v1645 = vld [vmem:[%s1641 + $0xc] sm:$0xf]
    %v1646 = vpack.c.bf16 %v1640, %v1639
    %s1647 = scalar_lea.vmem %s10, 1
    %v1648 = vld [vmem:[%s1647] sm:$0x1]
    %v1650 = vperm.slane %v1648, 0
    %v1656 = vunpack.c.l.b16 %v1642
    %v1657 = vunpack.c.l.b16 %v1643
    %v1658 = vunpack.c.l.b16 %v1644
    %v1659 = vunpack.c.l.b16 %v1645
    %v1660 = vpack.c.b16 %v1657, %v1656
    %v1661 = vpack.c.b16 %v1659, %v1658
    %v1665 = vsel %vm252, %v1646, 0
    %1667 = vmatpush.bf16.msra.mxu0 0
    %1668 = vmatpush.bf16.msra.mxu0 0
    %1669 = vmatpush.bf16.msra.mxu0 0
    %1670 = vmatpush.bf16.msra.mxu0 0
    %1671 = vmatpush.bf16.msra.mxu0 0
    %1672 = vmatpush.bf16.msra.mxu0 0
    %1673 = vmatpush.bf16.msra.mxu0 %v1661
    %1674 = vmatpush.bf16.msra.mxu0 %v1660
    %1675 = vmatmul.bf16.gmra.mxu0 %v1665
    %v1676 = vpop.f32.mrf.mxu0
    %v1677 = vadd.f32 %v1650, %v1676
    %v1678 = vpop.f32.mrf.mxu0
    %v1679 = vadd.f32 %v1650, %v1678
    %1680 = vdwg.mxu0
    %v1681 = vmax.f32 %v1677, 0.0
    %v1682 = vmax.f32 %v1679, 0.0
    %s1683 = scalar_lea.vmem %s11, 32
    %v1684 = vld [vmem:[%s1683] sm:$0xf]
    %v1685 = vld [vmem:[%s1683 + $0x4] sm:$0xf]
    %v1686 = vld [vmem:[%s1683 + $0x8] sm:$0xf]
    %v1687 = vld [vmem:[%s1683 + $0xc] sm:$0xf]
    %v1688 = vld [vmem:[%s1683 + $0x10] sm:$0xf]
    %v1689 = vld [vmem:[%s1683 + $0x14] sm:$0xf]
    %v1690 = vld [vmem:[%s1683 + $0x18] sm:$0xf]
    %v1691 = vld [vmem:[%s1683 + $0x1c] sm:$0xf]
    %v1692 = vpack.c.bf16 %v1682, %v1681
    %s1693 = scalar_lea.vmem %s12, 1
    %v1694 = vld [vmem:[%s1693] sm:$0x1]
    %v1696 = vperm.slane %v1694, 0
    %v1706 = vunpack.c.l.b16 %v1684
    %v1707 = vunpack.c.l.b16 %v1685
    %v1708 = vunpack.c.l.b16 %v1686
    %v1709 = vunpack.c.l.b16 %v1687
    %v1710 = vunpack.c.l.b16 %v1688
    %v1711 = vunpack.c.l.b16 %v1689
    %v1712 = vunpack.c.l.b16 %v1690
    %v1713 = vunpack.c.l.b16 %v1691
    %v1714 = vpack.c.b16 %v1707, %v1706
    %v1715 = vpack.c.b16 %v1709, %v1708
    %v1716 = vpack.c.b16 %v1711, %v1710
    %v1717 = vpack.c.b16 %v1713, %v1712
    %v1723 = vsel %vm939, %v1692, 0
    %1725 = vmatpush.bf16.msra.mxu0 0
    %1726 = vmatpush.bf16.msra.mxu0 0
    %1727 = vmatpush.bf16.msra.mxu0 0
    %1728 = vmatpush.bf16.msra.mxu0 0
    %1729 = vmatpush.bf16.msra.mxu0 %v1717
    %1730 = vmatpush.bf16.msra.mxu0 %v1716
    %1731 = vmatpush.bf16.msra.mxu0 %v1715
    %1732 = vmatpush.bf16.msra.mxu0 %v1714
    %1733 = vmatmul.bf16.gmra.mxu0 %v1723
    %v1734 = vpop.f32.mrf.mxu0
    %v1735 = vadd.f32 %v1696, %v1734
    %v1736 = vpop.f32.mrf.mxu0
    %v1737 = vadd.f32 %v1696, %v1736
    %1738 = vdwg.mxu0
    %s1739 = scalar_lea.vmem %s13, 1
    %v1740 = vld [vmem:[%s1739] sm:$0x1]
    %s1741 = scalar_lea.vmem %s14, 1
    %v1742 = vld [vmem:[%s1741] sm:$0x1]
    %v1743 = vadd.f32 %v1639, %v1735
    %v1744 = vadd.f32 %v1640, %v1737
    %v1745 = vsel %vm252, %v1743, 0.0
    %1746 = vadd.xlane.f32.xlu0 %v1745
    %v1747 = vpop.xlane.xlu0 %1746
    %v1748 = vsel %vm252, %v1744, 0.0
    %1749 = vadd.xlane.f32.xlu0 %v1748
    %v1750 = vpop.xlane.xlu0 %1749
    %v1751 = vmul.f32 %v1747, %v813
    %v1752 = vmul.f32 %v1750, %v813
    %v1753 = vsub.f32 %v1743, %v1751
    %v1754 = vsub.f32 %v1744, %v1752
    %v1755 = vmul.f32 %v1753, %v1753
    %v1756 = vmul.f32 %v1754, %v1754
    %v1757 = vsel %vm252, %v1755, 0.0
    %1758 = vadd.xlane.f32.xlu0 %v1757
    %v1759 = vpop.xlane.xlu0 %1758
    %v1760 = vsel %vm252, %v1756, 0.0
    %1761 = vadd.xlane.f32.xlu0 %v1760
    %v1762 = vpop.xlane.xlu0 %1761
    %v1763 = vmul.f32 %v1759, %v813
    %v1764 = vmul.f32 %v1762, %v813
    %v1765 = vadd.f32 %v1763, 1e-05
    %v1766 = vadd.f32 %v1764, 1e-05
    %v1767 = vrsqrt.pop %v1765
    %v1768 = vmul.f32 %v1767, %v1765
    %v1769 = vmul.f32 %v1768, %v1767
    %v1770 = vmul.f32 0.5, %v1769
    %v1771 = vsub.f32 1.5, %v1770
    %v1772 = vmul.f32 %v1767, %v1771
    %vm1773 = vweird.f32 %v1765
    %vm1774 = vweird.f32 %v1767
    %vm1775 = vmor %vm1773, %vm1774
    %v1776 = vsel %vm1775, %v1767, %v1772
    %v1777 = vrsqrt.pop %v1766
    %v1778 = vmul.f32 %v1777, %v1766
    %v1779 = vmul.f32 %v1778, %v1777
    %v1780 = vmul.f32 0.5, %v1779
    %v1781 = vsub.f32 1.5, %v1780
    %v1782 = vmul.f32 %v1777, %v1781
    %vm1783 = vweird.f32 %v1766
    %vm1784 = vweird.f32 %v1777
    %vm1785 = vmor %vm1783, %vm1784
    %v1786 = vsel %vm1785, %v1777, %v1782
    %v1787 = vmul.f32 %v1753, %v1776
    %v1788 = vmul.f32 %v1754, %v1786
    %v1790 = vperm.slane %v1740, 0
    %v1792 = vmul.f32 %v1787, %v1790
    %v1793 = vmul.f32 %v1788, %v1790
    %v1795 = vperm.slane %v1742, 0
    %v1797 = vadd.f32 %v1792, %v1795
    %v1798 = vadd.f32 %v1793, %v1795
    %v1799 = vsel %vm252, %v1797, 0.0
    %v1800 = vrot.slane %v1799, 4
    %v1801 = vadd.f32 %v1799, %v1800
    %v1802 = vrot.slane %v1801, 2
    %v1803 = vadd.f32 %v1801, %v1802
    %v1804 = vrot.slane %v1803, 1
    %v1805 = vadd.f32 %v1803, %v1804
    %v1806 = vrcp.pop 8.0
    %v1807 = vmul.f32 8.0, %v1806
    %v1808 = vsub.f32 1.0, %v1807
    %v1809 = vmul.f32 %v1806, %v1808
    %v1810 = vadd.f32 %v1806, %v1809
    %vm1811 = vweird.f32 %v1806
    %v1812 = vsel %vm1811, %v1806, %v1810
    %v1813 = vmul.f32 %v1805, %v1812
    %v1814 = vsel %vm252, %v1798, 0.0
    %v1815 = vrot.slane %v1814, 4
    %v1816 = vadd.f32 %v1814, %v1815
    %v1817 = vrot.slane %v1816, 2
    %v1818 = vadd.f32 %v1816, %v1817
    %v1819 = vrot.slane %v1818, 1
    %v1820 = vadd.f32 %v1818, %v1819
    %v1821 = vmul.f32 %v1820, %v1812
    %v1822 = vsel %vm210, %v1813, %v1821
    %v1823 = vld [vmem:[%s15] sm:$0xf]
    %v1824 = vld [vmem:[%s15 + $0x4] sm:$0xf]
    %v1825 = vld [vmem:[%s15 + $0x8] sm:$0xf]
    %v1826 = vld [vmem:[%s15 + $0xc] sm:$0xf]
    %v1827 = vpack.c.bf16 %v1822, %v1822
    %v1828 = vld [vmem:[%s16] sm:$0x1]
    %v1830 = vperm.slane %v1828, 0
    %v1836 = vunpack.c.l.b16 %v1823
    %v1837 = vunpack.c.l.b16 %v1824
    %v1838 = vunpack.c.l.b16 %v1825
    %v1839 = vunpack.c.l.b16 %v1826
    %v1840 = vpack.c.b16 %v1837, %v1836
    %v1841 = vpack.c.b16 %v1839, %v1838
    %v1845 = vsel %vm252, %v1827, 0
    %1847 = vmatpush.bf16.msra.mxu0 0
    %1848 = vmatpush.bf16.msra.mxu0 0
    %1849 = vmatpush.bf16.msra.mxu0 0
    %1850 = vmatpush.bf16.msra.mxu0 0
    %1851 = vmatpush.bf16.msra.mxu0 0
    %1852 = vmatpush.bf16.msra.mxu0 0
    %1853 = vmatpush.bf16.msra.mxu0 %v1841
    %1854 = vmatpush.bf16.msra.mxu0 %v1840
    %1855 = vmatmul.bf16.gmra.mxu0 %v1845
    %v1856 = vpop.f32.mrf.mxu0
    %v1857 = vadd.f32 %v1830, %v1856
    %v1858 = vpop.f32.mrf.mxu0
    %1859 = vdwg.mxu0
    %v1860 = vld [vmem:[%s17] sm:$0xf]
    %v1861 = vld [vmem:[%s17 + $0x4] sm:$0xf]
    %v1862 = vld [vmem:[%s17 + $0x8] sm:$0xf]
    %v1863 = vld [vmem:[%s17 + $0xc] sm:$0xf]
    %v1864 = vld [vmem:[%s17 + $0x10] sm:$0xf]
    %v1865 = vld [vmem:[%s17 + $0x14] sm:$0xf]
    %v1866 = vld [vmem:[%s17 + $0x18] sm:$0xf]
    %v1867 = vld [vmem:[%s17 + $0x1c] sm:$0xf]
    %v1868 = vld [vmem:[%s17 + $0x20] sm:$0xf]
    %v1869 = vld [vmem:[%s17 + $0x24] sm:$0xf]
    %v1870 = vld [vmem:[%s17 + $0x28] sm:$0xf]
    %v1871 = vld [vmem:[%s17 + $0x2c] sm:$0xf]
    %v1872 = vld [vmem:[%s17 + $0x30] sm:$0xf]
    %v1873 = vld [vmem:[%s17 + $0x34] sm:$0xf]
    %v1874 = vld [vmem:[%s17 + $0x38] sm:$0xf]
    %v1875 = vld [vmem:[%s17 + $0x3c] sm:$0xf]
    %v1876 = vpack.c.bf16 %v1857, %v1857
    %v1877 = vld [vmem:[%s18] sm:$0x1]
    %v1879 = vperm.slane %v1877, 0
    %v1897 = vunpack.c.l.b16 %v1860
    %v1898 = vunpack.c.l.b16 %v1861
    %v1899 = vunpack.c.l.b16 %v1862
    %v1900 = vunpack.c.l.b16 %v1863
    %v1901 = vunpack.c.l.b16 %v1864
    %v1902 = vunpack.c.l.b16 %v1865
    %v1903 = vunpack.c.l.b16 %v1866
    %v1904 = vunpack.c.l.b16 %v1867
    %v1905 = vunpack.c.l.b16 %v1868
    %v1906 = vunpack.c.l.b16 %v1869
    %v1907 = vunpack.c.l.b16 %v1870
    %v1908 = vunpack.c.l.b16 %v1871
    %v1909 = vunpack.c.l.b16 %v1872
    %v1910 = vunpack.c.l.b16 %v1873
    %v1911 = vunpack.c.l.b16 %v1874
    %v1912 = vunpack.c.l.b16 %v1875
    %v1913 = vpack.c.b16 %v1898, %v1897
    %v1914 = vpack.c.b16 %v1900, %v1899
    %v1915 = vpack.c.b16 %v1902, %v1901
    %v1916 = vpack.c.b16 %v1904, %v1903
    %v1917 = vpack.c.b16 %v1906, %v1905
    %v1918 = vpack.c.b16 %v1908, %v1907
    %v1919 = vpack.c.b16 %v1910, %v1909
    %v1920 = vpack.c.b16 %v1912, %v1911
    %1929 = vmatpush.bf16.msra.mxu0 %v1920
    %1930 = vmatpush.bf16.msra.mxu0 %v1919
    %1931 = vmatpush.bf16.msra.mxu0 %v1918
    %1932 = vmatpush.bf16.msra.mxu0 %v1917
    %1933 = vmatpush.bf16.msra.mxu0 %v1916
    %1934 = vmatpush.bf16.msra.mxu0 %v1915
    %1935 = vmatpush.bf16.msra.mxu0 %v1914
    %1936 = vmatpush.bf16.msra.mxu0 %v1913
    %1937 = vmatmul.bf16.gmra.mxu0 %v1876
    %v1938 = vpop.f32.mrf.mxu0
    %v1939 = vadd.f32 %v1879, %v1938
    %v1940 = vpop.f32.mrf.mxu0
    %1941 = vdwg.mxu0
    %vm1942 = vcmask 9216
    %1943 = vst.msk [vmem:[#allocation5] sm:$0x3] %vm1942, %v1939
    %1945 = vrot.lane.b32.xlu0 %v1939, 126
    %v1946 = vpop.permute.xlu0 %1945
    %1948 = vst.msk [vmem:[#allocation6] sm:$0x3] %vm1942, %v1946
    // Predicated region
    $region82: #{tpu_custom_call.1} parent=1 // pred_check
      _
    $region83: #{tpu_custom_call.1} parent=1 // pred_check_branch
      %1950 = sbr.rel (0) target = $region85
    $region84: #{tpu_custom_call.1} parent=1 // pred_region
      %1952 = vsyncadd [#allocation3], 0
      %s1954 = sshll.u32 [#allocation5], 4
      %s1955 = int_to_ptr.vmem [resolvable:$true] %s1954
      %s1956 = sshll.u32 %s19, 4
      %s1957 = int_to_ptr.hbm [resolvable:$true] %s1956
      %1959 = dma.vmem_to_hbm [thread:$0]  %s1955, 32, %s1957, [#allocation3]
    $region85: #{tpu_custom_call.1} parent=1 // pred_fallthru
      _
    // Predicated region
    $region86: #{tpu_custom_call.1} parent=1 // pred_check
      _
    $region87: #{tpu_custom_call.1} parent=1 // pred_check_branch
      %1961 = sbr.rel (0) target = $region89
    $region88: #{tpu_custom_call.1} parent=1 // pred_region
      %1963 = vsyncadd [#allocation7], 0
      %s1965 = sshll.u32 [#allocation6], 4
      %s1966 = int_to_ptr.vmem [resolvable:$true] %s1965
      %s1967 = sshll.u32 %s20, 4
      %s1968 = int_to_ptr.hbm [resolvable:$true] %s1967
      %1970 = dma.vmem_to_hbm [thread:$0]  %s1966, 32, %s1968, [#allocation7]
    $region89: #{tpu_custom_call.1} parent=1 // pred_fallthru
      _
    // Predicated region
    $region90: #{tpu_custom_call.1} parent=1 // pred_check
      _
    $region91: #{tpu_custom_call.1} parent=1 // pred_check_branch
      %1972 = sbr.rel (0) target = $region93
    $region92: #{tpu_custom_call.1} parent=1 // pred_region
      %1974 = dma.done [#allocation3], 32
    $region93: #{tpu_custom_call.1} parent=1 // pred_fallthru
      _
    // Predicated region
    $region94: #{tpu_custom_call.1} parent=1 // pred_check
      _
    $region95: #{tpu_custom_call.1} parent=1 // pred_check_branch
      %1976 = sbr.rel (0) target = $region97
    $region96: #{tpu_custom_call.1} parent=1 // pred_region
      %1978 = dma.done [#allocation7], 32
    $region97: #{tpu_custom_call.1} parent=1 // pred_fallthru
      _
    %1979 = vsyncpa [#allocation3], 1
    %1980 = vsyncpa [#allocation7], 1
    %1981 = vsyncpa [#allocation4], 1

</llo_original>
